<compile_context>
chip_gen: v7x
topology: tpu7x:2x2x1
jax: 0.10.0
libtpu: 0.0.40
codegen_flags: <defaults>
</compile_context>

<pallas_src>
import jax
import jax.numpy as jnp
from jax.experimental import pallas as pl
from jax.experimental.pallas import tpu as pltpu

# ------------------------- small ViT configuration -------------------------
IMG = 16          # image size (224 -> 16)
PATCH = 4         # patch size (16 -> 4)
IN_CH = 3         # RGB
DIM = 32          # embed dim (768 -> 32)
DEPTH = 2         # transformer blocks (12 -> 2)
HEADS = 4         # attention heads (12 -> 4)
MLP = 64          # mlp hidden dim (3072 -> 64)
NUM_CLASSES = 5
HIDDEN = [16]     # hidden_layers argument of ViT_pretrained
HEAD_DIM = DIM // HEADS
N_PATCHES = (IMG // PATCH) ** 2
SEQ = N_PATCHES + 1                    # +1 cls token
PATCH_FEAT = IN_CH * PATCH * PATCH
LN_EPS = 1e-6                          # timm LayerNorm eps
BN_EPS = 1e-5                          # torch BatchNorm1d eps
ATTN_SCALE = HEAD_DIM ** -0.5
LANES = 128                            # packed-slab lane width


# --------------------------- packed-slab layouts ----------------------------
def _round8(n):
    return ((n + 7) // 8) * 8


def _build_layouts():
    """Static row layouts of the matrix slab and the row-vector slab."""
    mat = {}
    off = 0

    def add(name, rows, cols):
        nonlocal off
        mat[name] = (off, rows, cols)
        off += _round8(rows)

    add("patch_w", PATCH_FEAT, DIM)
    add("addt", SEQ, DIM)                       # (cls+pos0) row + (patch_b+pos) rows
    for d in range(DEPTH):
        add(f"wqk_{d}", DIM, 2 * DIM)           # fused Q|K, scale folded into Q
        add(f"wvp_{d}", DIM, HEADS * DIM)       # per-head V with out-proj folded in
        add(f"fc1_w_{d}", DIM, MLP)
        add(f"fc2_w_{d}", MLP, DIM)
    dims = [DIM] + HIDDEN
    for i, hdim in enumerate(HIDDEN):
        add(f"head_w_{i}", dims[i], hdim)
    add("out_w", dims[-1], LANES)               # lane-padded -> lane-dense output
    mat_rows = off

    vec = {}
    voff = 0

    def vadd(name):
        nonlocal voff
        vec[name] = voff
        voff += 1

    vadd("lnf_g"); vadd("lnf_b")
    for d in range(DEPTH):
        for nm in ("ln1_g", "ln1_b", "bqk", "bvp", "pb",
                   "ln2_g", "ln2_b", "fc1_b", "fc2_b"):
            vadd(f"{nm}_{d}")
    for i in range(len(HIDDEN)):
        vadd(f"head_s_{i}"); vadd(f"head_t_{i}")
    vadd("out_s"); vadd("out_t")
    vec_rows = _round8(voff)
    return mat, mat_rows, vec, vec_rows


MAT_LAYOUT, MAT_ROWS, VEC_LAYOUT, VEC_ROWS = _build_layouts()


# ------------------------------ fused kernel --------------------------------
def _layernorm(x, g, b):
    mu = jnp.mean(x, axis=-1, keepdims=True)
    xc = x - mu
    var = jnp.mean(xc * xc, axis=-1, keepdims=True)
    return xc * jax.lax.rsqrt(var + LN_EPS) * g + b


def _gelu(x):
    # exact (erf) GELU, matching torch nn.GELU() used by timm ViT
    return 0.5 * x * (1.0 + jax.lax.erf(x * 0.7071067811865476))


def _vit_kernel(xp_ref, mat_ref, vec_ref, o_ref):
    """Whole ViT forward for one batch block; everything resident in VMEM."""
    f32 = jnp.float32
    b_tile = xp_ref.shape[0]

    def mat(name):
        off, r, c = MAT_LAYOUT[name]
        return mat_ref[off:off + r, :c]

    def vec(name, width):
        r = VEC_LAYOUT[name]
        return vec_ref[r:r + 1, :width]

    def cat(parts):
        return parts[0] if len(parts) == 1 else jnp.concatenate(parts, axis=0)

    # --- patch embedding. Row 0 of each image's xp is an all-zero "patch";
    #     addt holds (cls + pos[0]) on row 0 and (patch_bias + pos[1:]) on the
    #     other rows, so one matmul + one add yields the whole token slab.
    xp = cat([xp_ref[b] for b in range(b_tile)])                  # (T, PATCH_FEAT)
    h = jnp.dot(xp, mat("patch_w"), preferred_element_type=f32)
    h = h + cat([mat("addt")] * b_tile)                           # (T, DIM)

    for d in range(DEPTH):
        # ---------- attention sub-block (pre-norm) ----------
        y = _layernorm(h, vec(f"ln1_g_{d}", DIM), vec(f"ln1_b_{d}", DIM))
        # one fused Q|K matmul (scale already folded into Q weights/bias)
        qk = jnp.dot(y, mat(f"wqk_{d}"), preferred_element_type=f32) \
            + vec(f"bqk_{d}", 2 * DIM)
        # per-head V with the output projection pre-folded -> (T, HEADS*DIM)
        vp = jnp.dot(y, mat(f"wvp_{d}"), preferred_element_type=f32) \
            + vec(f"bvp_{d}", HEADS * DIM)
        att = []
        for b in range(b_tile):                   # per-image scores/softmax/PV
            r0 = b * SEQ
            acc = jnp.zeros((SEQ, DIM), f32)
            for hd in range(HEADS):
                q = qk[r0:r0 + SEQ, hd * HEAD_DIM:(hd + 1) * HEAD_DIM]
                k = qk[r0:r0 + SEQ, DIM + hd * HEAD_DIM:DIM + (hd + 1) * HEAD_DIM]
                s = jax.lax.dot_general(q, k, (((1,), (1,)), ((), ())),
                                        preferred_element_type=f32)
                m = jnp.max(s, axis=-1, keepdims=True)
                p = jnp.exp(s - m)
                p = p / jnp.sum(p, axis=-1, keepdims=True)        # exact divide
                vph = vp[r0:r0 + SEQ, hd * DIM:(hd + 1) * DIM]
                acc = acc + jnp.dot(p, vph, preferred_element_type=f32)
            att.append(acc)
        h = h + cat(att) + vec(f"pb_{d}", DIM)

        # ---------- MLP sub-block (pre-norm) ----------
        y = _layernorm(h, vec(f"ln2_g_{d}", DIM), vec(f"ln2_b_{d}", DIM))
        y = jnp.dot(y, mat(f"fc1_w_{d}"), preferred_element_type=f32) \
            + vec(f"fc1_b_{d}", MLP)
        y = _gelu(y)
        y = jnp.dot(y, mat(f"fc2_w_{d}"), preferred_element_type=f32) \
            + vec(f"fc2_b_{d}", DIM)
        h = h + y

    # ---------- final norm + cls-token pooling ----------
    h = _layernorm(h, vec("lnf_g", DIM), vec("lnf_b", DIM))
    z = cat([h[b * SEQ:b * SEQ + 1, :] for b in range(b_tile)])   # (b_tile, DIM)

    # ---------- classifier head ----------
    # Dropout(eval) = identity.  Each BatchNorm1d is folded into a per-channel
    # scale/shift applied in the matmul epilogue (linears have no bias).
    # TODO(synk): BatchNorm1d / Dropout use eval-mode semantics; training-mode
    # batch statistics / dropout masks are not reproduced.
    for i, hdim in enumerate(HIDDEN):
        z = jnp.dot(z, mat(f"head_w_{i}"), preferred_element_type=f32)
        z = jnp.maximum(z, 0.0) * vec(f"head_s_{i}", hdim) + vec(f"head_t_{i}", hdim)
    # out_w / out_s / out_t are zero-padded to 128 lanes -> lane-dense store.
    z = jnp.dot(z, mat("out_w"), preferred_element_type=f32)      # (b_tile, 128)
    z = z * vec("out_s", LANES) + vec("out_t", LANES)
    o_ref[:, 0, :] = z.astype(o_ref.dtype)


# ------------------------------ parameter init ------------------------------
def _randn(key, shape, scale=0.02):
    return scale * jax.random.normal(key, shape, jnp.float32)


def init_params(key):
    keys = iter(jax.random.split(key, 64))
    nxt = lambda: next(keys)

    params = {
        "patch_w": _randn(nxt(), (PATCH_FEAT, DIM)),
        "patch_b": _randn(nxt(), (DIM,)),
        "cls": _randn(nxt(), (1, 1, DIM)),
        "pos": _randn(nxt(), (1, SEQ, DIM)),
        "ln_g": jnp.ones((DIM,), jnp.float32) + _randn(nxt(), (DIM,)),
        "ln_b": _randn(nxt(), (DIM,)),
        "blocks": [],
    }
    for _ in range(DEPTH):
        params["blocks"].append({
            "ln1_g": jnp.ones((DIM,), jnp.float32) + _randn(nxt(), (DIM,)),
            "ln1_b": _randn(nxt(), (DIM,)),
            "qkv_w": _randn(nxt(), (DIM, 3 * DIM)),
            "qkv_b": _randn(nxt(), (3 * DIM,)),
            "proj_w": _randn(nxt(), (DIM, DIM)),
            "proj_b": _randn(nxt(), (DIM,)),
            "ln2_g": jnp.ones((DIM,), jnp.float32) + _randn(nxt(), (DIM,)),
            "ln2_b": _randn(nxt(), (DIM,)),
            "fc1_w": _randn(nxt(), (DIM, MLP)),
            "fc1_b": _randn(nxt(), (MLP,)),
            "fc2_w": _randn(nxt(), (MLP, DIM)),
            "fc2_b": _randn(nxt(), (DIM,)),
        })

    dims = [DIM] + HIDDEN
    params["head_hidden"] = []
    for i, hdim in enumerate(HIDDEN):
        params["head_hidden"].append({
            "w": _randn(nxt(), (dims[i], hdim), scale=0.1),
            "bn_g": jnp.ones((hdim,), jnp.float32) + _randn(nxt(), (hdim,)),
            "bn_b": _randn(nxt(), (hdim,)),
            "bn_m": _randn(nxt(), (hdim,)),
            "bn_v": jnp.abs(_randn(nxt(), (hdim,), scale=0.5)) + 1.0,
        })
    params["head_out_w"] = _randn(nxt(), (dims[-1], NUM_CLASSES), scale=0.1)
    params["out_bn_g"] = jnp.ones((NUM_CLASSES,), jnp.float32) + _randn(nxt(), (NUM_CLASSES,))
    params["out_bn_b"] = _randn(nxt(), (NUM_CLASSES,))
    params["out_bn_m"] = _randn(nxt(), (NUM_CLASSES,))
    params["out_bn_v"] = jnp.abs(_randn(nxt(), (NUM_CLASSES,), scale=0.5)) + 1.0
    return params


# --------------------------- one-time weight packing -------------------------
def pack_params(p):
    """Repack params into two kernel-ready VMEM slabs (matrix slab + vector slab)."""
    mat = jnp.zeros((MAT_ROWS, LANES), jnp.float32)
    vec = jnp.zeros((VEC_ROWS, LANES), jnp.float32)

    def mset(m, name, arr):
        off, _, _ = MAT_LAYOUT[name]
        return m.at[off:off + arr.shape[0], :arr.shape[1]].set(arr)

    def vset(v, name, arr):
        return v.at[VEC_LAYOUT[name], :arr.shape[0]].set(arr)

    mat = mset(mat, "patch_w", p["patch_w"])
    pos = p["pos"][0]                                     # (SEQ, DIM)
    cls = p["cls"][0]                                     # (1, DIM)
    addt = jnp.concatenate([cls + pos[0:1], p["patch_b"][None, :] + pos[1:]], axis=0)
    mat = mset(mat, "addt", addt)

    for d, blk in enumerate(p["blocks"]):
        wq = blk["qkv_w"][:, 0:DIM] * ATTN_SCALE          # scale folded into Q
        wk = blk["qkv_w"][:, DIM:2 * DIM]
        wv = blk["qkv_w"][:, 2 * DIM:3 * DIM]
        bq = blk["qkv_b"][0:DIM] * ATTN_SCALE
        bk = blk["qkv_b"][DIM:2 * DIM]
        bv = blk["qkv_b"][2 * DIM:3 * DIM]
        wqk = jnp.concatenate([wq, wk], axis=1)           # (DIM, 2*DIM)
        bqk = jnp.concatenate([bq, bk], axis=0)           # (2*DIM,)
        # fold the output projection into V per head: Wvp[h] = Wv[h] @ P[h]
        wvp_list, bvp_list = [], []
        for hd in range(HEADS):
            wv_h = wv[:, hd * HEAD_DIM:(hd + 1) * HEAD_DIM]           # (DIM, HD)
            bv_h = bv[hd * HEAD_DIM:(hd + 1) * HEAD_DIM]              # (HD,)
            proj_h = blk["proj_w"][hd * HEAD_DIM:(hd + 1) * HEAD_DIM, :]  # (HD, DIM)
            wvp_list.append(wv_h @ proj_h)                            # (DIM, DIM)
            bvp_list.append(bv_h @ proj_h)                            # (DIM,)
        wvp = jnp.concatenate(wvp_list, axis=1)           # (DIM, HEADS*DIM)
        bvp = jnp.concatenate(bvp_list, axis=0)           # (HEADS*DIM,)

        mat = mset(mat, f"wqk_{d}", wqk)
        mat = mset(mat, f"wvp_{d}", wvp)
        mat = mset(mat, f"fc1_w_{d}", blk["fc1_w"])
        mat = mset(mat, f"fc2_w_{d}", blk["fc2_w"])
        vec = vset(vec, f"ln1_g_{d}", blk["ln1_g"])
        vec = vset(vec, f"ln1_b_{d}", blk["ln1_b"])
        vec = vset(vec, f"bqk_{d}", bqk)
        vec = vset(vec, f"bvp_{d}", bvp)
        vec = vset(vec, f"pb_{d}", blk["proj_b"])
        vec = vset(vec, f"ln2_g_{d}", blk["ln2_g"])
        vec = vset(vec, f"ln2_b_{d}", blk["ln2_b"])
        vec = vset(vec, f"fc1_b_{d}", blk["fc1_b"])
        vec = vset(vec, f"fc2_b_{d}", blk["fc2_b"])

    vec = vset(vec, "lnf_g", p["ln_g"])
    vec = vset(vec, "lnf_b", p["ln_b"])

    for i, lyr in enumerate(p["head_hidden"]):
        mat = mset(mat, f"head_w_{i}", lyr["w"])
        s = lyr["bn_g"] * jax.lax.rsqrt(lyr["bn_v"] + BN_EPS)
        t = lyr["bn_b"] - lyr["bn_m"] * s
        vec = vset(vec, f"head_s_{i}", s)
        vec = vset(vec, f"head_t_{i}", t)
    mat = mset(mat, "out_w", p["head_out_w"])
    s = p["out_bn_g"] * jax.lax.rsqrt(p["out_bn_v"] + BN_EPS)
    t = p["out_bn_b"] - p["out_bn_m"] * s
    vec = vset(vec, "out_s", s)
    vec = vset(vec, "out_t", t)
    return {"mat": mat, "vec": vec}


# -------------------------------- forward pass -------------------------------
def vit_forward(packed, x, b_tile=None):
    """x: (B, C, H, W) float32 (NCHW), returns (B, NUM_CLASSES).

    b_tile = images per grid step. Default B (one step: best on single-TC
    v5e/v6e -- full sublane packing, no per-step overhead). On v7x pass
    b_tile=B//2 so the "parallel" grid gives each TensorCore one block.
    """
    B = x.shape[0]
    if b_tile is None:
        b_tile = B
    assert B % b_tile == 0

    # im2col for Conv2d(kernel=stride=PATCH); prepend an all-zero "patch" per
    # image for the cls-token slot so the single patch matmul inside the
    # kernel covers the whole token slab.
    xp = x.reshape(B, IN_CH, IMG // PATCH, PATCH, IMG // PATCH, PATCH)
    xp = xp.transpose(0, 2, 4, 1, 3, 5).reshape(B, N_PATCHES, PATCH_FEAT)
    xp = jnp.concatenate(
        [jnp.zeros((B, 1, PATCH_FEAT), jnp.float32), xp], axis=1)   # (B, SEQ, PF)

    out = pl.pallas_call(
        _vit_kernel,
        out_shape=jax.ShapeDtypeStruct((B, 1, LANES), jnp.float32),
        grid=(B // b_tile,),
        in_specs=[
            pl.BlockSpec((b_tile, SEQ, PATCH_FEAT), lambda i: (i, 0, 0)),
            pl.BlockSpec((MAT_ROWS, LANES), lambda i: (0, 0)),   # weights: 1 DMA
            pl.BlockSpec((VEC_ROWS, LANES), lambda i: (0, 0)),   # vectors: 1 DMA
        ],
        out_specs=pl.BlockSpec((b_tile, 1, LANES), lambda i: (i, 0, 0)),
        compiler_params=pltpu.CompilerParams(
            dimension_semantics=("parallel",)),   # v7x: one block per TensorCore
    )(xp, packed["mat"], packed["vec"])
    return out.reshape(B, LANES)[:, :NUM_CLASSES]


# ----------------------------------- main ------------------------------------
if __name__ == "__main__":
    key = jax.random.PRNGKey(0)
    pkey, xkey = jax.random.split(key)
    params = init_params(pkey)
    packed = pack_params(params)
    x = jax.random.normal(xkey, (2, IN_CH, IMG, IMG), jnp.float32)

    fwd = jax.jit(vit_forward)
    out = jax.block_until_ready(fwd(packed, x))

    assert out.shape == (2, NUM_CLASSES), out.shape
    assert jnp.all(jnp.isfinite(out))
    print("KERNEL_OK")
</pallas_src>

<mosaic_0001>
module attributes {stable_mosaic.version = 11 : i64} {
  func.func @_vit_kernel(%arg0: i32, %arg1: memref<2x17x48xf32, #tpu.memory_space<vmem>>, %arg2: memref<440x128xf32, #tpu.memory_space<vmem>>, %arg3: memref<24x128xf32, #tpu.memory_space<vmem>>, %arg4: memref<2x1x128xf32, #tpu.memory_space<vmem>>) attributes {dimension_semantics = [#tpu.dimension_semantics<parallel>], iteration_bounds = array<i64: 1>, scalar_prefetch = 0 : i64, scratch_operands = 0 : i64, tpu.core_type = #tpu.core_type<tc>, window_params = [{transform_indices = @transform_0, window_bounds = array<i64: 2, 17, 48>}, {pipeline_mode = #tpu.pipeline_mode<synchronous>, transform_indices = @transform_1, window_bounds = array<i64: 440, 128>}, {pipeline_mode = #tpu.pipeline_mode<synchronous>, transform_indices = @transform_2, window_bounds = array<i64: 24, 128>}, {transform_indices = @transform_3, window_bounds = array<i64: 2, 1, 128>}]} {
    %c0 = arith.constant 0 : index
    %c0_0 = arith.constant 0 : index
    %c0_1 = arith.constant 0 : index
    %0 = vector.load %arg1[%c0, %c0_0, %c0_1] : memref<2x17x48xf32, #tpu.memory_space<vmem>>, vector<1x17x48xf32>
    %1 = vector.shape_cast %0 : vector<1x17x48xf32> to vector<17x48xf32>
    %c1 = arith.constant 1 : index
    %c0_2 = arith.constant 0 : index
    %c0_3 = arith.constant 0 : index
    %2 = vector.load %arg1[%c1, %c0_2, %c0_3] : memref<2x17x48xf32, #tpu.memory_space<vmem>>, vector<1x17x48xf32>
    %3 = vector.shape_cast %2 : vector<1x17x48xf32> to vector<17x48xf32>
    %4 = tpu.concatenate %1, %3 in 0 : vector<17x48xf32>, vector<17x48xf32> -> vector<34x48xf32>
    %c0_4 = arith.constant 0 : index
    %c0_5 = arith.constant 0 : index
    %5 = vector.load %arg2[%c0_4, %c0_5] : memref<440x128xf32, #tpu.memory_space<vmem>>, vector<48x32xf32>
    %cst = arith.constant dense<0.000000e+00> : vector<34x32xf32>
    %6 = tpu.matmul %4, %5, %cst {dimension_numbers = #tpu.dot_dimension_numbers<[1], [0], [0], [1], [0, 0, 1, 1], [], []>} : vector<34x48xf32>, vector<48x32xf32>, vector<34x32xf32> -> vector<34x32xf32>
    %c48 = arith.constant 48 : index
    %c0_6 = arith.constant 0 : index
    %7 = vector.load %arg2[%c48, %c0_6] : memref<440x128xf32, #tpu.memory_space<vmem>>, vector<17x32xf32>
    %8 = tpu.concatenate %7, %7 in 0 : vector<17x32xf32>, vector<17x32xf32> -> vector<34x32xf32>
    %9 = arith.addf %6, %8 : vector<34x32xf32>
    %c2 = arith.constant 2 : index
    %c0_7 = arith.constant 0 : index
    %10 = vector.load %arg3[%c2, %c0_7] : memref<24x128xf32, #tpu.memory_space<vmem>>, vector<1x32xf32>
    %c3 = arith.constant 3 : index
    %c0_8 = arith.constant 0 : index
    %11 = vector.load %arg3[%c3, %c0_8] : memref<24x128xf32, #tpu.memory_space<vmem>>, vector<1x32xf32>
    %cst_9 = arith.constant dense<0.000000e+00> : vector<34xf32>
    %12 = vector.multi_reduction <add>, %9, %cst_9 [1] : vector<34x32xf32> to vector<34xf32>
    %13 = vector.shape_cast %12 : vector<34xf32> to vector<34x1xf32>
    %cst_10 = arith.constant 3.200000e+01 : f32
    %14 = vector.broadcast %cst_10 : f32 to vector<34x1xf32>
    %15 = arith.divf %13, %14 : vector<34x1xf32>
    %16 = vector.broadcast %15 : vector<34x1xf32> to vector<34x32xf32>
    %17 = arith.subf %9, %16 : vector<34x32xf32>
    %18 = arith.mulf %17, %17 : vector<34x32xf32>
    %cst_11 = arith.constant dense<0.000000e+00> : vector<34xf32>
    %19 = vector.multi_reduction <add>, %18, %cst_11 [1] : vector<34x32xf32> to vector<34xf32>
    %20 = vector.shape_cast %19 : vector<34xf32> to vector<34x1xf32>
    %cst_12 = arith.constant 3.200000e+01 : f32
    %21 = vector.broadcast %cst_12 : f32 to vector<34x1xf32>
    %22 = arith.divf %20, %21 : vector<34x1xf32>
    %cst_13 = arith.constant 9.99999997E-7 : f32
    %23 = vector.broadcast %cst_13 : f32 to vector<34x1xf32>
    %24 = arith.addf %22, %23 : vector<34x1xf32>
    %25 = math.rsqrt %24 : vector<34x1xf32>
    %26 = vector.broadcast %25 : vector<34x1xf32> to vector<34x32xf32>
    %27 = arith.mulf %17, %26 : vector<34x32xf32>
    %28 = vector.broadcast %10 : vector<1x32xf32> to vector<34x32xf32>
    %29 = arith.mulf %27, %28 : vector<34x32xf32>
    %30 = vector.broadcast %11 : vector<1x32xf32> to vector<34x32xf32>
    %31 = arith.addf %29, %30 : vector<34x32xf32>
    %c72 = arith.constant 72 : index
    %c0_14 = arith.constant 0 : index
    %32 = vector.load %arg2[%c72, %c0_14] : memref<440x128xf32, #tpu.memory_space<vmem>>, vector<32x64xf32>
    %cst_15 = arith.constant dense<0.000000e+00> : vector<34x64xf32>
    %33 = tpu.matmul %31, %32, %cst_15 {dimension_numbers = #tpu.dot_dimension_numbers<[1], [0], [0], [1], [0, 0, 1, 1], [], []>} : vector<34x32xf32>, vector<32x64xf32>, vector<34x64xf32> -> vector<34x64xf32>
    %c4 = arith.constant 4 : index
    %c0_16 = arith.constant 0 : index
    %34 = vector.load %arg3[%c4, %c0_16] : memref<24x128xf32, #tpu.memory_space<vmem>>, vector<1x64xf32>
    %35 = vector.broadcast %34 : vector<1x64xf32> to vector<34x64xf32>
    %36 = arith.addf %33, %35 : vector<34x64xf32>
    %c104 = arith.constant 104 : index
    %c0_17 = arith.constant 0 : index
    %37 = vector.load %arg2[%c104, %c0_17] : memref<440x128xf32, #tpu.memory_space<vmem>>, vector<32x128xf32>
    %cst_18 = arith.constant dense<0.000000e+00> : vector<34x128xf32>
    %38 = tpu.matmul %31, %37, %cst_18 {dimension_numbers = #tpu.dot_dimension_numbers<[1], [0], [0], [1], [0, 0, 1, 1], [], []>} : vector<34x32xf32>, vector<32x128xf32>, vector<34x128xf32> -> vector<34x128xf32>
    %c5 = arith.constant 5 : index
    %c0_19 = arith.constant 0 : index
    %39 = vector.load %arg3[%c5, %c0_19] : memref<24x128xf32, #tpu.memory_space<vmem>>, vector<1x128xf32>
    %40 = vector.broadcast %39 : vector<1x128xf32> to vector<34x128xf32>
    %41 = arith.addf %38, %40 : vector<34x128xf32>
    %cst_20 = arith.constant 0.000000e+00 : f32
    %42 = vector.broadcast %cst_20 : f32 to vector<17x32xf32>
    %43 = vector.extract_strided_slice %36 {offsets = [0, 0], sizes = [17, 8], strides = [1, 1]} : vector<34x64xf32> to vector<17x8xf32>
    %44 = vector.extract_strided_slice %36 {offsets = [0, 32], sizes = [17, 8], strides = [1, 1]} : vector<34x64xf32> to vector<17x8xf32>
    %cst_21 = arith.constant dense<0.000000e+00> : vector<17x17xf32>
    %45 = tpu.matmul %43, %44, %cst_21 {dimension_numbers = #tpu.dot_dimension_numbers<[1], [1], [0], [0], [0, 0, 1, 0], [], []>} : vector<17x8xf32>, vector<17x8xf32>, vector<17x17xf32> -> vector<17x17xf32>
    %cst_22 = arith.constant dense<0xFF800000> : vector<17xf32>
    %46 = vector.multi_reduction <maximumf>, %45, %cst_22 [1] : vector<17x17xf32> to vector<17xf32>
    %47 = vector.shape_cast %46 : vector<17xf32> to vector<17x1xf32>
    %48 = vector.broadcast %47 : vector<17x1xf32> to vector<17x17xf32>
    %49 = arith.subf %45, %48 : vector<17x17xf32>
    %50 = math.exp %49 : vector<17x17xf32>
    %cst_23 = arith.constant dense<0.000000e+00> : vector<17xf32>
    %51 = vector.multi_reduction <add>, %50, %cst_23 [1] : vector<17x17xf32> to vector<17xf32>
    %52 = vector.shape_cast %51 : vector<17xf32> to vector<17x1xf32>
    %53 = vector.broadcast %52 : vector<17x1xf32> to vector<17x17xf32>
    %54 = arith.divf %50, %53 : vector<17x17xf32>
    %55 = vector.extract_strided_slice %41 {offsets = [0, 0], sizes = [17, 32], strides = [1, 1]} : vector<34x128xf32> to vector<17x32xf32>
    %cst_24 = arith.constant dense<0.000000e+00> : vector<17x32xf32>
    %56 = tpu.matmul %54, %55, %cst_24 {dimension_numbers = #tpu.dot_dimension_numbers<[1], [0], [0], [1], [0, 0, 1, 1], [], []>} : vector<17x17xf32>, vector<17x32xf32>, vector<17x32xf32> -> vector<17x32xf32>
    %57 = arith.addf %42, %56 : vector<17x32xf32>
    %58 = vector.extract_strided_slice %36 {offsets = [0, 8], sizes = [17, 8], strides = [1, 1]} : vector<34x64xf32> to vector<17x8xf32>
    %59 = vector.extract_strided_slice %36 {offsets = [0, 40], sizes = [17, 8], strides = [1, 1]} : vector<34x64xf32> to vector<17x8xf32>
    %cst_25 = arith.constant dense<0.000000e+00> : vector<17x17xf32>
    %60 = tpu.matmul %58, %59, %cst_25 {dimension_numbers = #tpu.dot_dimension_numbers<[1], [1], [0], [0], [0, 0, 1, 0], [], []>} : vector<17x8xf32>, vector<17x8xf32>, vector<17x17xf32> -> vector<17x17xf32>
    %cst_26 = arith.constant dense<0xFF800000> : vector<17xf32>
    %61 = vector.multi_reduction <maximumf>, %60, %cst_26 [1] : vector<17x17xf32> to vector<17xf32>
    %62 = vector.shape_cast %61 : vector<17xf32> to vector<17x1xf32>
    %63 = vector.broadcast %62 : vector<17x1xf32> to vector<17x17xf32>
    %64 = arith.subf %60, %63 : vector<17x17xf32>
    %65 = math.exp %64 : vector<17x17xf32>
    %cst_27 = arith.constant dense<0.000000e+00> : vector<17xf32>
    %66 = vector.multi_reduction <add>, %65, %cst_27 [1] : vector<17x17xf32> to vector<17xf32>
    %67 = vector.shape_cast %66 : vector<17xf32> to vector<17x1xf32>
    %68 = vector.broadcast %67 : vector<17x1xf32> to vector<17x17xf32>
    %69 = arith.divf %65, %68 : vector<17x17xf32>
    %70 = vector.extract_strided_slice %41 {offsets = [0, 32], sizes = [17, 32], strides = [1, 1]} : vector<34x128xf32> to vector<17x32xf32>
    %cst_28 = arith.constant dense<0.000000e+00> : vector<17x32xf32>
    %71 = tpu.matmul %69, %70, %cst_28 {dimension_numbers = #tpu.dot_dimension_numbers<[1], [0], [0], [1], [0, 0, 1, 1], [], []>} : vector<17x17xf32>, vector<17x32xf32>, vector<17x32xf32> -> vector<17x32xf32>
    %72 = arith.addf %57, %71 : vector<17x32xf32>
    %73 = vector.extract_strided_slice %36 {offsets = [0, 16], sizes = [17, 8], strides = [1, 1]} : vector<34x64xf32> to vector<17x8xf32>
    %74 = vector.extract_strided_slice %36 {offsets = [0, 48], sizes = [17, 8], strides = [1, 1]} : vector<34x64xf32> to vector<17x8xf32>
    %cst_29 = arith.constant dense<0.000000e+00> : vector<17x17xf32>
    %75 = tpu.matmul %73, %74, %cst_29 {dimension_numbers = #tpu.dot_dimension_numbers<[1], [1], [0], [0], [0, 0, 1, 0], [], []>} : vector<17x8xf32>, vector<17x8xf32>, vector<17x17xf32> -> vector<17x17xf32>
    %cst_30 = arith.constant dense<0xFF800000> : vector<17xf32>
    %76 = vector.multi_reduction <maximumf>, %75, %cst_30 [1] : vector<17x17xf32> to vector<17xf32>
    %77 = vector.shape_cast %76 : vector<17xf32> to vector<17x1xf32>
    %78 = vector.broadcast %77 : vector<17x1xf32> to vector<17x17xf32>
    %79 = arith.subf %75, %78 : vector<17x17xf32>
    %80 = math.exp %79 : vector<17x17xf32>
    %cst_31 = arith.constant dense<0.000000e+00> : vector<17xf32>
    %81 = vector.multi_reduction <add>, %80, %cst_31 [1] : vector<17x17xf32> to vector<17xf32>
    %82 = vector.shape_cast %81 : vector<17xf32> to vector<17x1xf32>
    %83 = vector.broadcast %82 : vector<17x1xf32> to vector<17x17xf32>
    %84 = arith.divf %80, %83 : vector<17x17xf32>
    %85 = vector.extract_strided_slice %41 {offsets = [0, 64], sizes = [17, 32], strides = [1, 1]} : vector<34x128xf32> to vector<17x32xf32>
    %cst_32 = arith.constant dense<0.000000e+00> : vector<17x32xf32>
    %86 = tpu.matmul %84, %85, %cst_32 {dimension_numbers = #tpu.dot_dimension_numbers<[1], [0], [0], [1], [0, 0, 1, 1], [], []>} : vector<17x17xf32>, vector<17x32xf32>, vector<17x32xf32> -> vector<17x32xf32>
    %87 = arith.addf %72, %86 : vector<17x32xf32>
    %88 = vector.extract_strided_slice %36 {offsets = [0, 24], sizes = [17, 8], strides = [1, 1]} : vector<34x64xf32> to vector<17x8xf32>
    %89 = vector.extract_strided_slice %36 {offsets = [0, 56], sizes = [17, 8], strides = [1, 1]} : vector<34x64xf32> to vector<17x8xf32>
    %cst_33 = arith.constant dense<0.000000e+00> : vector<17x17xf32>
    %90 = tpu.matmul %88, %89, %cst_33 {dimension_numbers = #tpu.dot_dimension_numbers<[1], [1], [0], [0], [0, 0, 1, 0], [], []>} : vector<17x8xf32>, vector<17x8xf32>, vector<17x17xf32> -> vector<17x17xf32>
    %cst_34 = arith.constant dense<0xFF800000> : vector<17xf32>
    %91 = vector.multi_reduction <maximumf>, %90, %cst_34 [1] : vector<17x17xf32> to vector<17xf32>
    %92 = vector.shape_cast %91 : vector<17xf32> to vector<17x1xf32>
    %93 = vector.broadcast %92 : vector<17x1xf32> to vector<17x17xf32>
    %94 = arith.subf %90, %93 : vector<17x17xf32>
    %95 = math.exp %94 : vector<17x17xf32>
    %cst_35 = arith.constant dense<0.000000e+00> : vector<17xf32>
    %96 = vector.multi_reduction <add>, %95, %cst_35 [1] : vector<17x17xf32> to vector<17xf32>
    %97 = vector.shape_cast %96 : vector<17xf32> to vector<17x1xf32>
    %98 = vector.broadcast %97 : vector<17x1xf32> to vector<17x17xf32>
    %99 = arith.divf %95, %98 : vector<17x17xf32>
    %100 = vector.extract_strided_slice %41 {offsets = [0, 96], sizes = [17, 32], strides = [1, 1]} : vector<34x128xf32> to vector<17x32xf32>
    %cst_36 = arith.constant dense<0.000000e+00> : vector<17x32xf32>
    %101 = tpu.matmul %99, %100, %cst_36 {dimension_numbers = #tpu.dot_dimension_numbers<[1], [0], [0], [1], [0, 0, 1, 1], [], []>} : vector<17x17xf32>, vector<17x32xf32>, vector<17x32xf32> -> vector<17x32xf32>
    %102 = arith.addf %87, %101 : vector<17x32xf32>
    %cst_37 = arith.constant 0.000000e+00 : f32
    %103 = vector.broadcast %cst_37 : f32 to vector<17x32xf32>
    %104 = vector.extract_strided_slice %36 {offsets = [17, 0], sizes = [17, 8], strides = [1, 1]} : vector<34x64xf32> to vector<17x8xf32>
    %105 = vector.extract_strided_slice %36 {offsets = [17, 32], sizes = [17, 8], strides = [1, 1]} : vector<34x64xf32> to vector<17x8xf32>
    %cst_38 = arith.constant dense<0.000000e+00> : vector<17x17xf32>
    %106 = tpu.matmul %104, %105, %cst_38 {dimension_numbers = #tpu.dot_dimension_numbers<[1], [1], [0], [0], [0, 0, 1, 0], [], []>} : vector<17x8xf32>, vector<17x8xf32>, vector<17x17xf32> -> vector<17x17xf32>
    %cst_39 = arith.constant dense<0xFF800000> : vector<17xf32>
    %107 = vector.multi_reduction <maximumf>, %106, %cst_39 [1] : vector<17x17xf32> to vector<17xf32>
    %108 = vector.shape_cast %107 : vector<17xf32> to vector<17x1xf32>
    %109 = vector.broadcast %108 : vector<17x1xf32> to vector<17x17xf32>
    %110 = arith.subf %106, %109 : vector<17x17xf32>
    %111 = math.exp %110 : vector<17x17xf32>
    %cst_40 = arith.constant dense<0.000000e+00> : vector<17xf32>
    %112 = vector.multi_reduction <add>, %111, %cst_40 [1] : vector<17x17xf32> to vector<17xf32>
    %113 = vector.shape_cast %112 : vector<17xf32> to vector<17x1xf32>
    %114 = vector.broadcast %113 : vector<17x1xf32> to vector<17x17xf32>
    %115 = arith.divf %111, %114 : vector<17x17xf32>
    %116 = vector.extract_strided_slice %41 {offsets = [17, 0], sizes = [17, 32], strides = [1, 1]} : vector<34x128xf32> to vector<17x32xf32>
    %cst_41 = arith.constant dense<0.000000e+00> : vector<17x32xf32>
    %117 = tpu.matmul %115, %116, %cst_41 {dimension_numbers = #tpu.dot_dimension_numbers<[1], [0], [0], [1], [0, 0, 1, 1], [], []>} : vector<17x17xf32>, vector<17x32xf32>, vector<17x32xf32> -> vector<17x32xf32>
    %118 = arith.addf %103, %117 : vector<17x32xf32>
    %119 = vector.extract_strided_slice %36 {offsets = [17, 8], sizes = [17, 8], strides = [1, 1]} : vector<34x64xf32> to vector<17x8xf32>
    %120 = vector.extract_strided_slice %36 {offsets = [17, 40], sizes = [17, 8], strides = [1, 1]} : vector<34x64xf32> to vector<17x8xf32>
    %cst_42 = arith.constant dense<0.000000e+00> : vector<17x17xf32>
    %121 = tpu.matmul %119, %120, %cst_42 {dimension_numbers = #tpu.dot_dimension_numbers<[1], [1], [0], [0], [0, 0, 1, 0], [], []>} : vector<17x8xf32>, vector<17x8xf32>, vector<17x17xf32> -> vector<17x17xf32>
    %cst_43 = arith.constant dense<0xFF800000> : vector<17xf32>
    %122 = vector.multi_reduction <maximumf>, %121, %cst_43 [1] : vector<17x17xf32> to vector<17xf32>
    %123 = vector.shape_cast %122 : vector<17xf32> to vector<17x1xf32>
    %124 = vector.broadcast %123 : vector<17x1xf32> to vector<17x17xf32>
    %125 = arith.subf %121, %124 : vector<17x17xf32>
    %126 = math.exp %125 : vector<17x17xf32>
    %cst_44 = arith.constant dense<0.000000e+00> : vector<17xf32>
    %127 = vector.multi_reduction <add>, %126, %cst_44 [1] : vector<17x17xf32> to vector<17xf32>
    %128 = vector.shape_cast %127 : vector<17xf32> to vector<17x1xf32>
    %129 = vector.broadcast %128 : vector<17x1xf32> to vector<17x17xf32>
    %130 = arith.divf %126, %129 : vector<17x17xf32>
    %131 = vector.extract_strided_slice %41 {offsets = [17, 32], sizes = [17, 32], strides = [1, 1]} : vector<34x128xf32> to vector<17x32xf32>
    %cst_45 = arith.constant dense<0.000000e+00> : vector<17x32xf32>
    %132 = tpu.matmul %130, %131, %cst_45 {dimension_numbers = #tpu.dot_dimension_numbers<[1], [0], [0], [1], [0, 0, 1, 1], [], []>} : vector<17x17xf32>, vector<17x32xf32>, vector<17x32xf32> -> vector<17x32xf32>
    %133 = arith.addf %118, %132 : vector<17x32xf32>
    %134 = vector.extract_strided_slice %36 {offsets = [17, 16], sizes = [17, 8], strides = [1, 1]} : vector<34x64xf32> to vector<17x8xf32>
    %135 = vector.extract_strided_slice %36 {offsets = [17, 48], sizes = [17, 8], strides = [1, 1]} : vector<34x64xf32> to vector<17x8xf32>
    %cst_46 = arith.constant dense<0.000000e+00> : vector<17x17xf32>
    %136 = tpu.matmul %134, %135, %cst_46 {dimension_numbers = #tpu.dot_dimension_numbers<[1], [1], [0], [0], [0, 0, 1, 0], [], []>} : vector<17x8xf32>, vector<17x8xf32>, vector<17x17xf32> -> vector<17x17xf32>
    %cst_47 = arith.constant dense<0xFF800000> : vector<17xf32>
    %137 = vector.multi_reduction <maximumf>, %136, %cst_47 [1] : vector<17x17xf32> to vector<17xf32>
    %138 = vector.shape_cast %137 : vector<17xf32> to vector<17x1xf32>
    %139 = vector.broadcast %138 : vector<17x1xf32> to vector<17x17xf32>
    %140 = arith.subf %136, %139 : vector<17x17xf32>
    %141 = math.exp %140 : vector<17x17xf32>
    %cst_48 = arith.constant dense<0.000000e+00> : vector<17xf32>
    %142 = vector.multi_reduction <add>, %141, %cst_48 [1] : vector<17x17xf32> to vector<17xf32>
    %143 = vector.shape_cast %142 : vector<17xf32> to vector<17x1xf32>
    %144 = vector.broadcast %143 : vector<17x1xf32> to vector<17x17xf32>
    %145 = arith.divf %141, %144 : vector<17x17xf32>
    %146 = vector.extract_strided_slice %41 {offsets = [17, 64], sizes = [17, 32], strides = [1, 1]} : vector<34x128xf32> to vector<17x32xf32>
    %cst_49 = arith.constant dense<0.000000e+00> : vector<17x32xf32>
    %147 = tpu.matmul %145, %146, %cst_49 {dimension_numbers = #tpu.dot_dimension_numbers<[1], [0], [0], [1], [0, 0, 1, 1], [], []>} : vector<17x17xf32>, vector<17x32xf32>, vector<17x32xf32> -> vector<17x32xf32>
    %148 = arith.addf %133, %147 : vector<17x32xf32>
    %149 = vector.extract_strided_slice %36 {offsets = [17, 24], sizes = [17, 8], strides = [1, 1]} : vector<34x64xf32> to vector<17x8xf32>
    %150 = vector.extract_strided_slice %36 {offsets = [17, 56], sizes = [17, 8], strides = [1, 1]} : vector<34x64xf32> to vector<17x8xf32>
    %cst_50 = arith.constant dense<0.000000e+00> : vector<17x17xf32>
    %151 = tpu.matmul %149, %150, %cst_50 {dimension_numbers = #tpu.dot_dimension_numbers<[1], [1], [0], [0], [0, 0, 1, 0], [], []>} : vector<17x8xf32>, vector<17x8xf32>, vector<17x17xf32> -> vector<17x17xf32>
    %cst_51 = arith.constant dense<0xFF800000> : vector<17xf32>
    %152 = vector.multi_reduction <maximumf>, %151, %cst_51 [1] : vector<17x17xf32> to vector<17xf32>
    %153 = vector.shape_cast %152 : vector<17xf32> to vector<17x1xf32>
    %154 = vector.broadcast %153 : vector<17x1xf32> to vector<17x17xf32>
    %155 = arith.subf %151, %154 : vector<17x17xf32>
    %156 = math.exp %155 : vector<17x17xf32>
    %cst_52 = arith.constant dense<0.000000e+00> : vector<17xf32>
    %157 = vector.multi_reduction <add>, %156, %cst_52 [1] : vector<17x17xf32> to vector<17xf32>
    %158 = vector.shape_cast %157 : vector<17xf32> to vector<17x1xf32>
    %159 = vector.broadcast %158 : vector<17x1xf32> to vector<17x17xf32>
    %160 = arith.divf %156, %159 : vector<17x17xf32>
    %161 = vector.extract_strided_slice %41 {offsets = [17, 96], sizes = [17, 32], strides = [1, 1]} : vector<34x128xf32> to vector<17x32xf32>
    %cst_53 = arith.constant dense<0.000000e+00> : vector<17x32xf32>
    %162 = tpu.matmul %160, %161, %cst_53 {dimension_numbers = #tpu.dot_dimension_numbers<[1], [0], [0], [1], [0, 0, 1, 1], [], []>} : vector<17x17xf32>, vector<17x32xf32>, vector<17x32xf32> -> vector<17x32xf32>
    %163 = arith.addf %148, %162 : vector<17x32xf32>
    %164 = tpu.concatenate %102, %163 in 0 : vector<17x32xf32>, vector<17x32xf32> -> vector<34x32xf32>
    %165 = arith.addf %9, %164 : vector<34x32xf32>
    %c6 = arith.constant 6 : index
    %c0_54 = arith.constant 0 : index
    %166 = vector.load %arg3[%c6, %c0_54] : memref<24x128xf32, #tpu.memory_space<vmem>>, vector<1x32xf32>
    %167 = vector.broadcast %166 : vector<1x32xf32> to vector<34x32xf32>
    %168 = arith.addf %165, %167 : vector<34x32xf32>
    %c7 = arith.constant 7 : index
    %c0_55 = arith.constant 0 : index
    %169 = vector.load %arg3[%c7, %c0_55] : memref<24x128xf32, #tpu.memory_space<vmem>>, vector<1x32xf32>
    %c8 = arith.constant 8 : index
    %c0_56 = arith.constant 0 : index
    %170 = vector.load %arg3[%c8, %c0_56] : memref<24x128xf32, #tpu.memory_space<vmem>>, vector<1x32xf32>
    %cst_57 = arith.constant dense<0.000000e+00> : vector<34xf32>
    %171 = vector.multi_reduction <add>, %168, %cst_57 [1] : vector<34x32xf32> to vector<34xf32>
    %172 = vector.shape_cast %171 : vector<34xf32> to vector<34x1xf32>
    %cst_58 = arith.constant 3.200000e+01 : f32
    %173 = vector.broadcast %cst_58 : f32 to vector<34x1xf32>
    %174 = arith.divf %172, %173 : vector<34x1xf32>
    %175 = vector.broadcast %174 : vector<34x1xf32> to vector<34x32xf32>
    %176 = arith.subf %168, %175 : vector<34x32xf32>
    %177 = arith.mulf %176, %176 : vector<34x32xf32>
    %cst_59 = arith.constant dense<0.000000e+00> : vector<34xf32>
    %178 = vector.multi_reduction <add>, %177, %cst_59 [1] : vector<34x32xf32> to vector<34xf32>
    %179 = vector.shape_cast %178 : vector<34xf32> to vector<34x1xf32>
    %cst_60 = arith.constant 3.200000e+01 : f32
    %180 = vector.broadcast %cst_60 : f32 to vector<34x1xf32>
    %181 = arith.divf %179, %180 : vector<34x1xf32>
    %cst_61 = arith.constant 9.99999997E-7 : f32
    %182 = vector.broadcast %cst_61 : f32 to vector<34x1xf32>
    %183 = arith.addf %181, %182 : vector<34x1xf32>
    %184 = math.rsqrt %183 : vector<34x1xf32>
    %185 = vector.broadcast %184 : vector<34x1xf32> to vector<34x32xf32>
    %186 = arith.mulf %176, %185 : vector<34x32xf32>
    %187 = vector.broadcast %169 : vector<1x32xf32> to vector<34x32xf32>
    %188 = arith.mulf %186, %187 : vector<34x32xf32>
    %189 = vector.broadcast %170 : vector<1x32xf32> to vector<34x32xf32>
    %190 = arith.addf %188, %189 : vector<34x32xf32>
    %c136 = arith.constant 136 : index
    %c0_62 = arith.constant 0 : index
    %191 = vector.load %arg2[%c136, %c0_62] : memref<440x128xf32, #tpu.memory_space<vmem>>, vector<32x64xf32>
    %cst_63 = arith.constant dense<0.000000e+00> : vector<34x64xf32>
    %192 = tpu.matmul %190, %191, %cst_63 {dimension_numbers = #tpu.dot_dimension_numbers<[1], [0], [0], [1], [0, 0, 1, 1], [], []>} : vector<34x32xf32>, vector<32x64xf32>, vector<34x64xf32> -> vector<34x64xf32>
    %c9 = arith.constant 9 : index
    %c0_64 = arith.constant 0 : index
    %193 = vector.load %arg3[%c9, %c0_64] : memref<24x128xf32, #tpu.memory_space<vmem>>, vector<1x64xf32>
    %194 = vector.broadcast %193 : vector<1x64xf32> to vector<34x64xf32>
    %195 = arith.addf %192, %194 : vector<34x64xf32>
    %cst_65 = arith.constant 5.000000e-01 : f32
    %196 = vector.broadcast %cst_65 : f32 to vector<34x64xf32>
    %197 = arith.mulf %196, %195 : vector<34x64xf32>
    %cst_66 = arith.constant 0.707106769 : f32
    %198 = vector.broadcast %cst_66 : f32 to vector<34x64xf32>
    %199 = arith.mulf %195, %198 : vector<34x64xf32>
    %200 = math.erf %199 : vector<34x64xf32>
    %cst_67 = arith.constant 1.000000e+00 : f32
    %201 = vector.broadcast %cst_67 : f32 to vector<34x64xf32>
    %202 = arith.addf %201, %200 : vector<34x64xf32>
    %203 = arith.mulf %197, %202 : vector<34x64xf32>
    %c168 = arith.constant 168 : index
    %c0_68 = arith.constant 0 : index
    %204 = vector.load %arg2[%c168, %c0_68] : memref<440x128xf32, #tpu.memory_space<vmem>>, vector<64x32xf32>
    %cst_69 = arith.constant dense<0.000000e+00> : vector<34x32xf32>
    %205 = tpu.matmul %203, %204, %cst_69 {dimension_numbers = #tpu.dot_dimension_numbers<[1], [0], [0], [1], [0, 0, 1, 1], [], []>} : vector<34x64xf32>, vector<64x32xf32>, vector<34x32xf32> -> vector<34x32xf32>
    %c10 = arith.constant 10 : index
    %c0_70 = arith.constant 0 : index
    %206 = vector.load %arg3[%c10, %c0_70] : memref<24x128xf32, #tpu.memory_space<vmem>>, vector<1x32xf32>
    %207 = vector.broadcast %206 : vector<1x32xf32> to vector<34x32xf32>
    %208 = arith.addf %205, %207 : vector<34x32xf32>
    %209 = arith.addf %168, %208 : vector<34x32xf32>
    %c11 = arith.constant 11 : index
    %c0_71 = arith.constant 0 : index
    %210 = vector.load %arg3[%c11, %c0_71] : memref<24x128xf32, #tpu.memory_space<vmem>>, vector<1x32xf32>
    %c12 = arith.constant 12 : index
    %c0_72 = arith.constant 0 : index
    %211 = vector.load %arg3[%c12, %c0_72] : memref<24x128xf32, #tpu.memory_space<vmem>>, vector<1x32xf32>
    %cst_73 = arith.constant dense<0.000000e+00> : vector<34xf32>
    %212 = vector.multi_reduction <add>, %209, %cst_73 [1] : vector<34x32xf32> to vector<34xf32>
    %213 = vector.shape_cast %212 : vector<34xf32> to vector<34x1xf32>
    %cst_74 = arith.constant 3.200000e+01 : f32
    %214 = vector.broadcast %cst_74 : f32 to vector<34x1xf32>
    %215 = arith.divf %213, %214 : vector<34x1xf32>
    %216 = vector.broadcast %215 : vector<34x1xf32> to vector<34x32xf32>
    %217 = arith.subf %209, %216 : vector<34x32xf32>
    %218 = arith.mulf %217, %217 : vector<34x32xf32>
    %cst_75 = arith.constant dense<0.000000e+00> : vector<34xf32>
    %219 = vector.multi_reduction <add>, %218, %cst_75 [1] : vector<34x32xf32> to vector<34xf32>
    %220 = vector.shape_cast %219 : vector<34xf32> to vector<34x1xf32>
    %cst_76 = arith.constant 3.200000e+01 : f32
    %221 = vector.broadcast %cst_76 : f32 to vector<34x1xf32>
    %222 = arith.divf %220, %221 : vector<34x1xf32>
    %cst_77 = arith.constant 9.99999997E-7 : f32
    %223 = vector.broadcast %cst_77 : f32 to vector<34x1xf32>
    %224 = arith.addf %222, %223 : vector<34x1xf32>
    %225 = math.rsqrt %224 : vector<34x1xf32>
    %226 = vector.broadcast %225 : vector<34x1xf32> to vector<34x32xf32>
    %227 = arith.mulf %217, %226 : vector<34x32xf32>
    %228 = vector.broadcast %210 : vector<1x32xf32> to vector<34x32xf32>
    %229 = arith.mulf %227, %228 : vector<34x32xf32>
    %230 = vector.broadcast %211 : vector<1x32xf32> to vector<34x32xf32>
    %231 = arith.addf %229, %230 : vector<34x32xf32>
    %c232 = arith.constant 232 : index
    %c0_78 = arith.constant 0 : index
    %232 = vector.load %arg2[%c232, %c0_78] : memref<440x128xf32, #tpu.memory_space<vmem>>, vector<32x64xf32>
    %cst_79 = arith.constant dense<0.000000e+00> : vector<34x64xf32>
    %233 = tpu.matmul %231, %232, %cst_79 {dimension_numbers = #tpu.dot_dimension_numbers<[1], [0], [0], [1], [0, 0, 1, 1], [], []>} : vector<34x32xf32>, vector<32x64xf32>, vector<34x64xf32> -> vector<34x64xf32>
    %c13 = arith.constant 13 : index
    %c0_80 = arith.constant 0 : index
    %234 = vector.load %arg3[%c13, %c0_80] : memref<24x128xf32, #tpu.memory_space<vmem>>, vector<1x64xf32>
    %235 = vector.broadcast %234 : vector<1x64xf32> to vector<34x64xf32>
    %236 = arith.addf %233, %235 : vector<34x64xf32>
    %c264 = arith.constant 264 : index
    %c0_81 = arith.constant 0 : index
    %237 = vector.load %arg2[%c264, %c0_81] : memref<440x128xf32, #tpu.memory_space<vmem>>, vector<32x128xf32>
    %cst_82 = arith.constant dense<0.000000e+00> : vector<34x128xf32>
    %238 = tpu.matmul %231, %237, %cst_82 {dimension_numbers = #tpu.dot_dimension_numbers<[1], [0], [0], [1], [0, 0, 1, 1], [], []>} : vector<34x32xf32>, vector<32x128xf32>, vector<34x128xf32> -> vector<34x128xf32>
    %c14 = arith.constant 14 : index
    %c0_83 = arith.constant 0 : index
    %239 = vector.load %arg3[%c14, %c0_83] : memref<24x128xf32, #tpu.memory_space<vmem>>, vector<1x128xf32>
    %240 = vector.broadcast %239 : vector<1x128xf32> to vector<34x128xf32>
    %241 = arith.addf %238, %240 : vector<34x128xf32>
    %cst_84 = arith.constant 0.000000e+00 : f32
    %242 = vector.broadcast %cst_84 : f32 to vector<17x32xf32>
    %243 = vector.extract_strided_slice %236 {offsets = [0, 0], sizes = [17, 8], strides = [1, 1]} : vector<34x64xf32> to vector<17x8xf32>
    %244 = vector.extract_strided_slice %236 {offsets = [0, 32], sizes = [17, 8], strides = [1, 1]} : vector<34x64xf32> to vector<17x8xf32>
    %cst_85 = arith.constant dense<0.000000e+00> : vector<17x17xf32>
    %245 = tpu.matmul %243, %244, %cst_85 {dimension_numbers = #tpu.dot_dimension_numbers<[1], [1], [0], [0], [0, 0, 1, 0], [], []>} : vector<17x8xf32>, vector<17x8xf32>, vector<17x17xf32> -> vector<17x17xf32>
    %cst_86 = arith.constant dense<0xFF800000> : vector<17xf32>
    %246 = vector.multi_reduction <maximumf>, %245, %cst_86 [1] : vector<17x17xf32> to vector<17xf32>
    %247 = vector.shape_cast %246 : vector<17xf32> to vector<17x1xf32>
    %248 = vector.broadcast %247 : vector<17x1xf32> to vector<17x17xf32>
    %249 = arith.subf %245, %248 : vector<17x17xf32>
    %250 = math.exp %249 : vector<17x17xf32>
    %cst_87 = arith.constant dense<0.000000e+00> : vector<17xf32>
    %251 = vector.multi_reduction <add>, %250, %cst_87 [1] : vector<17x17xf32> to vector<17xf32>
    %252 = vector.shape_cast %251 : vector<17xf32> to vector<17x1xf32>
    %253 = vector.broadcast %252 : vector<17x1xf32> to vector<17x17xf32>
    %254 = arith.divf %250, %253 : vector<17x17xf32>
    %255 = vector.extract_strided_slice %241 {offsets = [0, 0], sizes = [17, 32], strides = [1, 1]} : vector<34x128xf32> to vector<17x32xf32>
    %cst_88 = arith.constant dense<0.000000e+00> : vector<17x32xf32>
    %256 = tpu.matmul %254, %255, %cst_88 {dimension_numbers = #tpu.dot_dimension_numbers<[1], [0], [0], [1], [0, 0, 1, 1], [], []>} : vector<17x17xf32>, vector<17x32xf32>, vector<17x32xf32> -> vector<17x32xf32>
    %257 = arith.addf %242, %256 : vector<17x32xf32>
    %258 = vector.extract_strided_slice %236 {offsets = [0, 8], sizes = [17, 8], strides = [1, 1]} : vector<34x64xf32> to vector<17x8xf32>
    %259 = vector.extract_strided_slice %236 {offsets = [0, 40], sizes = [17, 8], strides = [1, 1]} : vector<34x64xf32> to vector<17x8xf32>
    %cst_89 = arith.constant dense<0.000000e+00> : vector<17x17xf32>
    %260 = tpu.matmul %258, %259, %cst_89 {dimension_numbers = #tpu.dot_dimension_numbers<[1], [1], [0], [0], [0, 0, 1, 0], [], []>} : vector<17x8xf32>, vector<17x8xf32>, vector<17x17xf32> -> vector<17x17xf32>
    %cst_90 = arith.constant dense<0xFF800000> : vector<17xf32>
    %261 = vector.multi_reduction <maximumf>, %260, %cst_90 [1] : vector<17x17xf32> to vector<17xf32>
    %262 = vector.shape_cast %261 : vector<17xf32> to vector<17x1xf32>
    %263 = vector.broadcast %262 : vector<17x1xf32> to vector<17x17xf32>
    %264 = arith.subf %260, %263 : vector<17x17xf32>
    %265 = math.exp %264 : vector<17x17xf32>
    %cst_91 = arith.constant dense<0.000000e+00> : vector<17xf32>
    %266 = vector.multi_reduction <add>, %265, %cst_91 [1] : vector<17x17xf32> to vector<17xf32>
    %267 = vector.shape_cast %266 : vector<17xf32> to vector<17x1xf32>
    %268 = vector.broadcast %267 : vector<17x1xf32> to vector<17x17xf32>
    %269 = arith.divf %265, %268 : vector<17x17xf32>
    %270 = vector.extract_strided_slice %241 {offsets = [0, 32], sizes = [17, 32], strides = [1, 1]} : vector<34x128xf32> to vector<17x32xf32>
    %cst_92 = arith.constant dense<0.000000e+00> : vector<17x32xf32>
    %271 = tpu.matmul %269, %270, %cst_92 {dimension_numbers = #tpu.dot_dimension_numbers<[1], [0], [0], [1], [0, 0, 1, 1], [], []>} : vector<17x17xf32>, vector<17x32xf32>, vector<17x32xf32> -> vector<17x32xf32>
    %272 = arith.addf %257, %271 : vector<17x32xf32>
    %273 = vector.extract_strided_slice %236 {offsets = [0, 16], sizes = [17, 8], strides = [1, 1]} : vector<34x64xf32> to vector<17x8xf32>
    %274 = vector.extract_strided_slice %236 {offsets = [0, 48], sizes = [17, 8], strides = [1, 1]} : vector<34x64xf32> to vector<17x8xf32>
    %cst_93 = arith.constant dense<0.000000e+00> : vector<17x17xf32>
    %275 = tpu.matmul %273, %274, %cst_93 {dimension_numbers = #tpu.dot_dimension_numbers<[1], [1], [0], [0], [0, 0, 1, 0], [], []>} : vector<17x8xf32>, vector<17x8xf32>, vector<17x17xf32> -> vector<17x17xf32>
    %cst_94 = arith.constant dense<0xFF800000> : vector<17xf32>
    %276 = vector.multi_reduction <maximumf>, %275, %cst_94 [1] : vector<17x17xf32> to vector<17xf32>
    %277 = vector.shape_cast %276 : vector<17xf32> to vector<17x1xf32>
    %278 = vector.broadcast %277 : vector<17x1xf32> to vector<17x17xf32>
    %279 = arith.subf %275, %278 : vector<17x17xf32>
    %280 = math.exp %279 : vector<17x17xf32>
    %cst_95 = arith.constant dense<0.000000e+00> : vector<17xf32>
    %281 = vector.multi_reduction <add>, %280, %cst_95 [1] : vector<17x17xf32> to vector<17xf32>
    %282 = vector.shape_cast %281 : vector<17xf32> to vector<17x1xf32>
    %283 = vector.broadcast %282 : vector<17x1xf32> to vector<17x17xf32>
    %284 = arith.divf %280, %283 : vector<17x17xf32>
    %285 = vector.extract_strided_slice %241 {offsets = [0, 64], sizes = [17, 32], strides = [1, 1]} : vector<34x128xf32> to vector<17x32xf32>
    %cst_96 = arith.constant dense<0.000000e+00> : vector<17x32xf32>
    %286 = tpu.matmul %284, %285, %cst_96 {dimension_numbers = #tpu.dot_dimension_numbers<[1], [0], [0], [1], [0, 0, 1, 1], [], []>} : vector<17x17xf32>, vector<17x32xf32>, vector<17x32xf32> -> vector<17x32xf32>
    %287 = arith.addf %272, %286 : vector<17x32xf32>
    %288 = vector.extract_strided_slice %236 {offsets = [0, 24], sizes = [17, 8], strides = [1, 1]} : vector<34x64xf32> to vector<17x8xf32>
    %289 = vector.extract_strided_slice %236 {offsets = [0, 56], sizes = [17, 8], strides = [1, 1]} : vector<34x64xf32> to vector<17x8xf32>
    %cst_97 = arith.constant dense<0.000000e+00> : vector<17x17xf32>
    %290 = tpu.matmul %288, %289, %cst_97 {dimension_numbers = #tpu.dot_dimension_numbers<[1], [1], [0], [0], [0, 0, 1, 0], [], []>} : vector<17x8xf32>, vector<17x8xf32>, vector<17x17xf32> -> vector<17x17xf32>
    %cst_98 = arith.constant dense<0xFF800000> : vector<17xf32>
    %291 = vector.multi_reduction <maximumf>, %290, %cst_98 [1] : vector<17x17xf32> to vector<17xf32>
    %292 = vector.shape_cast %291 : vector<17xf32> to vector<17x1xf32>
    %293 = vector.broadcast %292 : vector<17x1xf32> to vector<17x17xf32>
    %294 = arith.subf %290, %293 : vector<17x17xf32>
    %295 = math.exp %294 : vector<17x17xf32>
    %cst_99 = arith.constant dense<0.000000e+00> : vector<17xf32>
    %296 = vector.multi_reduction <add>, %295, %cst_99 [1] : vector<17x17xf32> to vector<17xf32>
    %297 = vector.shape_cast %296 : vector<17xf32> to vector<17x1xf32>
    %298 = vector.broadcast %297 : vector<17x1xf32> to vector<17x17xf32>
    %299 = arith.divf %295, %298 : vector<17x17xf32>
    %300 = vector.extract_strided_slice %241 {offsets = [0, 96], sizes = [17, 32], strides = [1, 1]} : vector<34x128xf32> to vector<17x32xf32>
    %cst_100 = arith.constant dense<0.000000e+00> : vector<17x32xf32>
    %301 = tpu.matmul %299, %300, %cst_100 {dimension_numbers = #tpu.dot_dimension_numbers<[1], [0], [0], [1], [0, 0, 1, 1], [], []>} : vector<17x17xf32>, vector<17x32xf32>, vector<17x32xf32> -> vector<17x32xf32>
    %302 = arith.addf %287, %301 : vector<17x32xf32>
    %cst_101 = arith.constant 0.000000e+00 : f32
    %303 = vector.broadcast %cst_101 : f32 to vector<17x32xf32>
    %304 = vector.extract_strided_slice %236 {offsets = [17, 0], sizes = [17, 8], strides = [1, 1]} : vector<34x64xf32> to vector<17x8xf32>
    %305 = vector.extract_strided_slice %236 {offsets = [17, 32], sizes = [17, 8], strides = [1, 1]} : vector<34x64xf32> to vector<17x8xf32>
    %cst_102 = arith.constant dense<0.000000e+00> : vector<17x17xf32>
    %306 = tpu.matmul %304, %305, %cst_102 {dimension_numbers = #tpu.dot_dimension_numbers<[1], [1], [0], [0], [0, 0, 1, 0], [], []>} : vector<17x8xf32>, vector<17x8xf32>, vector<17x17xf32> -> vector<17x17xf32>
    %cst_103 = arith.constant dense<0xFF800000> : vector<17xf32>
    %307 = vector.multi_reduction <maximumf>, %306, %cst_103 [1] : vector<17x17xf32> to vector<17xf32>
    %308 = vector.shape_cast %307 : vector<17xf32> to vector<17x1xf32>
    %309 = vector.broadcast %308 : vector<17x1xf32> to vector<17x17xf32>
    %310 = arith.subf %306, %309 : vector<17x17xf32>
    %311 = math.exp %310 : vector<17x17xf32>
    %cst_104 = arith.constant dense<0.000000e+00> : vector<17xf32>
    %312 = vector.multi_reduction <add>, %311, %cst_104 [1] : vector<17x17xf32> to vector<17xf32>
    %313 = vector.shape_cast %312 : vector<17xf32> to vector<17x1xf32>
    %314 = vector.broadcast %313 : vector<17x1xf32> to vector<17x17xf32>
    %315 = arith.divf %311, %314 : vector<17x17xf32>
    %316 = vector.extract_strided_slice %241 {offsets = [17, 0], sizes = [17, 32], strides = [1, 1]} : vector<34x128xf32> to vector<17x32xf32>
    %cst_105 = arith.constant dense<0.000000e+00> : vector<17x32xf32>
    %317 = tpu.matmul %315, %316, %cst_105 {dimension_numbers = #tpu.dot_dimension_numbers<[1], [0], [0], [1], [0, 0, 1, 1], [], []>} : vector<17x17xf32>, vector<17x32xf32>, vector<17x32xf32> -> vector<17x32xf32>
    %318 = arith.addf %303, %317 : vector<17x32xf32>
    %319 = vector.extract_strided_slice %236 {offsets = [17, 8], sizes = [17, 8], strides = [1, 1]} : vector<34x64xf32> to vector<17x8xf32>
    %320 = vector.extract_strided_slice %236 {offsets = [17, 40], sizes = [17, 8], strides = [1, 1]} : vector<34x64xf32> to vector<17x8xf32>
    %cst_106 = arith.constant dense<0.000000e+00> : vector<17x17xf32>
    %321 = tpu.matmul %319, %320, %cst_106 {dimension_numbers = #tpu.dot_dimension_numbers<[1], [1], [0], [0], [0, 0, 1, 0], [], []>} : vector<17x8xf32>, vector<17x8xf32>, vector<17x17xf32> -> vector<17x17xf32>
    %cst_107 = arith.constant dense<0xFF800000> : vector<17xf32>
    %322 = vector.multi_reduction <maximumf>, %321, %cst_107 [1] : vector<17x17xf32> to vector<17xf32>
    %323 = vector.shape_cast %322 : vector<17xf32> to vector<17x1xf32>
    %324 = vector.broadcast %323 : vector<17x1xf32> to vector<17x17xf32>
    %325 = arith.subf %321, %324 : vector<17x17xf32>
    %326 = math.exp %325 : vector<17x17xf32>
    %cst_108 = arith.constant dense<0.000000e+00> : vector<17xf32>
    %327 = vector.multi_reduction <add>, %326, %cst_108 [1] : vector<17x17xf32> to vector<17xf32>
    %328 = vector.shape_cast %327 : vector<17xf32> to vector<17x1xf32>
    %329 = vector.broadcast %328 : vector<17x1xf32> to vector<17x17xf32>
    %330 = arith.divf %326, %329 : vector<17x17xf32>
    %331 = vector.extract_strided_slice %241 {offsets = [17, 32], sizes = [17, 32], strides = [1, 1]} : vector<34x128xf32> to vector<17x32xf32>
    %cst_109 = arith.constant dense<0.000000e+00> : vector<17x32xf32>
    %332 = tpu.matmul %330, %331, %cst_109 {dimension_numbers = #tpu.dot_dimension_numbers<[1], [0], [0], [1], [0, 0, 1, 1], [], []>} : vector<17x17xf32>, vector<17x32xf32>, vector<17x32xf32> -> vector<17x32xf32>
    %333 = arith.addf %318, %332 : vector<17x32xf32>
    %334 = vector.extract_strided_slice %236 {offsets = [17, 16], sizes = [17, 8], strides = [1, 1]} : vector<34x64xf32> to vector<17x8xf32>
    %335 = vector.extract_strided_slice %236 {offsets = [17, 48], sizes = [17, 8], strides = [1, 1]} : vector<34x64xf32> to vector<17x8xf32>
    %cst_110 = arith.constant dense<0.000000e+00> : vector<17x17xf32>
    %336 = tpu.matmul %334, %335, %cst_110 {dimension_numbers = #tpu.dot_dimension_numbers<[1], [1], [0], [0], [0, 0, 1, 0], [], []>} : vector<17x8xf32>, vector<17x8xf32>, vector<17x17xf32> -> vector<17x17xf32>
    %cst_111 = arith.constant dense<0xFF800000> : vector<17xf32>
    %337 = vector.multi_reduction <maximumf>, %336, %cst_111 [1] : vector<17x17xf32> to vector<17xf32>
    %338 = vector.shape_cast %337 : vector<17xf32> to vector<17x1xf32>
    %339 = vector.broadcast %338 : vector<17x1xf32> to vector<17x17xf32>
    %340 = arith.subf %336, %339 : vector<17x17xf32>
    %341 = math.exp %340 : vector<17x17xf32>
    %cst_112 = arith.constant dense<0.000000e+00> : vector<17xf32>
    %342 = vector.multi_reduction <add>, %341, %cst_112 [1] : vector<17x17xf32> to vector<17xf32>
    %343 = vector.shape_cast %342 : vector<17xf32> to vector<17x1xf32>
    %344 = vector.broadcast %343 : vector<17x1xf32> to vector<17x17xf32>
    %345 = arith.divf %341, %344 : vector<17x17xf32>
    %346 = vector.extract_strided_slice %241 {offsets = [17, 64], sizes = [17, 32], strides = [1, 1]} : vector<34x128xf32> to vector<17x32xf32>
    %cst_113 = arith.constant dense<0.000000e+00> : vector<17x32xf32>
    %347 = tpu.matmul %345, %346, %cst_113 {dimension_numbers = #tpu.dot_dimension_numbers<[1], [0], [0], [1], [0, 0, 1, 1], [], []>} : vector<17x17xf32>, vector<17x32xf32>, vector<17x32xf32> -> vector<17x32xf32>
    %348 = arith.addf %333, %347 : vector<17x32xf32>
    %349 = vector.extract_strided_slice %236 {offsets = [17, 24], sizes = [17, 8], strides = [1, 1]} : vector<34x64xf32> to vector<17x8xf32>
    %350 = vector.extract_strided_slice %236 {offsets = [17, 56], sizes = [17, 8], strides = [1, 1]} : vector<34x64xf32> to vector<17x8xf32>
    %cst_114 = arith.constant dense<0.000000e+00> : vector<17x17xf32>
    %351 = tpu.matmul %349, %350, %cst_114 {dimension_numbers = #tpu.dot_dimension_numbers<[1], [1], [0], [0], [0, 0, 1, 0], [], []>} : vector<17x8xf32>, vector<17x8xf32>, vector<17x17xf32> -> vector<17x17xf32>
    %cst_115 = arith.constant dense<0xFF800000> : vector<17xf32>
    %352 = vector.multi_reduction <maximumf>, %351, %cst_115 [1] : vector<17x17xf32> to vector<17xf32>
    %353 = vector.shape_cast %352 : vector<17xf32> to vector<17x1xf32>
    %354 = vector.broadcast %353 : vector<17x1xf32> to vector<17x17xf32>
    %355 = arith.subf %351, %354 : vector<17x17xf32>
    %356 = math.exp %355 : vector<17x17xf32>
    %cst_116 = arith.constant dense<0.000000e+00> : vector<17xf32>
    %357 = vector.multi_reduction <add>, %356, %cst_116 [1] : vector<17x17xf32> to vector<17xf32>
    %358 = vector.shape_cast %357 : vector<17xf32> to vector<17x1xf32>
    %359 = vector.broadcast %358 : vector<17x1xf32> to vector<17x17xf32>
    %360 = arith.divf %356, %359 : vector<17x17xf32>
    %361 = vector.extract_strided_slice %241 {offsets = [17, 96], sizes = [17, 32], strides = [1, 1]} : vector<34x128xf32> to vector<17x32xf32>
    %cst_117 = arith.constant dense<0.000000e+00> : vector<17x32xf32>
    %362 = tpu.matmul %360, %361, %cst_117 {dimension_numbers = #tpu.dot_dimension_numbers<[1], [0], [0], [1], [0, 0, 1, 1], [], []>} : vector<17x17xf32>, vector<17x32xf32>, vector<17x32xf32> -> vector<17x32xf32>
    %363 = arith.addf %348, %362 : vector<17x32xf32>
    %364 = tpu.concatenate %302, %363 in 0 : vector<17x32xf32>, vector<17x32xf32> -> vector<34x32xf32>
    %365 = arith.addf %209, %364 : vector<34x32xf32>
    %c15 = arith.constant 15 : index
    %c0_118 = arith.constant 0 : index
    %366 = vector.load %arg3[%c15, %c0_118] : memref<24x128xf32, #tpu.memory_space<vmem>>, vector<1x32xf32>
    %367 = vector.broadcast %366 : vector<1x32xf32> to vector<34x32xf32>
    %368 = arith.addf %365, %367 : vector<34x32xf32>
    %c16 = arith.constant 16 : index
    %c0_119 = arith.constant 0 : index
    %369 = vector.load %arg3[%c16, %c0_119] : memref<24x128xf32, #tpu.memory_space<vmem>>, vector<1x32xf32>
    %c17 = arith.constant 17 : index
    %c0_120 = arith.constant 0 : index
    %370 = vector.load %arg3[%c17, %c0_120] : memref<24x128xf32, #tpu.memory_space<vmem>>, vector<1x32xf32>
    %cst_121 = arith.constant dense<0.000000e+00> : vector<34xf32>
    %371 = vector.multi_reduction <add>, %368, %cst_121 [1] : vector<34x32xf32> to vector<34xf32>
    %372 = vector.shape_cast %371 : vector<34xf32> to vector<34x1xf32>
    %cst_122 = arith.constant 3.200000e+01 : f32
    %373 = vector.broadcast %cst_122 : f32 to vector<34x1xf32>
    %374 = arith.divf %372, %373 : vector<34x1xf32>
    %375 = vector.broadcast %374 : vector<34x1xf32> to vector<34x32xf32>
    %376 = arith.subf %368, %375 : vector<34x32xf32>
    %377 = arith.mulf %376, %376 : vector<34x32xf32>
    %cst_123 = arith.constant dense<0.000000e+00> : vector<34xf32>
    %378 = vector.multi_reduction <add>, %377, %cst_123 [1] : vector<34x32xf32> to vector<34xf32>
    %379 = vector.shape_cast %378 : vector<34xf32> to vector<34x1xf32>
    %cst_124 = arith.constant 3.200000e+01 : f32
    %380 = vector.broadcast %cst_124 : f32 to vector<34x1xf32>
    %381 = arith.divf %379, %380 : vector<34x1xf32>
    %cst_125 = arith.constant 9.99999997E-7 : f32
    %382 = vector.broadcast %cst_125 : f32 to vector<34x1xf32>
    %383 = arith.addf %381, %382 : vector<34x1xf32>
    %384 = math.rsqrt %383 : vector<34x1xf32>
    %385 = vector.broadcast %384 : vector<34x1xf32> to vector<34x32xf32>
    %386 = arith.mulf %376, %385 : vector<34x32xf32>
    %387 = vector.broadcast %369 : vector<1x32xf32> to vector<34x32xf32>
    %388 = arith.mulf %386, %387 : vector<34x32xf32>
    %389 = vector.broadcast %370 : vector<1x32xf32> to vector<34x32xf32>
    %390 = arith.addf %388, %389 : vector<34x32xf32>
    %c296 = arith.constant 296 : index
    %c0_126 = arith.constant 0 : index
    %391 = vector.load %arg2[%c296, %c0_126] : memref<440x128xf32, #tpu.memory_space<vmem>>, vector<32x64xf32>
    %cst_127 = arith.constant dense<0.000000e+00> : vector<34x64xf32>
    %392 = tpu.matmul %390, %391, %cst_127 {dimension_numbers = #tpu.dot_dimension_numbers<[1], [0], [0], [1], [0, 0, 1, 1], [], []>} : vector<34x32xf32>, vector<32x64xf32>, vector<34x64xf32> -> vector<34x64xf32>
    %c18 = arith.constant 18 : index
    %c0_128 = arith.constant 0 : index
    %393 = vector.load %arg3[%c18, %c0_128] : memref<24x128xf32, #tpu.memory_space<vmem>>, vector<1x64xf32>
    %394 = vector.broadcast %393 : vector<1x64xf32> to vector<34x64xf32>
    %395 = arith.addf %392, %394 : vector<34x64xf32>
    %cst_129 = arith.constant 5.000000e-01 : f32
    %396 = vector.broadcast %cst_129 : f32 to vector<34x64xf32>
    %397 = arith.mulf %396, %395 : vector<34x64xf32>
    %cst_130 = arith.constant 0.707106769 : f32
    %398 = vector.broadcast %cst_130 : f32 to vector<34x64xf32>
    %399 = arith.mulf %395, %398 : vector<34x64xf32>
    %400 = math.erf %399 : vector<34x64xf32>
    %cst_131 = arith.constant 1.000000e+00 : f32
    %401 = vector.broadcast %cst_131 : f32 to vector<34x64xf32>
    %402 = arith.addf %401, %400 : vector<34x64xf32>
    %403 = arith.mulf %397, %402 : vector<34x64xf32>
    %c328 = arith.constant 328 : index
    %c0_132 = arith.constant 0 : index
    %404 = vector.load %arg2[%c328, %c0_132] : memref<440x128xf32, #tpu.memory_space<vmem>>, vector<64x32xf32>
    %cst_133 = arith.constant dense<0.000000e+00> : vector<34x32xf32>
    %405 = tpu.matmul %403, %404, %cst_133 {dimension_numbers = #tpu.dot_dimension_numbers<[1], [0], [0], [1], [0, 0, 1, 1], [], []>} : vector<34x64xf32>, vector<64x32xf32>, vector<34x32xf32> -> vector<34x32xf32>
    %c19 = arith.constant 19 : index
    %c0_134 = arith.constant 0 : index
    %406 = vector.load %arg3[%c19, %c0_134] : memref<24x128xf32, #tpu.memory_space<vmem>>, vector<1x32xf32>
    %407 = vector.broadcast %406 : vector<1x32xf32> to vector<34x32xf32>
    %408 = arith.addf %405, %407 : vector<34x32xf32>
    %409 = arith.addf %368, %408 : vector<34x32xf32>
    %c0_135 = arith.constant 0 : index
    %c0_136 = arith.constant 0 : index
    %410 = vector.load %arg3[%c0_135, %c0_136] : memref<24x128xf32, #tpu.memory_space<vmem>>, vector<1x32xf32>
    %c1_137 = arith.constant 1 : index
    %c0_138 = arith.constant 0 : index
    %411 = vector.load %arg3[%c1_137, %c0_138] : memref<24x128xf32, #tpu.memory_space<vmem>>, vector<1x32xf32>
    %cst_139 = arith.constant dense<0.000000e+00> : vector<34xf32>
    %412 = vector.multi_reduction <add>, %409, %cst_139 [1] : vector<34x32xf32> to vector<34xf32>
    %413 = vector.shape_cast %412 : vector<34xf32> to vector<34x1xf32>
    %cst_140 = arith.constant 3.200000e+01 : f32
    %414 = vector.broadcast %cst_140 : f32 to vector<34x1xf32>
    %415 = arith.divf %413, %414 : vector<34x1xf32>
    %416 = vector.broadcast %415 : vector<34x1xf32> to vector<34x32xf32>
    %417 = arith.subf %409, %416 : vector<34x32xf32>
    %418 = arith.mulf %417, %417 : vector<34x32xf32>
    %cst_141 = arith.constant dense<0.000000e+00> : vector<34xf32>
    %419 = vector.multi_reduction <add>, %418, %cst_141 [1] : vector<34x32xf32> to vector<34xf32>
    %420 = vector.shape_cast %419 : vector<34xf32> to vector<34x1xf32>
    %cst_142 = arith.constant 3.200000e+01 : f32
    %421 = vector.broadcast %cst_142 : f32 to vector<34x1xf32>
    %422 = arith.divf %420, %421 : vector<34x1xf32>
    %cst_143 = arith.constant 9.99999997E-7 : f32
    %423 = vector.broadcast %cst_143 : f32 to vector<34x1xf32>
    %424 = arith.addf %422, %423 : vector<34x1xf32>
    %425 = math.rsqrt %424 : vector<34x1xf32>
    %426 = vector.broadcast %425 : vector<34x1xf32> to vector<34x32xf32>
    %427 = arith.mulf %417, %426 : vector<34x32xf32>
    %428 = vector.broadcast %410 : vector<1x32xf32> to vector<34x32xf32>
    %429 = arith.mulf %427, %428 : vector<34x32xf32>
    %430 = vector.broadcast %411 : vector<1x32xf32> to vector<34x32xf32>
    %431 = arith.addf %429, %430 : vector<34x32xf32>
    %432 = vector.extract_strided_slice %431 {offsets = [0, 0], sizes = [1, 32], strides = [1, 1]} : vector<34x32xf32> to vector<1x32xf32>
    %433 = vector.extract_strided_slice %431 {offsets = [17, 0], sizes = [1, 32], strides = [1, 1]} : vector<34x32xf32> to vector<1x32xf32>
    %434 = tpu.concatenate %432, %433 in 0 : vector<1x32xf32>, vector<1x32xf32> -> vector<2x32xf32>
    %c392 = arith.constant 392 : index
    %c0_144 = arith.constant 0 : index
    %435 = vector.load %arg2[%c392, %c0_144] : memref<440x128xf32, #tpu.memory_space<vmem>>, vector<32x16xf32>
    %cst_145 = arith.constant dense<0.000000e+00> : vector<2x16xf32>
    %436 = tpu.matmul %434, %435, %cst_145 {dimension_numbers = #tpu.dot_dimension_numbers<[1], [0], [0], [1], [0, 0, 1, 1], [], []>} : vector<2x32xf32>, vector<32x16xf32>, vector<2x16xf32> -> vector<2x16xf32>
    %cst_146 = arith.constant 0.000000e+00 : f32
    %437 = vector.broadcast %cst_146 : f32 to vector<2x16xf32>
    %438 = arith.maximumf %436, %437 : vector<2x16xf32>
    %c20 = arith.constant 20 : index
    %c0_147 = arith.constant 0 : index
    %439 = vector.load %arg3[%c20, %c0_147] : memref<24x128xf32, #tpu.memory_space<vmem>>, vector<1x16xf32>
    %440 = vector.broadcast %439 : vector<1x16xf32> to vector<2x16xf32>
    %441 = arith.mulf %438, %440 : vector<2x16xf32>
    %c21 = arith.constant 21 : index
    %c0_148 = arith.constant 0 : index
    %442 = vector.load %arg3[%c21, %c0_148] : memref<24x128xf32, #tpu.memory_space<vmem>>, vector<1x16xf32>
    %443 = vector.broadcast %442 : vector<1x16xf32> to vector<2x16xf32>
    %444 = arith.addf %441, %443 : vector<2x16xf32>
    %c424 = arith.constant 424 : index
    %c0_149 = arith.constant 0 : index
    %445 = vector.load %arg2[%c424, %c0_149] : memref<440x128xf32, #tpu.memory_space<vmem>>, vector<16x128xf32>
    %cst_150 = arith.constant dense<0.000000e+00> : vector<2x128xf32>
    %446 = tpu.matmul %444, %445, %cst_150 {dimension_numbers = #tpu.dot_dimension_numbers<[1], [0], [0], [1], [0, 0, 1, 1], [], []>} : vector<2x16xf32>, vector<16x128xf32>, vector<2x128xf32> -> vector<2x128xf32>
    %c22 = arith.constant 22 : index
    %c0_151 = arith.constant 0 : index
    %447 = vector.load %arg3[%c22, %c0_151] : memref<24x128xf32, #tpu.memory_space<vmem>>, vector<1x128xf32>
    %448 = vector.broadcast %447 : vector<1x128xf32> to vector<2x128xf32>
    %449 = arith.mulf %446, %448 : vector<2x128xf32>
    %c23 = arith.constant 23 : index
    %c0_152 = arith.constant 0 : index
    %450 = vector.load %arg3[%c23, %c0_152] : memref<24x128xf32, #tpu.memory_space<vmem>>, vector<1x128xf32>
    %451 = vector.broadcast %450 : vector<1x128xf32> to vector<2x128xf32>
    %452 = arith.addf %449, %451 : vector<2x128xf32>
    %c0_153 = arith.constant 0 : index
    %c0_154 = arith.constant 0 : index
    %c0_155 = arith.constant 0 : index
    %453 = vector.load %arg4[%c0_153, %c0_154, %c0_155] : memref<2x1x128xf32, #tpu.memory_space<vmem>>, vector<2x1x128xf32>
    %454 = vector.shape_cast %453 : vector<2x1x128xf32> to vector<2x128xf32>
    %455 = vector.shape_cast %452 : vector<2x128xf32> to vector<2x1x128xf32>
    tpu.vector_store %arg4[%c0_153, %c0_154, %c0_155], %455 {strides = array<i32>} : memref<2x1x128xf32, #tpu.memory_space<vmem>>, vector<2x1x128xf32>,
    return
  }
  func.func @transform_0(%arg0: i32) -> (i32, i32, i32) {
    %c0_i32 = arith.constant 0 : i32
    %c0_i32_0 = arith.constant 0 : i32
    %c0_i32_1 = arith.constant 0 : i32
    return %arg0, %c0_i32, %c0_i32_0 : i32, i32, i32
  }
  func.func @transform_1(%arg0: i32) -> (i32, i32) {
    %c0_i32 = arith.constant 0 : i32
    %c0_i32_0 = arith.constant 0 : i32
    %c0_i32_1 = arith.constant 0 : i32
    return %c0_i32, %c0_i32_0 : i32, i32
  }
  func.func @transform_2(%arg0: i32) -> (i32, i32) {
    %c0_i32 = arith.constant 0 : i32
    %c0_i32_0 = arith.constant 0 : i32
    %c0_i32_1 = arith.constant 0 : i32
    return %c0_i32, %c0_i32_0 : i32, i32
  }
  func.func @transform_3(%arg0: i32) -> (i32, i32, i32) {
    %c0_i32 = arith.constant 0 : i32
    %c0_i32_0 = arith.constant 0 : i32
    %c0_i32_1 = arith.constant 0 : i32
    return %arg0, %c0_i32, %c0_i32_0 : i32, i32, i32
  }
}

</mosaic_0001>

<llo_original>
// kernel: vit_forward.1
$region0: #{vit_forward.1}
  #allocation0 [shape = 'u32[]', space=smem, size = 0x4, offset = 0x4, fixed_abs, tag = 'smem constant byte address 0x4 - core index']
  #allocation1 [shape = 'u32[144,128]{1,0:T(1,128)}', space=vmem, size = 0x12000, scoped, tag = 'internal scratch']
  %s0 = inlined_call_operand.vmem [shape: f32[2,17,48], index: 0, kind: input, shape index: {}]
  %s1 = inlined_call_operand.vmem [shape: f32[440,128], index: 1, kind: input, shape index: {}]
  %s2 = inlined_call_operand.vmem [shape: f32[24,128], index: 2, kind: input, shape index: {}]
  %s3 = inlined_call_operand.hbm [shape: f32[2,1,128], index: 3, kind: output, shape index: {}]
  %s4 = sld [smem:[#allocation0]]
  $region22: #{vit_forward.1} parent=0
    _
  %s6 = ssub.s32 1, %s4
  %s7 = scalar_select 0, %s6, %s4
  $region1: #{vit_forward.1} parent=0
    #allocation2 [shape = 'u8[1024]{0}', space=vmem, size = 0x400, scoped, tag = 'output window, operand 0, single buffered']
    #allocation3 [shape = 's32[1]{0}', space=sflag, size = 0x4, scoped, tag = 'scoped memory for vit_forward.1']
    %8 = vsyncpa [#allocation3], 0
    // Predicated region
    $region2: #{vit_forward.1} parent=1 // pred_check
      _
    $region3: #{vit_forward.1} parent=1 // pred_check_branch
      %10 = sbr.rel (0) target = $region5
    $region4: #{vit_forward.1} parent=1 // pred_region
      _
    $region5: #{vit_forward.1} parent=1 // pred_fallthru
      _
    // Predicated region
    $region6: #{vit_forward.1} parent=1 // pred_check
      _
    $region7: #{vit_forward.1} parent=1 // pred_check_branch
      %12 = sbr.rel (0) target = $region9
    $region8: #{vit_forward.1} parent=1 // pred_region
      _
    $region9: #{vit_forward.1} parent=1 // pred_fallthru
      _
    // Predicated region
    $region10: #{vit_forward.1} parent=1 // pred_check
      _
    $region11: #{vit_forward.1} parent=1 // pred_check_branch
      %14 = sbr.rel (0) target = $region13
    $region12: #{vit_forward.1} parent=1 // pred_region
      _
    $region13: #{vit_forward.1} parent=1 // pred_fallthru
      _
    %v15 = vld [vmem:[%s0] sm:$0xff]
    %v16 = vld [vmem:[%s0 + $0x8] sm:$0xff]
    %v17 = vld [vmem:[%s0 + $0x10] sm:$0x1]
    %s18 = scalar_lea.vmem %s0, 24
    %v19 = vld [vmem:[%s18] sm:$0xff]
    %v20 = vld [vmem:[%s18 + $0x8] sm:$0xff]
    %v21 = vld [vmem:[%s18 + $0x10] sm:$0x1]
    %vm25 = vcmask 1040384
    %v26 = vrot.slane %v19, 7
    %v27 = vrot.slane %v20, 7
    %v28 = vsel %vm25, %v26, %v27
    %v29 = vrot.slane %v21, 7
    %v30 = vsel %vm25, %v27, %v29
    %v32 = vsel %vm25, %v17, %v26
    %v33 = vld [vmem:[%s1] sm:$0xff]
    %v34 = vld [vmem:[%s1 + $0x8] sm:$0xff]
    %v35 = vld [vmem:[%s1 + $0x10] sm:$0xff]
    %v36 = vld [vmem:[%s1 + $0x18] sm:$0xff]
    %v37 = vld [vmem:[%s1 + $0x20] sm:$0xff]
    %v38 = vld [vmem:[%s1 + $0x28] sm:$0xff]
    %v39 = vld [vmem:[%s1 + $0x30] sm:$0xff]
    %v40 = vld [vmem:[%s1 + $0x38] sm:$0xff]
    %v41 = vld [vmem:[%s1 + $0x40] sm:$0x1]
    %v45 = vrot.slane %v39, 7
    %v46 = vrot.slane %v40, 7
    %v47 = vsel %vm25, %v45, %v46
    %v48 = vrot.slane %v41, 7
    %v49 = vsel %vm25, %v46, %v48
    %v53 = vsel %vm25, %v41, %v45
    %vm54 = vcmask 392192
    %v56 = vsel %vm54, %v15, 0
    %v59 = vsel %vm54, %v16, 0
    %v62 = vsel %vm54, %v32, 0
    %v64 = vsel %vm54, %v28, 0
    %v66 = vsel %vm54, %v30, 0
    %68 = vmatprep.subr.mxu0 0.0
    %69 = vmatpush1.msra.mxu0 %v33
    %70 = vmatprep.subr.mxu0 0.0
    %71 = vmatpush1.msra.mxu0 %v34
    %72 = vmatprep.subr.mxu0 0.0
    %73 = vmatpush1.msra.mxu0 %v35
    %74 = vmatprep.subr.mxu0 0.0
    %75 = vmatpush1.msra.mxu0 %v36
    %76 = vmatprep.subr.mxu0 0.0
    %77 = vmatpush1.msra.mxu0 %v37
    %78 = vmatprep.subr.mxu0 0.0
    %79 = vmatpush1.msra.mxu0 %v38
    %80 = vmatprep.subr.mxu0 0.0
    %81 = vmatpush1.msra.mxu0 0.0
    %82 = vmatprep.subr.mxu0 0.0
    %83 = vmatpush1.msra.mxu0 0.0
    %84 = vmatprep.subr.mxu0 0.0
    %85 = vmatpush1.msra.mxu0 0.0
    %86 = vmatprep.subr.mxu0 0.0
    %87 = vmatpush1.msra.mxu0 0.0
    %88 = vmatprep.subr.mxu0 0.0
    %89 = vmatpush1.msra.mxu0 0.0
    %90 = vmatprep.subr.mxu0 0.0
    %91 = vmatpush1.msra.mxu0 0.0
    %92 = vmatprep.subr.mxu0 0.0
    %93 = vmatpush1.msra.mxu0 0.0
    %94 = vmatprep.subr.mxu0 0.0
    %95 = vmatpush1.msra.mxu0 0.0
    %96 = vmatprep.subr.mxu0 0.0
    %97 = vmatpush1.msra.mxu0 0.0
    %98 = vmatprep.subr.mxu0 0.0
    %99 = vmatpush1.msra.mxu0 0.0
    %100 = vmatprep.subr.mxu0 0.0
    %101 = vmatpush1.msra.mxu0 0.0
    %102 = vmatprep.subr.mxu0 0.0
    %103 = vmatpush1.msra.mxu0 0.0
    %104 = vmatprep.subr.mxu0 0.0
    %105 = vmatpush1.msra.mxu0 0.0
    %106 = vmatprep.subr.mxu0 0.0
    %107 = vmatpush1.msra.mxu0 0.0
    %108 = vmatprep.subr.mxu0 0.0
    %109 = vmatpush1.msra.mxu0 0.0
    %110 = vmatprep.subr.mxu0 0.0
    %111 = vmatpush1.msra.mxu0 0.0
    %112 = vmatprep.subr.mxu0 0.0
    %113 = vmatpush1.msra.mxu0 0.0
    %114 = vmatprep.subr.mxu0 0.0
    %115 = vmatpush1.msra.mxu0 0.0
    %116 = vmatprep.subr.mxu0 0.0
    %117 = vmatpush1.msra.mxu0 0.0
    %118 = vmatprep.subr.mxu0 0.0
    %119 = vmatpush1.msra.mxu0 0.0
    %120 = vmatprep.subr.mxu0 0.0
    %121 = vmatpush1.msra.mxu0 0.0
    %122 = vmatprep.subr.mxu0 0.0
    %123 = vmatpush1.msra.mxu0 0.0
    %124 = vmatprep.subr.mxu0 0.0
    %125 = vmatpush1.msra.mxu0 0.0
    %126 = vmatprep.subr.mxu0 0.0
    %127 = vmatpush1.msra.mxu0 0.0
    %128 = vmatprep.subr.mxu0 0.0
    %129 = vmatpush1.msra.mxu0 0.0
    %130 = vmatprep.subr.mxu0 0.0
    %131 = vmatpush1.msra.mxu0 0.0
    %132 = vmatprep.mubr.f32.mxu0 0.0
    %133 = vmatmul.mubr.f32.gmra.mrb[0].mxu0 %v56
    %v134 = vpop.f32.mrb[0].mxu0
    %v135 = vadd.f32 %v39, %v134
    %v136 = vpop.f32.mrb[0].mxu0
    %137 = vmatprep.mubr.f32.mxu0 0.0
    %138 = vmatmul.mubr.f32.gmra.mrb[0].mxu0 %v59
    %v139 = vpop.f32.mrb[0].mxu0
    %v140 = vadd.f32 %v40, %v139
    %v141 = vpop.f32.mrb[0].mxu0
    %142 = vmatprep.mubr.f32.mxu0 0.0
    %143 = vmatmul.mubr.f32.gmra.mrb[0].mxu0 %v62
    %v144 = vpop.f32.mrb[0].mxu0
    %v145 = vadd.f32 %v53, %v144
    %v146 = vpop.f32.mrb[0].mxu0
    %147 = vmatprep.mubr.f32.mxu0 0.0
    %148 = vmatmul.mubr.f32.gmra.mrb[0].mxu0 %v64
    %v149 = vpop.f32.mrb[0].mxu0
    %v150 = vadd.f32 %v47, %v149
    %v151 = vpop.f32.mrb[0].mxu0
    %152 = vmatprep.mubr.f32.mxu0 0.0
    %153 = vmatmul.mubr.f32.gmra.mrb[0].mxu0 %v66
    %v154 = vpop.f32.mrb[0].mxu0
    %v155 = vadd.f32 %v49, %v154
    %v156 = vpop.f32.mrb[0].mxu0
    %157 = vdwg.mxu0
    %v158 = vld [vmem:[%s2 + $0x2] sm:$0x1]
    %v159 = vld [vmem:[%s2 + $0x3] sm:$0x1]
    %vm160 = vcmask 261120
    %v161 = vsel %vm160, %v135, 0.0
    %162 = vadd.xlane.f32.xlu0 %v161
    %v163 = vpop.xlane.xlu0 %162
    %v164 = vsel %vm160, %v140, 0.0
    %165 = vadd.xlane.f32.xlu0 %v164
    %v166 = vpop.xlane.xlu0 %165
    %v167 = vsel %vm160, %v145, 0.0
    %168 = vadd.xlane.f32.xlu0 %v167
    %v169 = vpop.xlane.xlu0 %168
    %v170 = vsel %vm160, %v150, 0.0
    %171 = vadd.xlane.f32.xlu0 %v170
    %v172 = vpop.xlane.xlu0 %171
    %vm173 = vcmask 254976
    %v174 = vsel %vm173, %v155, 0.0
    %175 = vadd.xlane.f32.xlu0 %v174
    %v176 = vpop.xlane.xlu0 %175
    %v177 = vrcp.pop 32.0
    %v178 = vmul.f32 %v163, %v177
    %v179 = vmul.f32 %v166, %v177
    %v180 = vmul.f32 %v169, %v177
    %v181 = vmul.f32 %v172, %v177
    %v182 = vmul.f32 %v176, %v177
    %v183 = vsub.f32 %v135, %v178
    %v184 = vsub.f32 %v140, %v179
    %v185 = vsub.f32 %v145, %v180
    %v186 = vsub.f32 %v150, %v181
    %v187 = vsub.f32 %v155, %v182
    %v188 = vmul.f32 %v183, %v183
    %v189 = vmul.f32 %v184, %v184
    %v190 = vmul.f32 %v185, %v185
    %v191 = vmul.f32 %v186, %v186
    %v192 = vmul.f32 %v187, %v187
    %v193 = vsel %vm160, %v188, 0.0
    %194 = vadd.xlane.f32.xlu0 %v193
    %v195 = vpop.xlane.xlu0 %194
    %v196 = vsel %vm160, %v189, 0.0
    %197 = vadd.xlane.f32.xlu0 %v196
    %v198 = vpop.xlane.xlu0 %197
    %v199 = vsel %vm160, %v190, 0.0
    %200 = vadd.xlane.f32.xlu0 %v199
    %v201 = vpop.xlane.xlu0 %200
    %v202 = vsel %vm160, %v191, 0.0
    %203 = vadd.xlane.f32.xlu0 %v202
    %v204 = vpop.xlane.xlu0 %203
    %v205 = vsel %vm173, %v192, 0.0
    %206 = vadd.xlane.f32.xlu0 %v205
    %v207 = vpop.xlane.xlu0 %206
    %v208 = vmul.f32 %v195, %v177
    %v209 = vmul.f32 %v198, %v177
    %v210 = vmul.f32 %v201, %v177
    %v211 = vmul.f32 %v204, %v177
    %v212 = vmul.f32 %v207, %v177
    %v213 = vadd.f32 %v208, 1e-06
    %v214 = vadd.f32 %v209, 1e-06
    %v215 = vadd.f32 %v210, 1e-06
    %v216 = vadd.f32 %v211, 1e-06
    %v217 = vadd.f32 %v212, 1e-06
    %v218 = vrsqrt.pop %v213
    %v219 = vrsqrt.pop %v214
    %v220 = vrsqrt.pop %v215
    %v221 = vrsqrt.pop %v216
    %v222 = vrsqrt.pop %v217
    %v223 = vmul.f32 %v183, %v218
    %v224 = vmul.f32 %v184, %v219
    %v225 = vmul.f32 %v185, %v220
    %v226 = vmul.f32 %v186, %v221
    %v227 = vmul.f32 %v187, %v222
    %v228 = vlaneseq
    %v229 = vshrl.u32 %v228, 7
    %v230 = vsub.s32 0, %v229
    %v231 = vrot.slane %v158, %v230
    %v232 = vmul.f32 %v223, %v231
    %v233 = vmul.f32 %v224, %v231
    %v234 = vmul.f32 %v225, %v231
    %v235 = vmul.f32 %v226, %v231
    %v236 = vmul.f32 %v227, %v231
    %v237 = vlaneseq
    %v238 = vshrl.u32 %v237, 7
    %v239 = vsub.s32 0, %v238
    %v240 = vrot.slane %v159, %v239
    %v241 = vadd.f32 %v232, %v240
    %v242 = vadd.f32 %v233, %v240
    %v243 = vadd.f32 %v234, %v240
    %v244 = vadd.f32 %v235, %v240
    %v245 = vadd.f32 %v236, %v240
    %v246 = vld [vmem:[%s1 + $0x48] sm:$0xff]
    %v247 = vld [vmem:[%s1 + $0x50] sm:$0xff]
    %v248 = vld [vmem:[%s1 + $0x58] sm:$0xff]
    %v249 = vld [vmem:[%s1 + $0x60] sm:$0xff]
    %v250 = vld [vmem:[%s2 + $0x4] sm:$0x1]
    %v251 = vlaneseq
    %v252 = vshrl.u32 %v251, 7
    %v253 = vsub.s32 0, %v252
    %v254 = vrot.slane %v250, %v253
    %v256 = vsel %vm160, %v241, 0
    %v259 = vsel %vm160, %v242, 0
    %v262 = vsel %vm160, %v243, 0
    %v265 = vsel %vm160, %v244, 0
    %v268 = vsel %vm160, %v245, 0
    %270 = vmatprep.subr.mxu0 0.0
    %271 = vmatpush1.msra.mxu0 %v246
    %272 = vmatprep.subr.mxu0 0.0
    %273 = vmatpush1.msra.mxu0 %v247
    %274 = vmatprep.subr.mxu0 0.0
    %275 = vmatpush1.msra.mxu0 %v248
    %276 = vmatprep.subr.mxu0 0.0
    %277 = vmatpush1.msra.mxu0 %v249
    %278 = vmatprep.subr.mxu0 0.0
    %279 = vmatpush1.msra.mxu0 0.0
    %280 = vmatprep.subr.mxu0 0.0
    %281 = vmatpush1.msra.mxu0 0.0
    %282 = vmatprep.subr.mxu0 0.0
    %283 = vmatpush1.msra.mxu0 0.0
    %284 = vmatprep.subr.mxu0 0.0
    %285 = vmatpush1.msra.mxu0 0.0
    %286 = vmatprep.subr.mxu0 0.0
    %287 = vmatpush1.msra.mxu0 0.0
    %288 = vmatprep.subr.mxu0 0.0
    %289 = vmatpush1.msra.mxu0 0.0
    %290 = vmatprep.subr.mxu0 0.0
    %291 = vmatpush1.msra.mxu0 0.0
    %292 = vmatprep.subr.mxu0 0.0
    %293 = vmatpush1.msra.mxu0 0.0
    %294 = vmatprep.subr.mxu0 0.0
    %295 = vmatpush1.msra.mxu0 0.0
    %296 = vmatprep.subr.mxu0 0.0
    %297 = vmatpush1.msra.mxu0 0.0
    %298 = vmatprep.subr.mxu0 0.0
    %299 = vmatpush1.msra.mxu0 0.0
    %300 = vmatprep.subr.mxu0 0.0
    %301 = vmatpush1.msra.mxu0 0.0
    %302 = vmatprep.subr.mxu0 0.0
    %303 = vmatpush1.msra.mxu0 0.0
    %304 = vmatprep.subr.mxu0 0.0
    %305 = vmatpush1.msra.mxu0 0.0
    %306 = vmatprep.subr.mxu0 0.0
    %307 = vmatpush1.msra.mxu0 0.0
    %308 = vmatprep.subr.mxu0 0.0
    %309 = vmatpush1.msra.mxu0 0.0
    %310 = vmatprep.subr.mxu0 0.0
    %311 = vmatpush1.msra.mxu0 0.0
    %312 = vmatprep.subr.mxu0 0.0
    %313 = vmatpush1.msra.mxu0 0.0
    %314 = vmatprep.subr.mxu0 0.0
    %315 = vmatpush1.msra.mxu0 0.0
    %316 = vmatprep.subr.mxu0 0.0
    %317 = vmatpush1.msra.mxu0 0.0
    %318 = vmatprep.subr.mxu0 0.0
    %319 = vmatpush1.msra.mxu0 0.0
    %320 = vmatprep.subr.mxu0 0.0
    %321 = vmatpush1.msra.mxu0 0.0
    %322 = vmatprep.subr.mxu0 0.0
    %323 = vmatpush1.msra.mxu0 0.0
    %324 = vmatprep.subr.mxu0 0.0
    %325 = vmatpush1.msra.mxu0 0.0
    %326 = vmatprep.subr.mxu0 0.0
    %327 = vmatpush1.msra.mxu0 0.0
    %328 = vmatprep.subr.mxu0 0.0
    %329 = vmatpush1.msra.mxu0 0.0
    %330 = vmatprep.subr.mxu0 0.0
    %331 = vmatpush1.msra.mxu0 0.0
    %332 = vmatprep.subr.mxu0 0.0
    %333 = vmatpush1.msra.mxu0 0.0
    %334 = vmatprep.mubr.f32.mxu0 0.0
    %335 = vmatmul.mubr.f32.gmra.mrb[0].mxu0 %v256
    %v336 = vpop.f32.mrb[0].mxu0
    %v337 = vadd.f32 %v254, %v336
    %v338 = vpop.f32.mrb[0].mxu0
    %339 = vmatprep.mubr.f32.mxu0 0.0
    %340 = vmatmul.mubr.f32.gmra.mrb[0].mxu0 %v259
    %v341 = vpop.f32.mrb[0].mxu0
    %v342 = vadd.f32 %v254, %v341
    %v343 = vpop.f32.mrb[0].mxu0
    %344 = vmatprep.mubr.f32.mxu0 0.0
    %345 = vmatmul.mubr.f32.gmra.mrb[0].mxu0 %v262
    %v346 = vpop.f32.mrb[0].mxu0
    %v347 = vadd.f32 %v254, %v346
    %v348 = vpop.f32.mrb[0].mxu0
    %349 = vmatprep.mubr.f32.mxu0 0.0
    %350 = vmatmul.mubr.f32.gmra.mrb[0].mxu0 %v265
    %v351 = vpop.f32.mrb[0].mxu0
    %v352 = vadd.f32 %v254, %v351
    %v353 = vpop.f32.mrb[0].mxu0
    %354 = vmatprep.mubr.f32.mxu0 0.0
    %355 = vmatmul.mubr.f32.gmra.mrb[0].mxu0 %v268
    %v356 = vpop.f32.mrb[0].mxu0
    %v357 = vadd.f32 %v254, %v356
    %v358 = vpop.f32.mrb[0].mxu0
    %359 = vdwg.mxu0
    %v360 = vld [vmem:[%s1 + $0x68] sm:$0xff]
    %v361 = vld [vmem:[%s1 + $0x70] sm:$0xff]
    %v362 = vld [vmem:[%s1 + $0x78] sm:$0xff]
    %v363 = vld [vmem:[%s1 + $0x80] sm:$0xff]
    %v364 = vld [vmem:[%s2 + $0x5] sm:$0x1]
    %v365 = vlaneseq
    %v366 = vshrl.u32 %v365, 7
    %v367 = vsub.s32 0, %v366
    %v368 = vrot.slane %v364, %v367
    %369 = vmatprep.subr.mxu0 0.0
    %370 = vmatpush1.msra.mxu0 %v360
    %371 = vmatprep.subr.mxu0 0.0
    %372 = vmatpush1.msra.mxu0 %v361
    %373 = vmatprep.subr.mxu0 0.0
    %374 = vmatpush1.msra.mxu0 %v362
    %375 = vmatprep.subr.mxu0 0.0
    %376 = vmatpush1.msra.mxu0 %v363
    %377 = vmatprep.subr.mxu0 0.0
    %378 = vmatpush1.msra.mxu0 0.0
    %379 = vmatprep.subr.mxu0 0.0
    %380 = vmatpush1.msra.mxu0 0.0
    %381 = vmatprep.subr.mxu0 0.0
    %382 = vmatpush1.msra.mxu0 0.0
    %383 = vmatprep.subr.mxu0 0.0
    %384 = vmatpush1.msra.mxu0 0.0
    %385 = vmatprep.subr.mxu0 0.0
    %386 = vmatpush1.msra.mxu0 0.0
    %387 = vmatprep.subr.mxu0 0.0
    %388 = vmatpush1.msra.mxu0 0.0
    %389 = vmatprep.subr.mxu0 0.0
    %390 = vmatpush1.msra.mxu0 0.0
    %391 = vmatprep.subr.mxu0 0.0
    %392 = vmatpush1.msra.mxu0 0.0
    %393 = vmatprep.subr.mxu0 0.0
    %394 = vmatpush1.msra.mxu0 0.0
    %395 = vmatprep.subr.mxu0 0.0
    %396 = vmatpush1.msra.mxu0 0.0
    %397 = vmatprep.subr.mxu0 0.0
    %398 = vmatpush1.msra.mxu0 0.0
    %399 = vmatprep.subr.mxu0 0.0
    %400 = vmatpush1.msra.mxu0 0.0
    %401 = vmatprep.subr.mxu0 0.0
    %402 = vmatpush1.msra.mxu0 0.0
    %403 = vmatprep.subr.mxu0 0.0
    %404 = vmatpush1.msra.mxu0 0.0
    %405 = vmatprep.subr.mxu0 0.0
    %406 = vmatpush1.msra.mxu0 0.0
    %407 = vmatprep.subr.mxu0 0.0
    %408 = vmatpush1.msra.mxu0 0.0
    %409 = vmatprep.subr.mxu0 0.0
    %410 = vmatpush1.msra.mxu0 0.0
    %411 = vmatprep.subr.mxu0 0.0
    %412 = vmatpush1.msra.mxu0 0.0
    %413 = vmatprep.subr.mxu0 0.0
    %414 = vmatpush1.msra.mxu0 0.0
    %415 = vmatprep.subr.mxu0 0.0
    %416 = vmatpush1.msra.mxu0 0.0
    %417 = vmatprep.subr.mxu0 0.0
    %418 = vmatpush1.msra.mxu0 0.0
    %419 = vmatprep.subr.mxu0 0.0
    %420 = vmatpush1.msra.mxu0 0.0
    %421 = vmatprep.subr.mxu0 0.0
    %422 = vmatpush1.msra.mxu0 0.0
    %423 = vmatprep.subr.mxu0 0.0
    %424 = vmatpush1.msra.mxu0 0.0
    %425 = vmatprep.subr.mxu0 0.0
    %426 = vmatpush1.msra.mxu0 0.0
    %427 = vmatprep.subr.mxu0 0.0
    %428 = vmatpush1.msra.mxu0 0.0
    %429 = vmatprep.subr.mxu0 0.0
    %430 = vmatpush1.msra.mxu0 0.0
    %431 = vmatprep.subr.mxu0 0.0
    %432 = vmatpush1.msra.mxu0 0.0
    %433 = vmatprep.mubr.f32.mxu0 0.0
    %434 = vmatmul.mubr.f32.gmra.mrb[0].mxu0 %v256
    %v435 = vpop.f32.mrb[0].mxu0
    %v436 = vadd.f32 %v368, %v435
    %v437 = vpop.f32.mrb[0].mxu0
    %438 = vmatprep.mubr.f32.mxu0 0.0
    %439 = vmatmul.mubr.f32.gmra.mrb[0].mxu0 %v259
    %v440 = vpop.f32.mrb[0].mxu0
    %v441 = vadd.f32 %v368, %v440
    %v442 = vpop.f32.mrb[0].mxu0
    %443 = vmatprep.mubr.f32.mxu0 0.0
    %444 = vmatmul.mubr.f32.gmra.mrb[0].mxu0 %v262
    %v445 = vpop.f32.mrb[0].mxu0
    %v446 = vadd.f32 %v368, %v445
    %v447 = vpop.f32.mrb[0].mxu0
    %448 = vmatprep.mubr.f32.mxu0 0.0
    %449 = vmatmul.mubr.f32.gmra.mrb[0].mxu0 %v265
    %v450 = vpop.f32.mrb[0].mxu0
    %v451 = vadd.f32 %v368, %v450
    %v452 = vpop.f32.mrb[0].mxu0
    %453 = vmatprep.mubr.f32.mxu0 0.0
    %454 = vmatmul.mubr.f32.gmra.mrb[0].mxu0 %v268
    %v455 = vpop.f32.mrb[0].mxu0
    %v456 = vadd.f32 %v368, %v455
    %v457 = vpop.f32.mrb[0].mxu0
    %458 = vdwg.mxu0
    %462 = vrot.lane.b32.xlu0 %v337, 96
    %v463 = vpop.permute.xlu0 %462
    %464 = vrot.lane.b32.xlu0 %v342, 96
    %v465 = vpop.permute.xlu0 %464
    %466 = vrot.lane.b32.xlu0 %v347, 96
    %v467 = vpop.permute.xlu0 %466
    %vm468 = vcmask 64512
    %v469 = vsel %vm468, %v337, 0
    %v471 = vsel %vm468, %v342, 0
    %v473 = vsel %vm468, %v347, 0
    %v475 = vsel %vm468, %v463, 0
    %v477 = vsel %vm468, %v465, 0
    %v479 = vsel %vm468, %v467, 0
    %481 = vmatprep.subr.mxu0 0.0
    %482 = vmatpush1.xpose.msra.mxu0 %v475
    %483 = vmatprep.subr.mxu0 0.0
    %484 = vmatpush1.xpose.msra.mxu0 %v477
    %485 = vmatprep.subr.mxu0 0.0
    %486 = vmatpush1.xpose.msra.mxu0 %v479
    %487 = vmatprep.subr.mxu0 0.0
    %488 = vmatpush1.xpose.msra.mxu0 0.0
    %489 = vmatprep.subr.mxu0 0.0
    %490 = vmatpush1.xpose.msra.mxu0 0.0
    %491 = vmatprep.subr.mxu0 0.0
    %492 = vmatpush1.xpose.msra.mxu0 0.0
    %493 = vmatprep.subr.mxu0 0.0
    %494 = vmatpush1.xpose.msra.mxu0 0.0
    %495 = vmatprep.subr.mxu0 0.0
    %496 = vmatpush1.xpose.msra.mxu0 0.0
    %497 = vmatprep.subr.mxu0 0.0
    %498 = vmatpush1.xpose.msra.mxu0 0.0
    %499 = vmatprep.subr.mxu0 0.0
    %500 = vmatpush1.xpose.msra.mxu0 0.0
    %501 = vmatprep.subr.mxu0 0.0
    %502 = vmatpush1.xpose.msra.mxu0 0.0
    %503 = vmatprep.subr.mxu0 0.0
    %504 = vmatpush1.xpose.msra.mxu0 0.0
    %505 = vmatprep.subr.mxu0 0.0
    %506 = vmatpush1.xpose.msra.mxu0 0.0
    %507 = vmatprep.subr.mxu0 0.0
    %508 = vmatpush1.xpose.msra.mxu0 0.0
    %509 = vmatprep.subr.mxu0 0.0
    %510 = vmatpush1.xpose.msra.mxu0 0.0
    %511 = vmatprep.subr.mxu0 0.0
    %512 = vmatpush1.xpose.msra.mxu0 0.0
    %513 = vmatprep.subr.mxu0 0.0
    %514 = vmatpush1.xpose.msra.mxu0 0.0
    %515 = vmatprep.subr.mxu0 0.0
    %516 = vmatpush1.xpose.msra.mxu0 0.0
    %517 = vmatprep.subr.mxu0 0.0
    %518 = vmatpush1.xpose.msra.mxu0 0.0
    %519 = vmatprep.subr.mxu0 0.0
    %520 = vmatpush1.xpose.msra.mxu0 0.0
    %521 = vmatprep.subr.mxu0 0.0
    %522 = vmatpush1.xpose.msra.mxu0 0.0
    %523 = vmatprep.subr.mxu0 0.0
    %524 = vmatpush1.xpose.msra.mxu0 0.0
    %525 = vmatprep.subr.mxu0 0.0
    %526 = vmatpush1.xpose.msra.mxu0 0.0
    %527 = vmatprep.subr.mxu0 0.0
    %528 = vmatpush1.xpose.msra.mxu0 0.0
    %529 = vmatprep.subr.mxu0 0.0
    %530 = vmatpush1.xpose.msra.mxu0 0.0
    %531 = vmatprep.subr.mxu0 0.0
    %532 = vmatpush1.xpose.msra.mxu0 0.0
    %533 = vmatprep.subr.mxu0 0.0
    %534 = vmatpush1.xpose.msra.mxu0 0.0
    %535 = vmatprep.subr.mxu0 0.0
    %536 = vmatpush1.xpose.msra.mxu0 0.0
    %537 = vmatprep.subr.mxu0 0.0
    %538 = vmatpush1.xpose.msra.mxu0 0.0
    %539 = vmatprep.subr.mxu0 0.0
    %540 = vmatpush1.xpose.msra.mxu0 0.0
    %541 = vmatprep.subr.mxu0 0.0
    %542 = vmatpush1.xpose.msra.mxu0 0.0
    %543 = vmatprep.subr.mxu0 0.0
    %544 = vmatpush1.xpose.msra.mxu0 0.0
    %545 = vmatprep.mubr.f32.mxu0 0.0
    %546 = vmatmul.mubr.f32.gmra.mrb[0].mxu0 %v469
    %v547 = vpop.f32.mrb[0].mxu0
    %v548 = vadd.f32 0.0, %v547
    %v549 = vpop.f32.mrb[0].mxu0
    %550 = vmatprep.mubr.f32.mxu0 0.0
    %551 = vmatmul.mubr.f32.gmra.mrb[0].mxu0 %v471
    %v552 = vpop.f32.mrb[0].mxu0
    %v553 = vadd.f32 0.0, %v552
    %v554 = vpop.f32.mrb[0].mxu0
    %555 = vmatprep.mubr.f32.mxu0 0.0
    %556 = vmatmul.mubr.f32.gmra.mrb[0].mxu0 %v473
    %v557 = vpop.f32.mrb[0].mxu0
    %v558 = vadd.f32 0.0, %v557
    %v559 = vpop.f32.mrb[0].mxu0
    %560 = vdwg.mxu0
    %vm561 = vcmask 138240
    %v562 = vsel %vm561, %v548, -inf
    %563 = vmax.xlane.f32.xlu0 %v562
    %v564 = vpop.xlane.xlu0 %563
    %v565 = vsel %vm561, %v553, -inf
    %566 = vmax.xlane.f32.xlu0 %v565
    %v567 = vpop.xlane.xlu0 %566
    %vm568 = vcmask 131072
    %v569 = vsel %vm568, %v558, -inf
    %570 = vmax.xlane.f32.xlu0 %v569
    %v571 = vpop.xlane.xlu0 %570
    %v572 = vsub.f32 %v548, %v564
    %v573 = vsub.f32 %v553, %v567
    %v574 = vsub.f32 %v558, %v571
    %v575 = vmul.f32 %v572, 1.442695
    %v576 = vpow.pop %v575
    %v577 = vmul.f32 %v573, 1.442695
    %v578 = vpow.pop %v577
    %v579 = vmul.f32 %v574, 1.442695
    %v580 = vpow.pop %v579
    %v581 = vsel %vm561, %v576, 0.0
    %582 = vadd.xlane.f32.xlu0 %v581
    %v583 = vpop.xlane.xlu0 %582
    %v584 = vsel %vm561, %v578, 0.0
    %585 = vadd.xlane.f32.xlu0 %v584
    %v586 = vpop.xlane.xlu0 %585
    %v587 = vsel %vm568, %v580, 0.0
    %588 = vadd.xlane.f32.xlu0 %v587
    %v589 = vpop.xlane.xlu0 %588
    %v590 = vrcp.pop %v583
    %v591 = vmul.f32 %v576, %v590
    %v592 = vrcp.pop %v586
    %v593 = vmul.f32 %v578, %v592
    %v594 = vrcp.pop %v589
    %v595 = vmul.f32 %v580, %v594
    %596 = vrot.lane.b32.xlu0 %v337, 120
    %v597 = vpop.permute.xlu0 %596
    %598 = vrot.lane.b32.xlu0 %v342, 120
    %v599 = vpop.permute.xlu0 %598
    %600 = vrot.lane.b32.xlu0 %v347, 120
    %v601 = vpop.permute.xlu0 %600
    %602 = vrot.lane.b32.xlu0 %v337, 88
    %v603 = vpop.permute.xlu0 %602
    %604 = vrot.lane.b32.xlu0 %v342, 88
    %v605 = vpop.permute.xlu0 %604
    %606 = vrot.lane.b32.xlu0 %v347, 88
    %v607 = vpop.permute.xlu0 %606
    %v608 = vsel %vm468, %v597, 0
    %v610 = vsel %vm468, %v599, 0
    %v612 = vsel %vm468, %v601, 0
    %v614 = vsel %vm468, %v603, 0
    %v616 = vsel %vm468, %v605, 0
    %v618 = vsel %vm468, %v607, 0
    %620 = vmatprep.subr.mxu0 0.0
    %621 = vmatpush1.xpose.msra.mxu0 %v614
    %622 = vmatprep.subr.mxu0 0.0
    %623 = vmatpush1.xpose.msra.mxu0 %v616
    %624 = vmatprep.subr.mxu0 0.0
    %625 = vmatpush1.xpose.msra.mxu0 %v618
    %626 = vmatprep.subr.mxu0 0.0
    %627 = vmatpush1.xpose.msra.mxu0 0.0
    %628 = vmatprep.subr.mxu0 0.0
    %629 = vmatpush1.xpose.msra.mxu0 0.0
    %630 = vmatprep.subr.mxu0 0.0
    %631 = vmatpush1.xpose.msra.mxu0 0.0
    %632 = vmatprep.subr.mxu0 0.0
    %633 = vmatpush1.xpose.msra.mxu0 0.0
    %634 = vmatprep.subr.mxu0 0.0
    %635 = vmatpush1.xpose.msra.mxu0 0.0
    %636 = vmatprep.subr.mxu0 0.0
    %637 = vmatpush1.xpose.msra.mxu0 0.0
    %638 = vmatprep.subr.mxu0 0.0
    %639 = vmatpush1.xpose.msra.mxu0 0.0
    %640 = vmatprep.subr.mxu0 0.0
    %641 = vmatpush1.xpose.msra.mxu0 0.0
    %642 = vmatprep.subr.mxu0 0.0
    %643 = vmatpush1.xpose.msra.mxu0 0.0
    %644 = vmatprep.subr.mxu0 0.0
    %645 = vmatpush1.xpose.msra.mxu0 0.0
    %646 = vmatprep.subr.mxu0 0.0
    %647 = vmatpush1.xpose.msra.mxu0 0.0
    %648 = vmatprep.subr.mxu0 0.0
    %649 = vmatpush1.xpose.msra.mxu0 0.0
    %650 = vmatprep.subr.mxu0 0.0
    %651 = vmatpush1.xpose.msra.mxu0 0.0
    %652 = vmatprep.subr.mxu0 0.0
    %653 = vmatpush1.xpose.msra.mxu0 0.0
    %654 = vmatprep.subr.mxu0 0.0
    %655 = vmatpush1.xpose.msra.mxu0 0.0
    %656 = vmatprep.subr.mxu0 0.0
    %657 = vmatpush1.xpose.msra.mxu0 0.0
    %658 = vmatprep.subr.mxu0 0.0
    %659 = vmatpush1.xpose.msra.mxu0 0.0
    %660 = vmatprep.subr.mxu0 0.0
    %661 = vmatpush1.xpose.msra.mxu0 0.0
    %662 = vmatprep.subr.mxu0 0.0
    %663 = vmatpush1.xpose.msra.mxu0 0.0
    %664 = vmatprep.subr.mxu0 0.0
    %665 = vmatpush1.xpose.msra.mxu0 0.0
    %666 = vmatprep.subr.mxu0 0.0
    %667 = vmatpush1.xpose.msra.mxu0 0.0
    %668 = vmatprep.subr.mxu0 0.0
    %669 = vmatpush1.xpose.msra.mxu0 0.0
    %670 = vmatprep.subr.mxu0 0.0
    %671 = vmatpush1.xpose.msra.mxu0 0.0
    %672 = vmatprep.subr.mxu0 0.0
    %673 = vmatpush1.xpose.msra.mxu0 0.0
    %674 = vmatprep.subr.mxu0 0.0
    %675 = vmatpush1.xpose.msra.mxu0 0.0
    %676 = vmatprep.subr.mxu0 0.0
    %677 = vmatpush1.xpose.msra.mxu0 0.0
    %678 = vmatprep.subr.mxu0 0.0
    %679 = vmatpush1.xpose.msra.mxu0 0.0
    %680 = vmatprep.subr.mxu0 0.0
    %681 = vmatpush1.xpose.msra.mxu0 0.0
    %682 = vmatprep.subr.mxu0 0.0
    %683 = vmatpush1.xpose.msra.mxu0 0.0
    %684 = vmatprep.mubr.f32.mxu0 0.0
    %685 = vmatmul.mubr.f32.gmra.mrb[0].mxu0 %v608
    %v686 = vpop.f32.mrb[0].mxu0
    %v687 = vadd.f32 0.0, %v686
    %v688 = vpop.f32.mrb[0].mxu0
    %689 = vmatprep.mubr.f32.mxu0 0.0
    %690 = vmatmul.mubr.f32.gmra.mrb[0].mxu0 %v610
    %v691 = vpop.f32.mrb[0].mxu0
    %v692 = vadd.f32 0.0, %v691
    %v693 = vpop.f32.mrb[0].mxu0
    %694 = vmatprep.mubr.f32.mxu0 0.0
    %695 = vmatmul.mubr.f32.gmra.mrb[0].mxu0 %v612
    %v696 = vpop.f32.mrb[0].mxu0
    %v697 = vadd.f32 0.0, %v696
    %v698 = vpop.f32.mrb[0].mxu0
    %699 = vdwg.mxu0
    %v700 = vsel %vm561, %v687, -inf
    %701 = vmax.xlane.f32.xlu0 %v700
    %v702 = vpop.xlane.xlu0 %701
    %v703 = vsel %vm561, %v692, -inf
    %704 = vmax.xlane.f32.xlu0 %v703
    %v705 = vpop.xlane.xlu0 %704
    %v706 = vsel %vm568, %v697, -inf
    %707 = vmax.xlane.f32.xlu0 %v706
    %v708 = vpop.xlane.xlu0 %707
    %v709 = vsub.f32 %v687, %v702
    %v710 = vsub.f32 %v692, %v705
    %v711 = vsub.f32 %v697, %v708
    %v712 = vmul.f32 %v709, 1.442695
    %v713 = vpow.pop %v712
    %v714 = vmul.f32 %v710, 1.442695
    %v715 = vpow.pop %v714
    %v716 = vmul.f32 %v711, 1.442695
    %v717 = vpow.pop %v716
    %v718 = vsel %vm561, %v713, 0.0
    %719 = vadd.xlane.f32.xlu0 %v718
    %v720 = vpop.xlane.xlu0 %719
    %v721 = vsel %vm561, %v715, 0.0
    %722 = vadd.xlane.f32.xlu0 %v721
    %v723 = vpop.xlane.xlu0 %722
    %v724 = vsel %vm568, %v717, 0.0
    %725 = vadd.xlane.f32.xlu0 %v724
    %v726 = vpop.xlane.xlu0 %725
    %v727 = vrcp.pop %v720
    %v728 = vmul.f32 %v713, %v727
    %v729 = vrcp.pop %v723
    %v730 = vmul.f32 %v715, %v729
    %v731 = vrcp.pop %v726
    %v732 = vmul.f32 %v717, %v731
    %736 = vrot.lane.b32.xlu0 %v436, 96
    %v737 = vpop.permute.xlu0 %736
    %738 = vrot.lane.b32.xlu0 %v441, 96
    %v739 = vpop.permute.xlu0 %738
    %740 = vrot.lane.b32.xlu0 %v446, 96
    %v741 = vpop.permute.xlu0 %740
    %v745 = vsel %vm561, %v728, 0
    %v748 = vsel %vm561, %v730, 0
    %v751 = vsel %vm561, %v732, 0
    %v753 = vsel %vm25, %v741, 0
    %755 = vmatprep.subr.mxu0 0.0
    %756 = vmatpush1.msra.mxu0 %v737
    %757 = vmatprep.subr.mxu0 0.0
    %758 = vmatpush1.msra.mxu0 %v739
    %759 = vmatprep.subr.mxu0 0.0
    %760 = vmatpush1.msra.mxu0 %v753
    %761 = vmatprep.subr.mxu0 0.0
    %762 = vmatpush1.msra.mxu0 0.0
    %763 = vmatprep.subr.mxu0 0.0
    %764 = vmatpush1.msra.mxu0 0.0
    %765 = vmatprep.subr.mxu0 0.0
    %766 = vmatpush1.msra.mxu0 0.0
    %767 = vmatprep.subr.mxu0 0.0
    %768 = vmatpush1.msra.mxu0 0.0
    %769 = vmatprep.subr.mxu0 0.0
    %770 = vmatpush1.msra.mxu0 0.0
    %771 = vmatprep.subr.mxu0 0.0
    %772 = vmatpush1.msra.mxu0 0.0
    %773 = vmatprep.subr.mxu0 0.0
    %774 = vmatpush1.msra.mxu0 0.0
    %775 = vmatprep.subr.mxu0 0.0
    %776 = vmatpush1.msra.mxu0 0.0
    %777 = vmatprep.subr.mxu0 0.0
    %778 = vmatpush1.msra.mxu0 0.0
    %779 = vmatprep.subr.mxu0 0.0
    %780 = vmatpush1.msra.mxu0 0.0
    %781 = vmatprep.subr.mxu0 0.0
    %782 = vmatpush1.msra.mxu0 0.0
    %783 = vmatprep.subr.mxu0 0.0
    %784 = vmatpush1.msra.mxu0 0.0
    %785 = vmatprep.subr.mxu0 0.0
    %786 = vmatpush1.msra.mxu0 0.0
    %787 = vmatprep.subr.mxu0 0.0
    %788 = vmatpush1.msra.mxu0 0.0
    %789 = vmatprep.subr.mxu0 0.0
    %790 = vmatpush1.msra.mxu0 0.0
    %791 = vmatprep.subr.mxu0 0.0
    %792 = vmatpush1.msra.mxu0 0.0
    %793 = vmatprep.subr.mxu0 0.0
    %794 = vmatpush1.msra.mxu0 0.0
    %795 = vmatprep.subr.mxu0 0.0
    %796 = vmatpush1.msra.mxu0 0.0
    %797 = vmatprep.subr.mxu0 0.0
    %798 = vmatpush1.msra.mxu0 0.0
    %799 = vmatprep.subr.mxu0 0.0
    %800 = vmatpush1.msra.mxu0 0.0
    %801 = vmatprep.subr.mxu0 0.0
    %802 = vmatpush1.msra.mxu0 0.0
    %803 = vmatprep.subr.mxu0 0.0
    %804 = vmatpush1.msra.mxu0 0.0
    %805 = vmatprep.subr.mxu0 0.0
    %806 = vmatpush1.msra.mxu0 0.0
    %807 = vmatprep.subr.mxu0 0.0
    %808 = vmatpush1.msra.mxu0 0.0
    %809 = vmatprep.subr.mxu0 0.0
    %810 = vmatpush1.msra.mxu0 0.0
    %811 = vmatprep.subr.mxu0 0.0
    %812 = vmatpush1.msra.mxu0 0.0
    %813 = vmatprep.subr.mxu0 0.0
    %814 = vmatpush1.msra.mxu0 0.0
    %815 = vmatprep.subr.mxu0 0.0
    %816 = vmatpush1.msra.mxu0 0.0
    %817 = vmatprep.subr.mxu0 0.0
    %818 = vmatpush1.msra.mxu0 0.0
    %819 = vmatprep.mubr.f32.mxu0 0.0
    %820 = vmatmul.mubr.f32.gmra.mrb[0].mxu0 %v745
    %v821 = vpop.f32.mrb[0].mxu0
    %v822 = vadd.f32 0.0, %v821
    %v823 = vpop.f32.mrb[0].mxu0
    %824 = vmatprep.mubr.f32.mxu0 0.0
    %825 = vmatmul.mubr.f32.gmra.mrb[0].mxu0 %v748
    %v826 = vpop.f32.mrb[0].mxu0
    %v827 = vadd.f32 0.0, %v826
    %v828 = vpop.f32.mrb[0].mxu0
    %829 = vmatprep.mubr.f32.mxu0 0.0
    %830 = vmatmul.mubr.f32.gmra.mrb[0].mxu0 %v751
    %v831 = vpop.f32.mrb[0].mxu0
    %v832 = vadd.f32 0.0, %v831
    %v833 = vpop.f32.mrb[0].mxu0
    %834 = vdwg.mxu0
    %v836 = vsel %vm561, %v591, 0
    %v839 = vsel %vm561, %v593, 0
    %v842 = vsel %vm561, %v595, 0
    %v844 = vsel %vm25, %v446, 0
    %846 = vmatprep.subr.mxu0 0.0
    %847 = vmatpush1.msra.mxu0 %v436
    %848 = vmatprep.subr.mxu0 0.0
    %849 = vmatpush1.msra.mxu0 %v441
    %850 = vmatprep.subr.mxu0 0.0
    %851 = vmatpush1.msra.mxu0 %v844
    %852 = vmatprep.subr.mxu0 0.0
    %853 = vmatpush1.msra.mxu0 0.0
    %854 = vmatprep.subr.mxu0 0.0
    %855 = vmatpush1.msra.mxu0 0.0
    %856 = vmatprep.subr.mxu0 0.0
    %857 = vmatpush1.msra.mxu0 0.0
    %858 = vmatprep.subr.mxu0 0.0
    %859 = vmatpush1.msra.mxu0 0.0
    %860 = vmatprep.subr.mxu0 0.0
    %861 = vmatpush1.msra.mxu0 0.0
    %862 = vmatprep.subr.mxu0 0.0
    %863 = vmatpush1.msra.mxu0 0.0
    %864 = vmatprep.subr.mxu0 0.0
    %865 = vmatpush1.msra.mxu0 0.0
    %866 = vmatprep.subr.mxu0 0.0
    %867 = vmatpush1.msra.mxu0 0.0
    %868 = vmatprep.subr.mxu0 0.0
    %869 = vmatpush1.msra.mxu0 0.0
    %870 = vmatprep.subr.mxu0 0.0
    %871 = vmatpush1.msra.mxu0 0.0
    %872 = vmatprep.subr.mxu0 0.0
    %873 = vmatpush1.msra.mxu0 0.0
    %874 = vmatprep.subr.mxu0 0.0
    %875 = vmatpush1.msra.mxu0 0.0
    %876 = vmatprep.subr.mxu0 0.0
    %877 = vmatpush1.msra.mxu0 0.0
    %878 = vmatprep.subr.mxu0 0.0
    %879 = vmatpush1.msra.mxu0 0.0
    %880 = vmatprep.subr.mxu0 0.0
    %881 = vmatpush1.msra.mxu0 0.0
    %882 = vmatprep.subr.mxu0 0.0
    %883 = vmatpush1.msra.mxu0 0.0
    %884 = vmatprep.subr.mxu0 0.0
    %885 = vmatpush1.msra.mxu0 0.0
    %886 = vmatprep.subr.mxu0 0.0
    %887 = vmatpush1.msra.mxu0 0.0
    %888 = vmatprep.subr.mxu0 0.0
    %889 = vmatpush1.msra.mxu0 0.0
    %890 = vmatprep.subr.mxu0 0.0
    %891 = vmatpush1.msra.mxu0 0.0
    %892 = vmatprep.subr.mxu0 0.0
    %893 = vmatpush1.msra.mxu0 0.0
    %894 = vmatprep.subr.mxu0 0.0
    %895 = vmatpush1.msra.mxu0 0.0
    %896 = vmatprep.subr.mxu0 0.0
    %897 = vmatpush1.msra.mxu0 0.0
    %898 = vmatprep.subr.mxu0 0.0
    %899 = vmatpush1.msra.mxu0 0.0
    %900 = vmatprep.subr.mxu0 0.0
    %901 = vmatpush1.msra.mxu0 0.0
    %902 = vmatprep.subr.mxu0 0.0
    %903 = vmatpush1.msra.mxu0 0.0
    %904 = vmatprep.subr.mxu0 0.0
    %905 = vmatpush1.msra.mxu0 0.0
    %906 = vmatprep.subr.mxu0 0.0
    %907 = vmatpush1.msra.mxu0 0.0
    %908 = vmatprep.subr.mxu0 0.0
    %909 = vmatpush1.msra.mxu0 0.0
    %910 = vmatprep.mubr.f32.mxu0 0.0
    %911 = vmatmul.mubr.f32.gmra.mrb[0].mxu0 %v836
    %v912 = vpop.f32.mrb[0].mxu0
    %v913 = vadd.f32 %v822, %v912
    %v914 = vpop.f32.mrb[0].mxu0
    %915 = vmatprep.mubr.f32.mxu0 0.0
    %916 = vmatmul.mubr.f32.gmra.mrb[0].mxu0 %v839
    %v917 = vpop.f32.mrb[0].mxu0
    %v918 = vadd.f32 %v827, %v917
    %v919 = vpop.f32.mrb[0].mxu0
    %920 = vmatprep.mubr.f32.mxu0 0.0
    %921 = vmatmul.mubr.f32.gmra.mrb[0].mxu0 %v842
    %v922 = vpop.f32.mrb[0].mxu0
    %v923 = vadd.f32 %v832, %v922
    %v924 = vpop.f32.mrb[0].mxu0
    %925 = vdwg.mxu0
    %926 = vrot.lane.b32.xlu0 %v337, 112
    %v927 = vpop.permute.xlu0 %926
    %928 = vrot.lane.b32.xlu0 %v342, 112
    %v929 = vpop.permute.xlu0 %928
    %930 = vrot.lane.b32.xlu0 %v347, 112
    %v931 = vpop.permute.xlu0 %930
    %932 = vrot.lane.b32.xlu0 %v337, 80
    %v933 = vpop.permute.xlu0 %932
    %934 = vrot.lane.b32.xlu0 %v342, 80
    %v935 = vpop.permute.xlu0 %934
    %936 = vrot.lane.b32.xlu0 %v347, 80
    %v937 = vpop.permute.xlu0 %936
    %v938 = vsel %vm468, %v927, 0
    %v940 = vsel %vm468, %v929, 0
    %v942 = vsel %vm468, %v931, 0
    %v944 = vsel %vm468, %v933, 0
    %v946 = vsel %vm468, %v935, 0
    %v948 = vsel %vm468, %v937, 0
    %950 = vmatprep.subr.mxu0 0.0
    %951 = vmatpush1.xpose.msra.mxu0 %v944
    %952 = vmatprep.subr.mxu0 0.0
    %953 = vmatpush1.xpose.msra.mxu0 %v946
    %954 = vmatprep.subr.mxu0 0.0
    %955 = vmatpush1.xpose.msra.mxu0 %v948
    %956 = vmatprep.subr.mxu0 0.0
    %957 = vmatpush1.xpose.msra.mxu0 0.0
    %958 = vmatprep.subr.mxu0 0.0
    %959 = vmatpush1.xpose.msra.mxu0 0.0
    %960 = vmatprep.subr.mxu0 0.0
    %961 = vmatpush1.xpose.msra.mxu0 0.0
    %962 = vmatprep.subr.mxu0 0.0
    %963 = vmatpush1.xpose.msra.mxu0 0.0
    %964 = vmatprep.subr.mxu0 0.0
    %965 = vmatpush1.xpose.msra.mxu0 0.0
    %966 = vmatprep.subr.mxu0 0.0
    %967 = vmatpush1.xpose.msra.mxu0 0.0
    %968 = vmatprep.subr.mxu0 0.0
    %969 = vmatpush1.xpose.msra.mxu0 0.0
    %970 = vmatprep.subr.mxu0 0.0
    %971 = vmatpush1.xpose.msra.mxu0 0.0
    %972 = vmatprep.subr.mxu0 0.0
    %973 = vmatpush1.xpose.msra.mxu0 0.0
    %974 = vmatprep.subr.mxu0 0.0
    %975 = vmatpush1.xpose.msra.mxu0 0.0
    %976 = vmatprep.subr.mxu0 0.0
    %977 = vmatpush1.xpose.msra.mxu0 0.0
    %978 = vmatprep.subr.mxu0 0.0
    %979 = vmatpush1.xpose.msra.mxu0 0.0
    %980 = vmatprep.subr.mxu0 0.0
    %981 = vmatpush1.xpose.msra.mxu0 0.0
    %982 = vmatprep.subr.mxu0 0.0
    %983 = vmatpush1.xpose.msra.mxu0 0.0
    %984 = vmatprep.subr.mxu0 0.0
    %985 = vmatpush1.xpose.msra.mxu0 0.0
    %986 = vmatprep.subr.mxu0 0.0
    %987 = vmatpush1.xpose.msra.mxu0 0.0
    %988 = vmatprep.subr.mxu0 0.0
    %989 = vmatpush1.xpose.msra.mxu0 0.0
    %990 = vmatprep.subr.mxu0 0.0
    %991 = vmatpush1.xpose.msra.mxu0 0.0
    %992 = vmatprep.subr.mxu0 0.0
    %993 = vmatpush1.xpose.msra.mxu0 0.0
    %994 = vmatprep.subr.mxu0 0.0
    %995 = vmatpush1.xpose.msra.mxu0 0.0
    %996 = vmatprep.subr.mxu0 0.0
    %997 = vmatpush1.xpose.msra.mxu0 0.0
    %998 = vmatprep.subr.mxu0 0.0
    %999 = vmatpush1.xpose.msra.mxu0 0.0
    %1000 = vmatprep.subr.mxu0 0.0
    %1001 = vmatpush1.xpose.msra.mxu0 0.0
    %1002 = vmatprep.subr.mxu0 0.0
    %1003 = vmatpush1.xpose.msra.mxu0 0.0
    %1004 = vmatprep.subr.mxu0 0.0
    %1005 = vmatpush1.xpose.msra.mxu0 0.0
    %1006 = vmatprep.subr.mxu0 0.0
    %1007 = vmatpush1.xpose.msra.mxu0 0.0
    %1008 = vmatprep.subr.mxu0 0.0
    %1009 = vmatpush1.xpose.msra.mxu0 0.0
    %1010 = vmatprep.subr.mxu0 0.0
    %1011 = vmatpush1.xpose.msra.mxu0 0.0
    %1012 = vmatprep.subr.mxu0 0.0
    %1013 = vmatpush1.xpose.msra.mxu0 0.0
    %1014 = vmatprep.mubr.f32.mxu0 0.0
    %1015 = vmatmul.mubr.f32.gmra.mrb[0].mxu0 %v938
    %v1016 = vpop.f32.mrb[0].mxu0
    %v1017 = vadd.f32 0.0, %v1016
    %v1018 = vpop.f32.mrb[0].mxu0
    %1019 = vmatprep.mubr.f32.mxu0 0.0
    %1020 = vmatmul.mubr.f32.gmra.mrb[0].mxu0 %v940
    %v1021 = vpop.f32.mrb[0].mxu0
    %v1022 = vadd.f32 0.0, %v1021
    %v1023 = vpop.f32.mrb[0].mxu0
    %1024 = vmatprep.mubr.f32.mxu0 0.0
    %1025 = vmatmul.mubr.f32.gmra.mrb[0].mxu0 %v942
    %v1026 = vpop.f32.mrb[0].mxu0
    %v1027 = vadd.f32 0.0, %v1026
    %v1028 = vpop.f32.mrb[0].mxu0
    %1029 = vdwg.mxu0
    %v1030 = vsel %vm561, %v1017, -inf
    %1031 = vmax.xlane.f32.xlu0 %v1030
    %v1032 = vpop.xlane.xlu0 %1031
    %v1033 = vsel %vm561, %v1022, -inf
    %1034 = vmax.xlane.f32.xlu0 %v1033
    %v1035 = vpop.xlane.xlu0 %1034
    %v1036 = vsel %vm568, %v1027, -inf
    %1037 = vmax.xlane.f32.xlu0 %v1036
    %v1038 = vpop.xlane.xlu0 %1037
    %v1039 = vsub.f32 %v1017, %v1032
    %v1040 = vsub.f32 %v1022, %v1035
    %v1041 = vsub.f32 %v1027, %v1038
    %v1042 = vmul.f32 %v1039, 1.442695
    %v1043 = vpow.pop %v1042
    %v1044 = vmul.f32 %v1040, 1.442695
    %v1045 = vpow.pop %v1044
    %v1046 = vmul.f32 %v1041, 1.442695
    %v1047 = vpow.pop %v1046
    %v1048 = vsel %vm561, %v1043, 0.0
    %1049 = vadd.xlane.f32.xlu0 %v1048
    %v1050 = vpop.xlane.xlu0 %1049
    %v1051 = vsel %vm561, %v1045, 0.0
    %1052 = vadd.xlane.f32.xlu0 %v1051
    %v1053 = vpop.xlane.xlu0 %1052
    %v1054 = vsel %vm568, %v1047, 0.0
    %1055 = vadd.xlane.f32.xlu0 %v1054
    %v1056 = vpop.xlane.xlu0 %1055
    %v1057 = vrcp.pop %v1050
    %v1058 = vmul.f32 %v1043, %v1057
    %v1059 = vrcp.pop %v1053
    %v1060 = vmul.f32 %v1045, %v1059
    %v1061 = vrcp.pop %v1056
    %v1062 = vmul.f32 %v1047, %v1061
    %1063 = vrot.lane.b32.xlu0 %v436, 64
    %v1064 = vpop.permute.xlu0 %1063
    %1065 = vrot.lane.b32.xlu0 %v441, 64
    %v1066 = vpop.permute.xlu0 %1065
    %1067 = vrot.lane.b32.xlu0 %v446, 64
    %v1068 = vpop.permute.xlu0 %1067
    %v1072 = vsel %vm561, %v1058, 0
    %v1075 = vsel %vm561, %v1060, 0
    %v1078 = vsel %vm561, %v1062, 0
    %v1080 = vsel %vm25, %v1068, 0
    %1082 = vmatprep.subr.mxu0 0.0
    %1083 = vmatpush1.msra.mxu0 %v1064
    %1084 = vmatprep.subr.mxu0 0.0
    %1085 = vmatpush1.msra.mxu0 %v1066
    %1086 = vmatprep.subr.mxu0 0.0
    %1087 = vmatpush1.msra.mxu0 %v1080
    %1088 = vmatprep.subr.mxu0 0.0
    %1089 = vmatpush1.msra.mxu0 0.0
    %1090 = vmatprep.subr.mxu0 0.0
    %1091 = vmatpush1.msra.mxu0 0.0
    %1092 = vmatprep.subr.mxu0 0.0
    %1093 = vmatpush1.msra.mxu0 0.0
    %1094 = vmatprep.subr.mxu0 0.0
    %1095 = vmatpush1.msra.mxu0 0.0
    %1096 = vmatprep.subr.mxu0 0.0
    %1097 = vmatpush1.msra.mxu0 0.0
    %1098 = vmatprep.subr.mxu0 0.0
    %1099 = vmatpush1.msra.mxu0 0.0
    %1100 = vmatprep.subr.mxu0 0.0
    %1101 = vmatpush1.msra.mxu0 0.0
    %1102 = vmatprep.subr.mxu0 0.0
    %1103 = vmatpush1.msra.mxu0 0.0
    %1104 = vmatprep.subr.mxu0 0.0
    %1105 = vmatpush1.msra.mxu0 0.0
    %1106 = vmatprep.subr.mxu0 0.0
    %1107 = vmatpush1.msra.mxu0 0.0
    %1108 = vmatprep.subr.mxu0 0.0
    %1109 = vmatpush1.msra.mxu0 0.0
    %1110 = vmatprep.subr.mxu0 0.0
    %1111 = vmatpush1.msra.mxu0 0.0
    %1112 = vmatprep.subr.mxu0 0.0
    %1113 = vmatpush1.msra.mxu0 0.0
    %1114 = vmatprep.subr.mxu0 0.0
    %1115 = vmatpush1.msra.mxu0 0.0
    %1116 = vmatprep.subr.mxu0 0.0
    %1117 = vmatpush1.msra.mxu0 0.0
    %1118 = vmatprep.subr.mxu0 0.0
    %1119 = vmatpush1.msra.mxu0 0.0
    %1120 = vmatprep.subr.mxu0 0.0
    %1121 = vmatpush1.msra.mxu0 0.0
    %1122 = vmatprep.subr.mxu0 0.0
    %1123 = vmatpush1.msra.mxu0 0.0
    %1124 = vmatprep.subr.mxu0 0.0
    %1125 = vmatpush1.msra.mxu0 0.0
    %1126 = vmatprep.subr.mxu0 0.0
    %1127 = vmatpush1.msra.mxu0 0.0
    %1128 = vmatprep.subr.mxu0 0.0
    %1129 = vmatpush1.msra.mxu0 0.0
    %1130 = vmatprep.subr.mxu0 0.0
    %1131 = vmatpush1.msra.mxu0 0.0
    %1132 = vmatprep.subr.mxu0 0.0
    %1133 = vmatpush1.msra.mxu0 0.0
    %1134 = vmatprep.subr.mxu0 0.0
    %1135 = vmatpush1.msra.mxu0 0.0
    %1136 = vmatprep.subr.mxu0 0.0
    %1137 = vmatpush1.msra.mxu0 0.0
    %1138 = vmatprep.subr.mxu0 0.0
    %1139 = vmatpush1.msra.mxu0 0.0
    %1140 = vmatprep.subr.mxu0 0.0
    %1141 = vmatpush1.msra.mxu0 0.0
    %1142 = vmatprep.subr.mxu0 0.0
    %1143 = vmatpush1.msra.mxu0 0.0
    %1144 = vmatprep.subr.mxu0 0.0
    %1145 = vmatpush1.msra.mxu0 0.0
    %1146 = vmatprep.mubr.f32.mxu0 0.0
    %1147 = vmatmul.mubr.f32.gmra.mrb[0].mxu0 %v1072
    %v1148 = vpop.f32.mrb[0].mxu0
    %v1149 = vadd.f32 0.0, %v1148
    %v1150 = vpop.f32.mrb[0].mxu0
    %1151 = vmatprep.mubr.f32.mxu0 0.0
    %1152 = vmatmul.mubr.f32.gmra.mrb[0].mxu0 %v1075
    %v1153 = vpop.f32.mrb[0].mxu0
    %v1154 = vadd.f32 0.0, %v1153
    %v1155 = vpop.f32.mrb[0].mxu0
    %1156 = vmatprep.mubr.f32.mxu0 0.0
    %1157 = vmatmul.mubr.f32.gmra.mrb[0].mxu0 %v1078
    %v1158 = vpop.f32.mrb[0].mxu0
    %v1159 = vadd.f32 0.0, %v1158
    %v1160 = vpop.f32.mrb[0].mxu0
    %1161 = vdwg.mxu0
    %v1162 = vadd.f32 %v913, %v1149
    %v1163 = vadd.f32 %v918, %v1154
    %v1164 = vadd.f32 %v923, %v1159
    %1165 = vrot.lane.b32.xlu0 %v337, 104
    %v1166 = vpop.permute.xlu0 %1165
    %1167 = vrot.lane.b32.xlu0 %v342, 104
    %v1168 = vpop.permute.xlu0 %1167
    %1169 = vrot.lane.b32.xlu0 %v347, 104
    %v1170 = vpop.permute.xlu0 %1169
    %1171 = vrot.lane.b32.xlu0 %v337, 72
    %v1172 = vpop.permute.xlu0 %1171
    %1173 = vrot.lane.b32.xlu0 %v342, 72
    %v1174 = vpop.permute.xlu0 %1173
    %1175 = vrot.lane.b32.xlu0 %v347, 72
    %v1176 = vpop.permute.xlu0 %1175
    %v1177 = vsel %vm468, %v1166, 0
    %v1179 = vsel %vm468, %v1168, 0
    %v1181 = vsel %vm468, %v1170, 0
    %v1183 = vsel %vm468, %v1172, 0
    %v1185 = vsel %vm468, %v1174, 0
    %v1187 = vsel %vm468, %v1176, 0
    %1189 = vmatprep.subr.mxu0 0.0
    %1190 = vmatpush1.xpose.msra.mxu0 %v1183
    %1191 = vmatprep.subr.mxu0 0.0
    %1192 = vmatpush1.xpose.msra.mxu0 %v1185
    %1193 = vmatprep.subr.mxu0 0.0
    %1194 = vmatpush1.xpose.msra.mxu0 %v1187
    %1195 = vmatprep.subr.mxu0 0.0
    %1196 = vmatpush1.xpose.msra.mxu0 0.0
    %1197 = vmatprep.subr.mxu0 0.0
    %1198 = vmatpush1.xpose.msra.mxu0 0.0
    %1199 = vmatprep.subr.mxu0 0.0
    %1200 = vmatpush1.xpose.msra.mxu0 0.0
    %1201 = vmatprep.subr.mxu0 0.0
    %1202 = vmatpush1.xpose.msra.mxu0 0.0
    %1203 = vmatprep.subr.mxu0 0.0
    %1204 = vmatpush1.xpose.msra.mxu0 0.0
    %1205 = vmatprep.subr.mxu0 0.0
    %1206 = vmatpush1.xpose.msra.mxu0 0.0
    %1207 = vmatprep.subr.mxu0 0.0
    %1208 = vmatpush1.xpose.msra.mxu0 0.0
    %1209 = vmatprep.subr.mxu0 0.0
    %1210 = vmatpush1.xpose.msra.mxu0 0.0
    %1211 = vmatprep.subr.mxu0 0.0
    %1212 = vmatpush1.xpose.msra.mxu0 0.0
    %1213 = vmatprep.subr.mxu0 0.0
    %1214 = vmatpush1.xpose.msra.mxu0 0.0
    %1215 = vmatprep.subr.mxu0 0.0
    %1216 = vmatpush1.xpose.msra.mxu0 0.0
    %1217 = vmatprep.subr.mxu0 0.0
    %1218 = vmatpush1.xpose.msra.mxu0 0.0
    %1219 = vmatprep.subr.mxu0 0.0
    %1220 = vmatpush1.xpose.msra.mxu0 0.0
    %1221 = vmatprep.subr.mxu0 0.0
    %1222 = vmatpush1.xpose.msra.mxu0 0.0
    %1223 = vmatprep.subr.mxu0 0.0
    %1224 = vmatpush1.xpose.msra.mxu0 0.0
    %1225 = vmatprep.subr.mxu0 0.0
    %1226 = vmatpush1.xpose.msra.mxu0 0.0
    %1227 = vmatprep.subr.mxu0 0.0
    %1228 = vmatpush1.xpose.msra.mxu0 0.0
    %1229 = vmatprep.subr.mxu0 0.0
    %1230 = vmatpush1.xpose.msra.mxu0 0.0
    %1231 = vmatprep.subr.mxu0 0.0
    %1232 = vmatpush1.xpose.msra.mxu0 0.0
    %1233 = vmatprep.subr.mxu0 0.0
    %1234 = vmatpush1.xpose.msra.mxu0 0.0
    %1235 = vmatprep.subr.mxu0 0.0
    %1236 = vmatpush1.xpose.msra.mxu0 0.0
    %1237 = vmatprep.subr.mxu0 0.0
    %1238 = vmatpush1.xpose.msra.mxu0 0.0
    %1239 = vmatprep.subr.mxu0 0.0
    %1240 = vmatpush1.xpose.msra.mxu0 0.0
    %1241 = vmatprep.subr.mxu0 0.0
    %1242 = vmatpush1.xpose.msra.mxu0 0.0
    %1243 = vmatprep.subr.mxu0 0.0
    %1244 = vmatpush1.xpose.msra.mxu0 0.0
    %1245 = vmatprep.subr.mxu0 0.0
    %1246 = vmatpush1.xpose.msra.mxu0 0.0
    %1247 = vmatprep.subr.mxu0 0.0
    %1248 = vmatpush1.xpose.msra.mxu0 0.0
    %1249 = vmatprep.subr.mxu0 0.0
    %1250 = vmatpush1.xpose.msra.mxu0 0.0
    %1251 = vmatprep.subr.mxu0 0.0
    %1252 = vmatpush1.xpose.msra.mxu0 0.0
    %1253 = vmatprep.mubr.f32.mxu0 0.0
    %1254 = vmatmul.mubr.f32.gmra.mrb[0].mxu0 %v1177
    %v1255 = vpop.f32.mrb[0].mxu0
    %v1256 = vadd.f32 0.0, %v1255
    %v1257 = vpop.f32.mrb[0].mxu0
    %1258 = vmatprep.mubr.f32.mxu0 0.0
    %1259 = vmatmul.mubr.f32.gmra.mrb[0].mxu0 %v1179
    %v1260 = vpop.f32.mrb[0].mxu0
    %v1261 = vadd.f32 0.0, %v1260
    %v1262 = vpop.f32.mrb[0].mxu0
    %1263 = vmatprep.mubr.f32.mxu0 0.0
    %1264 = vmatmul.mubr.f32.gmra.mrb[0].mxu0 %v1181
    %v1265 = vpop.f32.mrb[0].mxu0
    %v1266 = vadd.f32 0.0, %v1265
    %v1267 = vpop.f32.mrb[0].mxu0
    %1268 = vdwg.mxu0
    %v1269 = vsel %vm561, %v1256, -inf
    %1270 = vmax.xlane.f32.xlu0 %v1269
    %v1271 = vpop.xlane.xlu0 %1270
    %v1272 = vsel %vm561, %v1261, -inf
    %1273 = vmax.xlane.f32.xlu0 %v1272
    %v1274 = vpop.xlane.xlu0 %1273
    %v1275 = vsel %vm568, %v1266, -inf
    %1276 = vmax.xlane.f32.xlu0 %v1275
    %v1277 = vpop.xlane.xlu0 %1276
    %v1278 = vsub.f32 %v1256, %v1271
    %v1279 = vsub.f32 %v1261, %v1274
    %v1280 = vsub.f32 %v1266, %v1277
    %v1281 = vmul.f32 %v1278, 1.442695
    %v1282 = vpow.pop %v1281
    %v1283 = vmul.f32 %v1279, 1.442695
    %v1284 = vpow.pop %v1283
    %v1285 = vmul.f32 %v1280, 1.442695
    %v1286 = vpow.pop %v1285
    %v1287 = vsel %vm561, %v1282, 0.0
    %1288 = vadd.xlane.f32.xlu0 %v1287
    %v1289 = vpop.xlane.xlu0 %1288
    %v1290 = vsel %vm561, %v1284, 0.0
    %1291 = vadd.xlane.f32.xlu0 %v1290
    %v1292 = vpop.xlane.xlu0 %1291
    %v1293 = vsel %vm568, %v1286, 0.0
    %1294 = vadd.xlane.f32.xlu0 %v1293
    %v1295 = vpop.xlane.xlu0 %1294
    %v1296 = vrcp.pop %v1289
    %v1297 = vmul.f32 %v1282, %v1296
    %v1298 = vrcp.pop %v1292
    %v1299 = vmul.f32 %v1284, %v1298
    %v1300 = vrcp.pop %v1295
    %v1301 = vmul.f32 %v1286, %v1300
    %1302 = vrot.lane.b32.xlu0 %v436, 32
    %v1303 = vpop.permute.xlu0 %1302
    %1304 = vrot.lane.b32.xlu0 %v441, 32
    %v1305 = vpop.permute.xlu0 %1304
    %1306 = vrot.lane.b32.xlu0 %v446, 32
    %v1307 = vpop.permute.xlu0 %1306
    %v1311 = vsel %vm561, %v1297, 0
    %v1314 = vsel %vm561, %v1299, 0
    %v1317 = vsel %vm561, %v1301, 0
    %v1319 = vsel %vm25, %v1307, 0
    %1321 = vmatprep.subr.mxu0 0.0
    %1322 = vmatpush1.msra.mxu0 %v1303
    %1323 = vmatprep.subr.mxu0 0.0
    %1324 = vmatpush1.msra.mxu0 %v1305
    %1325 = vmatprep.subr.mxu0 0.0
    %1326 = vmatpush1.msra.mxu0 %v1319
    %1327 = vmatprep.subr.mxu0 0.0
    %1328 = vmatpush1.msra.mxu0 0.0
    %1329 = vmatprep.subr.mxu0 0.0
    %1330 = vmatpush1.msra.mxu0 0.0
    %1331 = vmatprep.subr.mxu0 0.0
    %1332 = vmatpush1.msra.mxu0 0.0
    %1333 = vmatprep.subr.mxu0 0.0
    %1334 = vmatpush1.msra.mxu0 0.0
    %1335 = vmatprep.subr.mxu0 0.0
    %1336 = vmatpush1.msra.mxu0 0.0
    %1337 = vmatprep.subr.mxu0 0.0
    %1338 = vmatpush1.msra.mxu0 0.0
    %1339 = vmatprep.subr.mxu0 0.0
    %1340 = vmatpush1.msra.mxu0 0.0
    %1341 = vmatprep.subr.mxu0 0.0
    %1342 = vmatpush1.msra.mxu0 0.0
    %1343 = vmatprep.subr.mxu0 0.0
    %1344 = vmatpush1.msra.mxu0 0.0
    %1345 = vmatprep.subr.mxu0 0.0
    %1346 = vmatpush1.msra.mxu0 0.0
    %1347 = vmatprep.subr.mxu0 0.0
    %1348 = vmatpush1.msra.mxu0 0.0
    %1349 = vmatprep.subr.mxu0 0.0
    %1350 = vmatpush1.msra.mxu0 0.0
    %1351 = vmatprep.subr.mxu0 0.0
    %1352 = vmatpush1.msra.mxu0 0.0
    %1353 = vmatprep.subr.mxu0 0.0
    %1354 = vmatpush1.msra.mxu0 0.0
    %1355 = vmatprep.subr.mxu0 0.0
    %1356 = vmatpush1.msra.mxu0 0.0
    %1357 = vmatprep.subr.mxu0 0.0
    %1358 = vmatpush1.msra.mxu0 0.0
    %1359 = vmatprep.subr.mxu0 0.0
    %1360 = vmatpush1.msra.mxu0 0.0
    %1361 = vmatprep.subr.mxu0 0.0
    %1362 = vmatpush1.msra.mxu0 0.0
    %1363 = vmatprep.subr.mxu0 0.0
    %1364 = vmatpush1.msra.mxu0 0.0
    %1365 = vmatprep.subr.mxu0 0.0
    %1366 = vmatpush1.msra.mxu0 0.0
    %1367 = vmatprep.subr.mxu0 0.0
    %1368 = vmatpush1.msra.mxu0 0.0
    %1369 = vmatprep.subr.mxu0 0.0
    %1370 = vmatpush1.msra.mxu0 0.0
    %1371 = vmatprep.subr.mxu0 0.0
    %1372 = vmatpush1.msra.mxu0 0.0
    %1373 = vmatprep.subr.mxu0 0.0
    %1374 = vmatpush1.msra.mxu0 0.0
    %1375 = vmatprep.subr.mxu0 0.0
    %1376 = vmatpush1.msra.mxu0 0.0
    %1377 = vmatprep.subr.mxu0 0.0
    %1378 = vmatpush1.msra.mxu0 0.0
    %1379 = vmatprep.subr.mxu0 0.0
    %1380 = vmatpush1.msra.mxu0 0.0
    %1381 = vmatprep.subr.mxu0 0.0
    %1382 = vmatpush1.msra.mxu0 0.0
    %1383 = vmatprep.subr.mxu0 0.0
    %1384 = vmatpush1.msra.mxu0 0.0
    %1385 = vmatprep.mubr.f32.mxu0 0.0
    %1386 = vmatmul.mubr.f32.gmra.mrb[0].mxu0 %v1311
    %v1387 = vpop.f32.mrb[0].mxu0
    %v1388 = vadd.f32 0.0, %v1387
    %v1389 = vpop.f32.mrb[0].mxu0
    %1390 = vmatprep.mubr.f32.mxu0 0.0
    %1391 = vmatmul.mubr.f32.gmra.mrb[0].mxu0 %v1314
    %v1392 = vpop.f32.mrb[0].mxu0
    %v1393 = vadd.f32 0.0, %v1392
    %v1394 = vpop.f32.mrb[0].mxu0
    %1395 = vmatprep.mubr.f32.mxu0 0.0
    %1396 = vmatmul.mubr.f32.gmra.mrb[0].mxu0 %v1317
    %v1397 = vpop.f32.mrb[0].mxu0
    %v1398 = vadd.f32 0.0, %v1397
    %v1399 = vpop.f32.mrb[0].mxu0
    %1400 = vdwg.mxu0
    %v1401 = vadd.f32 %v1162, %v1388
    %v1402 = vadd.f32 %v1163, %v1393
    %v1403 = vadd.f32 %v1164, %v1398
    %vm1406 = vcmask 1046528
    %v1407 = vrot.slane %v347, 1
    %v1408 = vrot.slane %v352, 1
    %v1409 = vsel %vm1406, %v1407, %v1408
    %v1410 = vrot.slane %v357, 1
    %v1411 = vsel %vm1406, %v1408, %v1410
    %1412 = vrot.lane.b32.xlu0 %v1409, 96
    %v1413 = vpop.permute.xlu0 %1412
    %1414 = vrot.lane.b32.xlu0 %v1411, 96
    %v1415 = vpop.permute.xlu0 %1414
    %1416 = vrot.lane.b32.xlu0 %v1410, 96
    %v1417 = vpop.permute.xlu0 %1416
    %v1418 = vsel %vm468, %v1409, 0
    %v1420 = vsel %vm468, %v1411, 0
    %v1422 = vsel %vm468, %v1410, 0
    %v1424 = vsel %vm468, %v1413, 0
    %v1426 = vsel %vm468, %v1415, 0
    %v1428 = vsel %vm468, %v1417, 0
    %1430 = vmatprep.subr.mxu0 0.0
    %1431 = vmatpush1.xpose.msra.mxu0 %v1424
    %1432 = vmatprep.subr.mxu0 0.0
    %1433 = vmatpush1.xpose.msra.mxu0 %v1426
    %1434 = vmatprep.subr.mxu0 0.0
    %1435 = vmatpush1.xpose.msra.mxu0 %v1428
    %1436 = vmatprep.subr.mxu0 0.0
    %1437 = vmatpush1.xpose.msra.mxu0 0.0
    %1438 = vmatprep.subr.mxu0 0.0
    %1439 = vmatpush1.xpose.msra.mxu0 0.0
    %1440 = vmatprep.subr.mxu0 0.0
    %1441 = vmatpush1.xpose.msra.mxu0 0.0
    %1442 = vmatprep.subr.mxu0 0.0
    %1443 = vmatpush1.xpose.msra.mxu0 0.0
    %1444 = vmatprep.subr.mxu0 0.0
    %1445 = vmatpush1.xpose.msra.mxu0 0.0
    %1446 = vmatprep.subr.mxu0 0.0
    %1447 = vmatpush1.xpose.msra.mxu0 0.0
    %1448 = vmatprep.subr.mxu0 0.0
    %1449 = vmatpush1.xpose.msra.mxu0 0.0
    %1450 = vmatprep.subr.mxu0 0.0
    %1451 = vmatpush1.xpose.msra.mxu0 0.0
    %1452 = vmatprep.subr.mxu0 0.0
    %1453 = vmatpush1.xpose.msra.mxu0 0.0
    %1454 = vmatprep.subr.mxu0 0.0
    %1455 = vmatpush1.xpose.msra.mxu0 0.0
    %1456 = vmatprep.subr.mxu0 0.0
    %1457 = vmatpush1.xpose.msra.mxu0 0.0
    %1458 = vmatprep.subr.mxu0 0.0
    %1459 = vmatpush1.xpose.msra.mxu0 0.0
    %1460 = vmatprep.subr.mxu0 0.0
    %1461 = vmatpush1.xpose.msra.mxu0 0.0
    %1462 = vmatprep.subr.mxu0 0.0
    %1463 = vmatpush1.xpose.msra.mxu0 0.0
    %1464 = vmatprep.subr.mxu0 0.0
    %1465 = vmatpush1.xpose.msra.mxu0 0.0
    %1466 = vmatprep.subr.mxu0 0.0
    %1467 = vmatpush1.xpose.msra.mxu0 0.0
    %1468 = vmatprep.subr.mxu0 0.0
    %1469 = vmatpush1.xpose.msra.mxu0 0.0
    %1470 = vmatprep.subr.mxu0 0.0
    %1471 = vmatpush1.xpose.msra.mxu0 0.0
    %1472 = vmatprep.subr.mxu0 0.0
    %1473 = vmatpush1.xpose.msra.mxu0 0.0
    %1474 = vmatprep.subr.mxu0 0.0
    %1475 = vmatpush1.xpose.msra.mxu0 0.0
    %1476 = vmatprep.subr.mxu0 0.0
    %1477 = vmatpush1.xpose.msra.mxu0 0.0
    %1478 = vmatprep.subr.mxu0 0.0
    %1479 = vmatpush1.xpose.msra.mxu0 0.0
    %1480 = vmatprep.subr.mxu0 0.0
    %1481 = vmatpush1.xpose.msra.mxu0 0.0
    %1482 = vmatprep.subr.mxu0 0.0
    %1483 = vmatpush1.xpose.msra.mxu0 0.0
    %1484 = vmatprep.subr.mxu0 0.0
    %1485 = vmatpush1.xpose.msra.mxu0 0.0
    %1486 = vmatprep.subr.mxu0 0.0
    %1487 = vmatpush1.xpose.msra.mxu0 0.0
    %1488 = vmatprep.subr.mxu0 0.0
    %1489 = vmatpush1.xpose.msra.mxu0 0.0
    %1490 = vmatprep.subr.mxu0 0.0
    %1491 = vmatpush1.xpose.msra.mxu0 0.0
    %1492 = vmatprep.subr.mxu0 0.0
    %1493 = vmatpush1.xpose.msra.mxu0 0.0
    %1494 = vmatprep.mubr.f32.mxu0 0.0
    %1495 = vmatmul.mubr.f32.gmra.mrb[0].mxu0 %v1418
    %v1496 = vpop.f32.mrb[0].mxu0
    %v1497 = vadd.f32 0.0, %v1496
    %v1498 = vpop.f32.mrb[0].mxu0
    %1499 = vmatprep.mubr.f32.mxu0 0.0
    %1500 = vmatmul.mubr.f32.gmra.mrb[0].mxu0 %v1420
    %v1501 = vpop.f32.mrb[0].mxu0
    %v1502 = vadd.f32 0.0, %v1501
    %v1503 = vpop.f32.mrb[0].mxu0
    %1504 = vmatprep.mubr.f32.mxu0 0.0
    %1505 = vmatmul.mubr.f32.gmra.mrb[0].mxu0 %v1422
    %v1506 = vpop.f32.mrb[0].mxu0
    %v1507 = vadd.f32 0.0, %v1506
    %v1508 = vpop.f32.mrb[0].mxu0
    %1509 = vdwg.mxu0
    %v1510 = vsel %vm561, %v1497, -inf
    %1511 = vmax.xlane.f32.xlu0 %v1510
    %v1512 = vpop.xlane.xlu0 %1511
    %v1513 = vsel %vm561, %v1502, -inf
    %1514 = vmax.xlane.f32.xlu0 %v1513
    %v1515 = vpop.xlane.xlu0 %1514
    %v1516 = vsel %vm568, %v1507, -inf
    %1517 = vmax.xlane.f32.xlu0 %v1516
    %v1518 = vpop.xlane.xlu0 %1517
    %v1519 = vsub.f32 %v1497, %v1512
    %v1520 = vsub.f32 %v1502, %v1515
    %v1521 = vsub.f32 %v1507, %v1518
    %v1522 = vmul.f32 %v1519, 1.442695
    %v1523 = vpow.pop %v1522
    %v1524 = vmul.f32 %v1520, 1.442695
    %v1525 = vpow.pop %v1524
    %v1526 = vmul.f32 %v1521, 1.442695
    %v1527 = vpow.pop %v1526
    %v1528 = vsel %vm561, %v1523, 0.0
    %1529 = vadd.xlane.f32.xlu0 %v1528
    %v1530 = vpop.xlane.xlu0 %1529
    %v1531 = vsel %vm561, %v1525, 0.0
    %1532 = vadd.xlane.f32.xlu0 %v1531
    %v1533 = vpop.xlane.xlu0 %1532
    %v1534 = vsel %vm568, %v1527, 0.0
    %1535 = vadd.xlane.f32.xlu0 %v1534
    %v1536 = vpop.xlane.xlu0 %1535
    %v1537 = vrcp.pop %v1530
    %v1538 = vmul.f32 %v1523, %v1537
    %v1539 = vrcp.pop %v1533
    %v1540 = vmul.f32 %v1525, %v1539
    %v1541 = vrcp.pop %v1536
    %v1542 = vmul.f32 %v1527, %v1541
    %1543 = vrot.lane.b32.xlu0 %v1409, 120
    %v1544 = vpop.permute.xlu0 %1543
    %1545 = vrot.lane.b32.xlu0 %v1411, 120
    %v1546 = vpop.permute.xlu0 %1545
    %1547 = vrot.lane.b32.xlu0 %v1410, 120
    %v1548 = vpop.permute.xlu0 %1547
    %1549 = vrot.lane.b32.xlu0 %v1409, 88
    %v1550 = vpop.permute.xlu0 %1549
    %1551 = vrot.lane.b32.xlu0 %v1411, 88
    %v1552 = vpop.permute.xlu0 %1551
    %1553 = vrot.lane.b32.xlu0 %v1410, 88
    %v1554 = vpop.permute.xlu0 %1553
    %v1555 = vsel %vm468, %v1544, 0
    %v1557 = vsel %vm468, %v1546, 0
    %v1559 = vsel %vm468, %v1548, 0
    %v1561 = vsel %vm468, %v1550, 0
    %v1563 = vsel %vm468, %v1552, 0
    %v1565 = vsel %vm468, %v1554, 0
    %1567 = vmatprep.subr.mxu0 0.0
    %1568 = vmatpush1.xpose.msra.mxu0 %v1561
    %1569 = vmatprep.subr.mxu0 0.0
    %1570 = vmatpush1.xpose.msra.mxu0 %v1563
    %1571 = vmatprep.subr.mxu0 0.0
    %1572 = vmatpush1.xpose.msra.mxu0 %v1565
    %1573 = vmatprep.subr.mxu0 0.0
    %1574 = vmatpush1.xpose.msra.mxu0 0.0
    %1575 = vmatprep.subr.mxu0 0.0
    %1576 = vmatpush1.xpose.msra.mxu0 0.0
    %1577 = vmatprep.subr.mxu0 0.0
    %1578 = vmatpush1.xpose.msra.mxu0 0.0
    %1579 = vmatprep.subr.mxu0 0.0
    %1580 = vmatpush1.xpose.msra.mxu0 0.0
    %1581 = vmatprep.subr.mxu0 0.0
    %1582 = vmatpush1.xpose.msra.mxu0 0.0
    %1583 = vmatprep.subr.mxu0 0.0
    %1584 = vmatpush1.xpose.msra.mxu0 0.0
    %1585 = vmatprep.subr.mxu0 0.0
    %1586 = vmatpush1.xpose.msra.mxu0 0.0
    %1587 = vmatprep.subr.mxu0 0.0
    %1588 = vmatpush1.xpose.msra.mxu0 0.0
    %1589 = vmatprep.subr.mxu0 0.0
    %1590 = vmatpush1.xpose.msra.mxu0 0.0
    %1591 = vmatprep.subr.mxu0 0.0
    %1592 = vmatpush1.xpose.msra.mxu0 0.0
    %1593 = vmatprep.subr.mxu0 0.0
    %1594 = vmatpush1.xpose.msra.mxu0 0.0
    %1595 = vmatprep.subr.mxu0 0.0
    %1596 = vmatpush1.xpose.msra.mxu0 0.0
    %1597 = vmatprep.subr.mxu0 0.0
    %1598 = vmatpush1.xpose.msra.mxu0 0.0
    %1599 = vmatprep.subr.mxu0 0.0
    %1600 = vmatpush1.xpose.msra.mxu0 0.0
    %1601 = vmatprep.subr.mxu0 0.0
    %1602 = vmatpush1.xpose.msra.mxu0 0.0
    %1603 = vmatprep.subr.mxu0 0.0
    %1604 = vmatpush1.xpose.msra.mxu0 0.0
    %1605 = vmatprep.subr.mxu0 0.0
    %1606 = vmatpush1.xpose.msra.mxu0 0.0
    %1607 = vmatprep.subr.mxu0 0.0
    %1608 = vmatpush1.xpose.msra.mxu0 0.0
    %1609 = vmatprep.subr.mxu0 0.0
    %1610 = vmatpush1.xpose.msra.mxu0 0.0
    %1611 = vmatprep.subr.mxu0 0.0
    %1612 = vmatpush1.xpose.msra.mxu0 0.0
    %1613 = vmatprep.subr.mxu0 0.0
    %1614 = vmatpush1.xpose.msra.mxu0 0.0
    %1615 = vmatprep.subr.mxu0 0.0
    %1616 = vmatpush1.xpose.msra.mxu0 0.0
    %1617 = vmatprep.subr.mxu0 0.0
    %1618 = vmatpush1.xpose.msra.mxu0 0.0
    %1619 = vmatprep.subr.mxu0 0.0
    %1620 = vmatpush1.xpose.msra.mxu0 0.0
    %1621 = vmatprep.subr.mxu0 0.0
    %1622 = vmatpush1.xpose.msra.mxu0 0.0
    %1623 = vmatprep.subr.mxu0 0.0
    %1624 = vmatpush1.xpose.msra.mxu0 0.0
    %1625 = vmatprep.subr.mxu0 0.0
    %1626 = vmatpush1.xpose.msra.mxu0 0.0
    %1627 = vmatprep.subr.mxu0 0.0
    %1628 = vmatpush1.xpose.msra.mxu0 0.0
    %1629 = vmatprep.subr.mxu0 0.0
    %1630 = vmatpush1.xpose.msra.mxu0 0.0
    %1631 = vmatprep.mubr.f32.mxu0 0.0
    %1632 = vmatmul.mubr.f32.gmra.mrb[0].mxu0 %v1555
    %v1633 = vpop.f32.mrb[0].mxu0
    %v1634 = vadd.f32 0.0, %v1633
    %v1635 = vpop.f32.mrb[0].mxu0
    %1636 = vmatprep.mubr.f32.mxu0 0.0
    %1637 = vmatmul.mubr.f32.gmra.mrb[0].mxu0 %v1557
    %v1638 = vpop.f32.mrb[0].mxu0
    %v1639 = vadd.f32 0.0, %v1638
    %v1640 = vpop.f32.mrb[0].mxu0
    %1641 = vmatprep.mubr.f32.mxu0 0.0
    %1642 = vmatmul.mubr.f32.gmra.mrb[0].mxu0 %v1559
    %v1643 = vpop.f32.mrb[0].mxu0
    %v1644 = vadd.f32 0.0, %v1643
    %v1645 = vpop.f32.mrb[0].mxu0
    %1646 = vdwg.mxu0
    %v1647 = vsel %vm561, %v1634, -inf
    %1648 = vmax.xlane.f32.xlu0 %v1647
    %v1649 = vpop.xlane.xlu0 %1648
    %v1650 = vsel %vm561, %v1639, -inf
    %1651 = vmax.xlane.f32.xlu0 %v1650
    %v1652 = vpop.xlane.xlu0 %1651
    %v1653 = vsel %vm568, %v1644, -inf
    %1654 = vmax.xlane.f32.xlu0 %v1653
    %v1655 = vpop.xlane.xlu0 %1654
    %v1656 = vsub.f32 %v1634, %v1649
    %v1657 = vsub.f32 %v1639, %v1652
    %v1658 = vsub.f32 %v1644, %v1655
    %v1659 = vmul.f32 %v1656, 1.442695
    %v1660 = vpow.pop %v1659
    %v1661 = vmul.f32 %v1657, 1.442695
    %v1662 = vpow.pop %v1661
    %v1663 = vmul.f32 %v1658, 1.442695
    %v1664 = vpow.pop %v1663
    %v1665 = vsel %vm561, %v1660, 0.0
    %1666 = vadd.xlane.f32.xlu0 %v1665
    %v1667 = vpop.xlane.xlu0 %1666
    %v1668 = vsel %vm561, %v1662, 0.0
    %1669 = vadd.xlane.f32.xlu0 %v1668
    %v1670 = vpop.xlane.xlu0 %1669
    %v1671 = vsel %vm568, %v1664, 0.0
    %1672 = vadd.xlane.f32.xlu0 %v1671
    %v1673 = vpop.xlane.xlu0 %1672
    %v1674 = vrcp.pop %v1667
    %v1675 = vmul.f32 %v1660, %v1674
    %v1676 = vrcp.pop %v1670
    %v1677 = vmul.f32 %v1662, %v1676
    %v1678 = vrcp.pop %v1673
    %v1679 = vmul.f32 %v1664, %v1678
    %v1682 = vrot.slane %v446, 1
    %v1683 = vrot.slane %v451, 1
    %v1684 = vsel %vm1406, %v1682, %v1683
    %v1685 = vrot.slane %v456, 1
    %v1686 = vsel %vm1406, %v1683, %v1685
    %1687 = vrot.lane.b32.xlu0 %v1684, 96
    %v1688 = vpop.permute.xlu0 %1687
    %1689 = vrot.lane.b32.xlu0 %v1686, 96
    %v1690 = vpop.permute.xlu0 %1689
    %1691 = vrot.lane.b32.xlu0 %v1685, 96
    %v1692 = vpop.permute.xlu0 %1691
    %v1696 = vsel %vm561, %v1675, 0
    %v1699 = vsel %vm561, %v1677, 0
    %v1702 = vsel %vm561, %v1679, 0
    %v1704 = vsel %vm25, %v1692, 0
    %1706 = vmatprep.subr.mxu0 0.0
    %1707 = vmatpush1.msra.mxu0 %v1688
    %1708 = vmatprep.subr.mxu0 0.0
    %1709 = vmatpush1.msra.mxu0 %v1690
    %1710 = vmatprep.subr.mxu0 0.0
    %1711 = vmatpush1.msra.mxu0 %v1704
    %1712 = vmatprep.subr.mxu0 0.0
    %1713 = vmatpush1.msra.mxu0 0.0
    %1714 = vmatprep.subr.mxu0 0.0
    %1715 = vmatpush1.msra.mxu0 0.0
    %1716 = vmatprep.subr.mxu0 0.0
    %1717 = vmatpush1.msra.mxu0 0.0
    %1718 = vmatprep.subr.mxu0 0.0
    %1719 = vmatpush1.msra.mxu0 0.0
    %1720 = vmatprep.subr.mxu0 0.0
    %1721 = vmatpush1.msra.mxu0 0.0
    %1722 = vmatprep.subr.mxu0 0.0
    %1723 = vmatpush1.msra.mxu0 0.0
    %1724 = vmatprep.subr.mxu0 0.0
    %1725 = vmatpush1.msra.mxu0 0.0
    %1726 = vmatprep.subr.mxu0 0.0
    %1727 = vmatpush1.msra.mxu0 0.0
    %1728 = vmatprep.subr.mxu0 0.0
    %1729 = vmatpush1.msra.mxu0 0.0
    %1730 = vmatprep.subr.mxu0 0.0
    %1731 = vmatpush1.msra.mxu0 0.0
    %1732 = vmatprep.subr.mxu0 0.0
    %1733 = vmatpush1.msra.mxu0 0.0
    %1734 = vmatprep.subr.mxu0 0.0
    %1735 = vmatpush1.msra.mxu0 0.0
    %1736 = vmatprep.subr.mxu0 0.0
    %1737 = vmatpush1.msra.mxu0 0.0
    %1738 = vmatprep.subr.mxu0 0.0
    %1739 = vmatpush1.msra.mxu0 0.0
    %1740 = vmatprep.subr.mxu0 0.0
    %1741 = vmatpush1.msra.mxu0 0.0
    %1742 = vmatprep.subr.mxu0 0.0
    %1743 = vmatpush1.msra.mxu0 0.0
    %1744 = vmatprep.subr.mxu0 0.0
    %1745 = vmatpush1.msra.mxu0 0.0
    %1746 = vmatprep.subr.mxu0 0.0
    %1747 = vmatpush1.msra.mxu0 0.0
    %1748 = vmatprep.subr.mxu0 0.0
    %1749 = vmatpush1.msra.mxu0 0.0
    %1750 = vmatprep.subr.mxu0 0.0
    %1751 = vmatpush1.msra.mxu0 0.0
    %1752 = vmatprep.subr.mxu0 0.0
    %1753 = vmatpush1.msra.mxu0 0.0
    %1754 = vmatprep.subr.mxu0 0.0
    %1755 = vmatpush1.msra.mxu0 0.0
    %1756 = vmatprep.subr.mxu0 0.0
    %1757 = vmatpush1.msra.mxu0 0.0
    %1758 = vmatprep.subr.mxu0 0.0
    %1759 = vmatpush1.msra.mxu0 0.0
    %1760 = vmatprep.subr.mxu0 0.0
    %1761 = vmatpush1.msra.mxu0 0.0
    %1762 = vmatprep.subr.mxu0 0.0
    %1763 = vmatpush1.msra.mxu0 0.0
    %1764 = vmatprep.subr.mxu0 0.0
    %1765 = vmatpush1.msra.mxu0 0.0
    %1766 = vmatprep.subr.mxu0 0.0
    %1767 = vmatpush1.msra.mxu0 0.0
    %1768 = vmatprep.subr.mxu0 0.0
    %1769 = vmatpush1.msra.mxu0 0.0
    %1770 = vmatprep.mubr.f32.mxu0 0.0
    %1771 = vmatmul.mubr.f32.gmra.mrb[0].mxu0 %v1696
    %v1772 = vpop.f32.mrb[0].mxu0
    %v1773 = vadd.f32 0.0, %v1772
    %v1774 = vpop.f32.mrb[0].mxu0
    %1775 = vmatprep.mubr.f32.mxu0 0.0
    %1776 = vmatmul.mubr.f32.gmra.mrb[0].mxu0 %v1699
    %v1777 = vpop.f32.mrb[0].mxu0
    %v1778 = vadd.f32 0.0, %v1777
    %v1779 = vpop.f32.mrb[0].mxu0
    %1780 = vmatprep.mubr.f32.mxu0 0.0
    %1781 = vmatmul.mubr.f32.gmra.mrb[0].mxu0 %v1702
    %v1782 = vpop.f32.mrb[0].mxu0
    %v1783 = vadd.f32 0.0, %v1782
    %v1784 = vpop.f32.mrb[0].mxu0
    %1785 = vdwg.mxu0
    %v1789 = vsel %vm561, %v1538, 0
    %v1792 = vsel %vm561, %v1540, 0
    %v1795 = vsel %vm561, %v1542, 0
    %v1797 = vsel %vm25, %v1685, 0
    %1799 = vmatprep.subr.mxu0 0.0
    %1800 = vmatpush1.msra.mxu0 %v1684
    %1801 = vmatprep.subr.mxu0 0.0
    %1802 = vmatpush1.msra.mxu0 %v1686
    %1803 = vmatprep.subr.mxu0 0.0
    %1804 = vmatpush1.msra.mxu0 %v1797
    %1805 = vmatprep.subr.mxu0 0.0
    %1806 = vmatpush1.msra.mxu0 0.0
    %1807 = vmatprep.subr.mxu0 0.0
    %1808 = vmatpush1.msra.mxu0 0.0
    %1809 = vmatprep.subr.mxu0 0.0
    %1810 = vmatpush1.msra.mxu0 0.0
    %1811 = vmatprep.subr.mxu0 0.0
    %1812 = vmatpush1.msra.mxu0 0.0
    %1813 = vmatprep.subr.mxu0 0.0
    %1814 = vmatpush1.msra.mxu0 0.0
    %1815 = vmatprep.subr.mxu0 0.0
    %1816 = vmatpush1.msra.mxu0 0.0
    %1817 = vmatprep.subr.mxu0 0.0
    %1818 = vmatpush1.msra.mxu0 0.0
    %1819 = vmatprep.subr.mxu0 0.0
    %1820 = vmatpush1.msra.mxu0 0.0
    %1821 = vmatprep.subr.mxu0 0.0
    %1822 = vmatpush1.msra.mxu0 0.0
    %1823 = vmatprep.subr.mxu0 0.0
    %1824 = vmatpush1.msra.mxu0 0.0
    %1825 = vmatprep.subr.mxu0 0.0
    %1826 = vmatpush1.msra.mxu0 0.0
    %1827 = vmatprep.subr.mxu0 0.0
    %1828 = vmatpush1.msra.mxu0 0.0
    %1829 = vmatprep.subr.mxu0 0.0
    %1830 = vmatpush1.msra.mxu0 0.0
    %1831 = vmatprep.subr.mxu0 0.0
    %1832 = vmatpush1.msra.mxu0 0.0
    %1833 = vmatprep.subr.mxu0 0.0
    %1834 = vmatpush1.msra.mxu0 0.0
    %1835 = vmatprep.subr.mxu0 0.0
    %1836 = vmatpush1.msra.mxu0 0.0
    %1837 = vmatprep.subr.mxu0 0.0
    %1838 = vmatpush1.msra.mxu0 0.0
    %1839 = vmatprep.subr.mxu0 0.0
    %1840 = vmatpush1.msra.mxu0 0.0
    %1841 = vmatprep.subr.mxu0 0.0
    %1842 = vmatpush1.msra.mxu0 0.0
    %1843 = vmatprep.subr.mxu0 0.0
    %1844 = vmatpush1.msra.mxu0 0.0
    %1845 = vmatprep.subr.mxu0 0.0
    %1846 = vmatpush1.msra.mxu0 0.0
    %1847 = vmatprep.subr.mxu0 0.0
    %1848 = vmatpush1.msra.mxu0 0.0
    %1849 = vmatprep.subr.mxu0 0.0
    %1850 = vmatpush1.msra.mxu0 0.0
    %1851 = vmatprep.subr.mxu0 0.0
    %1852 = vmatpush1.msra.mxu0 0.0
    %1853 = vmatprep.subr.mxu0 0.0
    %1854 = vmatpush1.msra.mxu0 0.0
    %1855 = vmatprep.subr.mxu0 0.0
    %1856 = vmatpush1.msra.mxu0 0.0
    %1857 = vmatprep.subr.mxu0 0.0
    %1858 = vmatpush1.msra.mxu0 0.0
    %1859 = vmatprep.subr.mxu0 0.0
    %1860 = vmatpush1.msra.mxu0 0.0
    %1861 = vmatprep.subr.mxu0 0.0
    %1862 = vmatpush1.msra.mxu0 0.0
    %1863 = vmatprep.mubr.f32.mxu0 0.0
    %1864 = vmatmul.mubr.f32.gmra.mrb[0].mxu0 %v1789
    %v1865 = vpop.f32.mrb[0].mxu0
    %v1866 = vadd.f32 %v1773, %v1865
    %v1867 = vpop.f32.mrb[0].mxu0
    %1868 = vmatprep.mubr.f32.mxu0 0.0
    %1869 = vmatmul.mubr.f32.gmra.mrb[0].mxu0 %v1792
    %v1870 = vpop.f32.mrb[0].mxu0
    %v1871 = vadd.f32 %v1778, %v1870
    %v1872 = vpop.f32.mrb[0].mxu0
    %1873 = vmatprep.mubr.f32.mxu0 0.0
    %1874 = vmatmul.mubr.f32.gmra.mrb[0].mxu0 %v1795
    %v1875 = vpop.f32.mrb[0].mxu0
    %v1876 = vadd.f32 %v1783, %v1875
    %v1877 = vpop.f32.mrb[0].mxu0
    %1878 = vdwg.mxu0
    %1879 = vrot.lane.b32.xlu0 %v1409, 112
    %v1880 = vpop.permute.xlu0 %1879
    %1881 = vrot.lane.b32.xlu0 %v1411, 112
    %v1882 = vpop.permute.xlu0 %1881
    %1883 = vrot.lane.b32.xlu0 %v1410, 112
    %v1884 = vpop.permute.xlu0 %1883
    %1885 = vrot.lane.b32.xlu0 %v1409, 80
    %v1886 = vpop.permute.xlu0 %1885
    %1887 = vrot.lane.b32.xlu0 %v1411, 80
    %v1888 = vpop.permute.xlu0 %1887
    %1889 = vrot.lane.b32.xlu0 %v1410, 80
    %v1890 = vpop.permute.xlu0 %1889
    %v1891 = vsel %vm468, %v1880, 0
    %v1893 = vsel %vm468, %v1882, 0
    %v1895 = vsel %vm468, %v1884, 0
    %v1897 = vsel %vm468, %v1886, 0
    %v1899 = vsel %vm468, %v1888, 0
    %v1901 = vsel %vm468, %v1890, 0
    %1903 = vmatprep.subr.mxu0 0.0
    %1904 = vmatpush1.xpose.msra.mxu0 %v1897
    %1905 = vmatprep.subr.mxu0 0.0
    %1906 = vmatpush1.xpose.msra.mxu0 %v1899
    %1907 = vmatprep.subr.mxu0 0.0
    %1908 = vmatpush1.xpose.msra.mxu0 %v1901
    %1909 = vmatprep.subr.mxu0 0.0
    %1910 = vmatpush1.xpose.msra.mxu0 0.0
    %1911 = vmatprep.subr.mxu0 0.0
    %1912 = vmatpush1.xpose.msra.mxu0 0.0
    %1913 = vmatprep.subr.mxu0 0.0
    %1914 = vmatpush1.xpose.msra.mxu0 0.0
    %1915 = vmatprep.subr.mxu0 0.0
    %1916 = vmatpush1.xpose.msra.mxu0 0.0
    %1917 = vmatprep.subr.mxu0 0.0
    %1918 = vmatpush1.xpose.msra.mxu0 0.0
    %1919 = vmatprep.subr.mxu0 0.0
    %1920 = vmatpush1.xpose.msra.mxu0 0.0
    %1921 = vmatprep.subr.mxu0 0.0
    %1922 = vmatpush1.xpose.msra.mxu0 0.0
    %1923 = vmatprep.subr.mxu0 0.0
    %1924 = vmatpush1.xpose.msra.mxu0 0.0
    %1925 = vmatprep.subr.mxu0 0.0
    %1926 = vmatpush1.xpose.msra.mxu0 0.0
    %1927 = vmatprep.subr.mxu0 0.0
    %1928 = vmatpush1.xpose.msra.mxu0 0.0
    %1929 = vmatprep.subr.mxu0 0.0
    %1930 = vmatpush1.xpose.msra.mxu0 0.0
    %1931 = vmatprep.subr.mxu0 0.0
    %1932 = vmatpush1.xpose.msra.mxu0 0.0
    %1933 = vmatprep.subr.mxu0 0.0
    %1934 = vmatpush1.xpose.msra.mxu0 0.0
    %1935 = vmatprep.subr.mxu0 0.0
    %1936 = vmatpush1.xpose.msra.mxu0 0.0
    %1937 = vmatprep.subr.mxu0 0.0
    %1938 = vmatpush1.xpose.msra.mxu0 0.0
    %1939 = vmatprep.subr.mxu0 0.0
    %1940 = vmatpush1.xpose.msra.mxu0 0.0
    %1941 = vmatprep.subr.mxu0 0.0
    %1942 = vmatpush1.xpose.msra.mxu0 0.0
    %1943 = vmatprep.subr.mxu0 0.0
    %1944 = vmatpush1.xpose.msra.mxu0 0.0
    %1945 = vmatprep.subr.mxu0 0.0
    %1946 = vmatpush1.xpose.msra.mxu0 0.0
    %1947 = vmatprep.subr.mxu0 0.0
    %1948 = vmatpush1.xpose.msra.mxu0 0.0
    %1949 = vmatprep.subr.mxu0 0.0
    %1950 = vmatpush1.xpose.msra.mxu0 0.0
    %1951 = vmatprep.subr.mxu0 0.0
    %1952 = vmatpush1.xpose.msra.mxu0 0.0
    %1953 = vmatprep.subr.mxu0 0.0
    %1954 = vmatpush1.xpose.msra.mxu0 0.0
    %1955 = vmatprep.subr.mxu0 0.0
    %1956 = vmatpush1.xpose.msra.mxu0 0.0
    %1957 = vmatprep.subr.mxu0 0.0
    %1958 = vmatpush1.xpose.msra.mxu0 0.0
    %1959 = vmatprep.subr.mxu0 0.0
    %1960 = vmatpush1.xpose.msra.mxu0 0.0
    %1961 = vmatprep.subr.mxu0 0.0
    %1962 = vmatpush1.xpose.msra.mxu0 0.0
    %1963 = vmatprep.subr.mxu0 0.0
    %1964 = vmatpush1.xpose.msra.mxu0 0.0
    %1965 = vmatprep.subr.mxu0 0.0
    %1966 = vmatpush1.xpose.msra.mxu0 0.0
    %1967 = vmatprep.mubr.f32.mxu0 0.0
    %1968 = vmatmul.mubr.f32.gmra.mrb[0].mxu0 %v1891
    %v1969 = vpop.f32.mrb[0].mxu0
    %v1970 = vadd.f32 0.0, %v1969
    %v1971 = vpop.f32.mrb[0].mxu0
    %1972 = vmatprep.mubr.f32.mxu0 0.0
    %1973 = vmatmul.mubr.f32.gmra.mrb[0].mxu0 %v1893
    %v1974 = vpop.f32.mrb[0].mxu0
    %v1975 = vadd.f32 0.0, %v1974
    %v1976 = vpop.f32.mrb[0].mxu0
    %1977 = vmatprep.mubr.f32.mxu0 0.0
    %1978 = vmatmul.mubr.f32.gmra.mrb[0].mxu0 %v1895
    %v1979 = vpop.f32.mrb[0].mxu0
    %v1980 = vadd.f32 0.0, %v1979
    %v1981 = vpop.f32.mrb[0].mxu0
    %1982 = vdwg.mxu0
    %v1983 = vsel %vm561, %v1970, -inf
    %1984 = vmax.xlane.f32.xlu0 %v1983
    %v1985 = vpop.xlane.xlu0 %1984
    %v1986 = vsel %vm561, %v1975, -inf
    %1987 = vmax.xlane.f32.xlu0 %v1986
    %v1988 = vpop.xlane.xlu0 %1987
    %v1989 = vsel %vm568, %v1980, -inf
    %1990 = vmax.xlane.f32.xlu0 %v1989
    %v1991 = vpop.xlane.xlu0 %1990
    %v1992 = vsub.f32 %v1970, %v1985
    %v1993 = vsub.f32 %v1975, %v1988
    %v1994 = vsub.f32 %v1980, %v1991
    %v1995 = vmul.f32 %v1992, 1.442695
    %v1996 = vpow.pop %v1995
    %v1997 = vmul.f32 %v1993, 1.442695
    %v1998 = vpow.pop %v1997
    %v1999 = vmul.f32 %v1994, 1.442695
    %v2000 = vpow.pop %v1999
    %v2001 = vsel %vm561, %v1996, 0.0
    %2002 = vadd.xlane.f32.xlu0 %v2001
    %v2003 = vpop.xlane.xlu0 %2002
    %v2004 = vsel %vm561, %v1998, 0.0
    %2005 = vadd.xlane.f32.xlu0 %v2004
    %v2006 = vpop.xlane.xlu0 %2005
    %v2007 = vsel %vm568, %v2000, 0.0
    %2008 = vadd.xlane.f32.xlu0 %v2007
    %v2009 = vpop.xlane.xlu0 %2008
    %v2010 = vrcp.pop %v2003
    %v2011 = vmul.f32 %v1996, %v2010
    %v2012 = vrcp.pop %v2006
    %v2013 = vmul.f32 %v1998, %v2012
    %v2014 = vrcp.pop %v2009
    %v2015 = vmul.f32 %v2000, %v2014
    %2016 = vrot.lane.b32.xlu0 %v1684, 64
    %v2017 = vpop.permute.xlu0 %2016
    %2018 = vrot.lane.b32.xlu0 %v1686, 64
    %v2019 = vpop.permute.xlu0 %2018
    %2020 = vrot.lane.b32.xlu0 %v1685, 64
    %v2021 = vpop.permute.xlu0 %2020
    %v2025 = vsel %vm561, %v2011, 0
    %v2028 = vsel %vm561, %v2013, 0
    %v2031 = vsel %vm561, %v2015, 0
    %v2033 = vsel %vm25, %v2021, 0
    %2035 = vmatprep.subr.mxu0 0.0
    %2036 = vmatpush1.msra.mxu0 %v2017
    %2037 = vmatprep.subr.mxu0 0.0
    %2038 = vmatpush1.msra.mxu0 %v2019
    %2039 = vmatprep.subr.mxu0 0.0
    %2040 = vmatpush1.msra.mxu0 %v2033
    %2041 = vmatprep.subr.mxu0 0.0
    %2042 = vmatpush1.msra.mxu0 0.0
    %2043 = vmatprep.subr.mxu0 0.0
    %2044 = vmatpush1.msra.mxu0 0.0
    %2045 = vmatprep.subr.mxu0 0.0
    %2046 = vmatpush1.msra.mxu0 0.0
    %2047 = vmatprep.subr.mxu0 0.0
    %2048 = vmatpush1.msra.mxu0 0.0
    %2049 = vmatprep.subr.mxu0 0.0
    %2050 = vmatpush1.msra.mxu0 0.0
    %2051 = vmatprep.subr.mxu0 0.0
    %2052 = vmatpush1.msra.mxu0 0.0
    %2053 = vmatprep.subr.mxu0 0.0
    %2054 = vmatpush1.msra.mxu0 0.0
    %2055 = vmatprep.subr.mxu0 0.0
    %2056 = vmatpush1.msra.mxu0 0.0
    %2057 = vmatprep.subr.mxu0 0.0
    %2058 = vmatpush1.msra.mxu0 0.0
    %2059 = vmatprep.subr.mxu0 0.0
    %2060 = vmatpush1.msra.mxu0 0.0
    %2061 = vmatprep.subr.mxu0 0.0
    %2062 = vmatpush1.msra.mxu0 0.0
    %2063 = vmatprep.subr.mxu0 0.0
    %2064 = vmatpush1.msra.mxu0 0.0
    %2065 = vmatprep.subr.mxu0 0.0
    %2066 = vmatpush1.msra.mxu0 0.0
    %2067 = vmatprep.subr.mxu0 0.0
    %2068 = vmatpush1.msra.mxu0 0.0
    %2069 = vmatprep.subr.mxu0 0.0
    %2070 = vmatpush1.msra.mxu0 0.0
    %2071 = vmatprep.subr.mxu0 0.0
    %2072 = vmatpush1.msra.mxu0 0.0
    %2073 = vmatprep.subr.mxu0 0.0
    %2074 = vmatpush1.msra.mxu0 0.0
    %2075 = vmatprep.subr.mxu0 0.0
    %2076 = vmatpush1.msra.mxu0 0.0
    %2077 = vmatprep.subr.mxu0 0.0
    %2078 = vmatpush1.msra.mxu0 0.0
    %2079 = vmatprep.subr.mxu0 0.0
    %2080 = vmatpush1.msra.mxu0 0.0
    %2081 = vmatprep.subr.mxu0 0.0
    %2082 = vmatpush1.msra.mxu0 0.0
    %2083 = vmatprep.subr.mxu0 0.0
    %2084 = vmatpush1.msra.mxu0 0.0
    %2085 = vmatprep.subr.mxu0 0.0
    %2086 = vmatpush1.msra.mxu0 0.0
    %2087 = vmatprep.subr.mxu0 0.0
    %2088 = vmatpush1.msra.mxu0 0.0
    %2089 = vmatprep.subr.mxu0 0.0
    %2090 = vmatpush1.msra.mxu0 0.0
    %2091 = vmatprep.subr.mxu0 0.0
    %2092 = vmatpush1.msra.mxu0 0.0
    %2093 = vmatprep.subr.mxu0 0.0
    %2094 = vmatpush1.msra.mxu0 0.0
    %2095 = vmatprep.subr.mxu0 0.0
    %2096 = vmatpush1.msra.mxu0 0.0
    %2097 = vmatprep.subr.mxu0 0.0
    %2098 = vmatpush1.msra.mxu0 0.0
    %2099 = vmatprep.mubr.f32.mxu0 0.0
    %2100 = vmatmul.mubr.f32.gmra.mrb[0].mxu0 %v2025
    %v2101 = vpop.f32.mrb[0].mxu0
    %v2102 = vadd.f32 0.0, %v2101
    %v2103 = vpop.f32.mrb[0].mxu0
    %2104 = vmatprep.mubr.f32.mxu0 0.0
    %2105 = vmatmul.mubr.f32.gmra.mrb[0].mxu0 %v2028
    %v2106 = vpop.f32.mrb[0].mxu0
    %v2107 = vadd.f32 0.0, %v2106
    %v2108 = vpop.f32.mrb[0].mxu0
    %2109 = vmatprep.mubr.f32.mxu0 0.0
    %2110 = vmatmul.mubr.f32.gmra.mrb[0].mxu0 %v2031
    %v2111 = vpop.f32.mrb[0].mxu0
    %v2112 = vadd.f32 0.0, %v2111
    %v2113 = vpop.f32.mrb[0].mxu0
    %2114 = vdwg.mxu0
    %v2115 = vadd.f32 %v1866, %v2102
    %v2116 = vadd.f32 %v1871, %v2107
    %v2117 = vadd.f32 %v1876, %v2112
    %2118 = vrot.lane.b32.xlu0 %v1409, 104
    %v2119 = vpop.permute.xlu0 %2118
    %2120 = vrot.lane.b32.xlu0 %v1411, 104
    %v2121 = vpop.permute.xlu0 %2120
    %2122 = vrot.lane.b32.xlu0 %v1410, 104
    %v2123 = vpop.permute.xlu0 %2122
    %2124 = vrot.lane.b32.xlu0 %v1409, 72
    %v2125 = vpop.permute.xlu0 %2124
    %2126 = vrot.lane.b32.xlu0 %v1411, 72
    %v2127 = vpop.permute.xlu0 %2126
    %2128 = vrot.lane.b32.xlu0 %v1410, 72
    %v2129 = vpop.permute.xlu0 %2128
    %v2130 = vsel %vm468, %v2119, 0
    %v2132 = vsel %vm468, %v2121, 0
    %v2134 = vsel %vm468, %v2123, 0
    %v2136 = vsel %vm468, %v2125, 0
    %v2138 = vsel %vm468, %v2127, 0
    %v2140 = vsel %vm468, %v2129, 0
    %2142 = vmatprep.subr.mxu0 0.0
    %2143 = vmatpush1.xpose.msra.mxu0 %v2136
    %2144 = vmatprep.subr.mxu0 0.0
    %2145 = vmatpush1.xpose.msra.mxu0 %v2138
    %2146 = vmatprep.subr.mxu0 0.0
    %2147 = vmatpush1.xpose.msra.mxu0 %v2140
    %2148 = vmatprep.subr.mxu0 0.0
    %2149 = vmatpush1.xpose.msra.mxu0 0.0
    %2150 = vmatprep.subr.mxu0 0.0
    %2151 = vmatpush1.xpose.msra.mxu0 0.0
    %2152 = vmatprep.subr.mxu0 0.0
    %2153 = vmatpush1.xpose.msra.mxu0 0.0
    %2154 = vmatprep.subr.mxu0 0.0
    %2155 = vmatpush1.xpose.msra.mxu0 0.0
    %2156 = vmatprep.subr.mxu0 0.0
    %2157 = vmatpush1.xpose.msra.mxu0 0.0
    %2158 = vmatprep.subr.mxu0 0.0
    %2159 = vmatpush1.xpose.msra.mxu0 0.0
    %2160 = vmatprep.subr.mxu0 0.0
    %2161 = vmatpush1.xpose.msra.mxu0 0.0
    %2162 = vmatprep.subr.mxu0 0.0
    %2163 = vmatpush1.xpose.msra.mxu0 0.0
    %2164 = vmatprep.subr.mxu0 0.0
    %2165 = vmatpush1.xpose.msra.mxu0 0.0
    %2166 = vmatprep.subr.mxu0 0.0
    %2167 = vmatpush1.xpose.msra.mxu0 0.0
    %2168 = vmatprep.subr.mxu0 0.0
    %2169 = vmatpush1.xpose.msra.mxu0 0.0
    %2170 = vmatprep.subr.mxu0 0.0
    %2171 = vmatpush1.xpose.msra.mxu0 0.0
    %2172 = vmatprep.subr.mxu0 0.0
    %2173 = vmatpush1.xpose.msra.mxu0 0.0
    %2174 = vmatprep.subr.mxu0 0.0
    %2175 = vmatpush1.xpose.msra.mxu0 0.0
    %2176 = vmatprep.subr.mxu0 0.0
    %2177 = vmatpush1.xpose.msra.mxu0 0.0
    %2178 = vmatprep.subr.mxu0 0.0
    %2179 = vmatpush1.xpose.msra.mxu0 0.0
    %2180 = vmatprep.subr.mxu0 0.0
    %2181 = vmatpush1.xpose.msra.mxu0 0.0
    %2182 = vmatprep.subr.mxu0 0.0
    %2183 = vmatpush1.xpose.msra.mxu0 0.0
    %2184 = vmatprep.subr.mxu0 0.0
    %2185 = vmatpush1.xpose.msra.mxu0 0.0
    %2186 = vmatprep.subr.mxu0 0.0
    %2187 = vmatpush1.xpose.msra.mxu0 0.0
    %2188 = vmatprep.subr.mxu0 0.0
    %2189 = vmatpush1.xpose.msra.mxu0 0.0
    %2190 = vmatprep.subr.mxu0 0.0
    %2191 = vmatpush1.xpose.msra.mxu0 0.0
    %2192 = vmatprep.subr.mxu0 0.0
    %2193 = vmatpush1.xpose.msra.mxu0 0.0
    %2194 = vmatprep.subr.mxu0 0.0
    %2195 = vmatpush1.xpose.msra.mxu0 0.0
    %2196 = vmatprep.subr.mxu0 0.0
    %2197 = vmatpush1.xpose.msra.mxu0 0.0
    %2198 = vmatprep.subr.mxu0 0.0
    %2199 = vmatpush1.xpose.msra.mxu0 0.0
    %2200 = vmatprep.subr.mxu0 0.0
    %2201 = vmatpush1.xpose.msra.mxu0 0.0
    %2202 = vmatprep.subr.mxu0 0.0
    %2203 = vmatpush1.xpose.msra.mxu0 0.0
    %2204 = vmatprep.subr.mxu0 0.0
    %2205 = vmatpush1.xpose.msra.mxu0 0.0
    %2206 = vmatprep.mubr.f32.mxu0 0.0
    %2207 = vmatmul.mubr.f32.gmra.mrb[0].mxu0 %v2130
    %v2208 = vpop.f32.mrb[0].mxu0
    %v2209 = vadd.f32 0.0, %v2208
    %v2210 = vpop.f32.mrb[0].mxu0
    %2211 = vmatprep.mubr.f32.mxu0 0.0
    %2212 = vmatmul.mubr.f32.gmra.mrb[0].mxu0 %v2132
    %v2213 = vpop.f32.mrb[0].mxu0
    %v2214 = vadd.f32 0.0, %v2213
    %v2215 = vpop.f32.mrb[0].mxu0
    %2216 = vmatprep.mubr.f32.mxu0 0.0
    %2217 = vmatmul.mubr.f32.gmra.mrb[0].mxu0 %v2134
    %v2218 = vpop.f32.mrb[0].mxu0
    %v2219 = vadd.f32 0.0, %v2218
    %v2220 = vpop.f32.mrb[0].mxu0
    %2221 = vdwg.mxu0
    %v2222 = vsel %vm561, %v2209, -inf
    %2223 = vmax.xlane.f32.xlu0 %v2222
    %v2224 = vpop.xlane.xlu0 %2223
    %v2225 = vsel %vm561, %v2214, -inf
    %2226 = vmax.xlane.f32.xlu0 %v2225
    %v2227 = vpop.xlane.xlu0 %2226
    %v2228 = vsel %vm568, %v2219, -inf
    %2229 = vmax.xlane.f32.xlu0 %v2228
    %v2230 = vpop.xlane.xlu0 %2229
    %v2231 = vsub.f32 %v2209, %v2224
    %v2232 = vsub.f32 %v2214, %v2227
    %v2233 = vsub.f32 %v2219, %v2230
    %v2234 = vmul.f32 %v2231, 1.442695
    %v2235 = vpow.pop %v2234
    %v2236 = vmul.f32 %v2232, 1.442695
    %v2237 = vpow.pop %v2236
    %v2238 = vmul.f32 %v2233, 1.442695
    %v2239 = vpow.pop %v2238
    %v2240 = vsel %vm561, %v2235, 0.0
    %2241 = vadd.xlane.f32.xlu0 %v2240
    %v2242 = vpop.xlane.xlu0 %2241
    %v2243 = vsel %vm561, %v2237, 0.0
    %2244 = vadd.xlane.f32.xlu0 %v2243
    %v2245 = vpop.xlane.xlu0 %2244
    %v2246 = vsel %vm568, %v2239, 0.0
    %2247 = vadd.xlane.f32.xlu0 %v2246
    %v2248 = vpop.xlane.xlu0 %2247
    %v2249 = vrcp.pop %v2242
    %v2250 = vmul.f32 %v2235, %v2249
    %v2251 = vrcp.pop %v2245
    %v2252 = vmul.f32 %v2237, %v2251
    %v2253 = vrcp.pop %v2248
    %v2254 = vmul.f32 %v2239, %v2253
    %2255 = vrot.lane.b32.xlu0 %v1684, 32
    %v2256 = vpop.permute.xlu0 %2255
    %2257 = vrot.lane.b32.xlu0 %v1686, 32
    %v2258 = vpop.permute.xlu0 %2257
    %2259 = vrot.lane.b32.xlu0 %v1685, 32
    %v2260 = vpop.permute.xlu0 %2259
    %v2264 = vsel %vm561, %v2250, 0
    %v2267 = vsel %vm561, %v2252, 0
    %v2270 = vsel %vm561, %v2254, 0
    %v2272 = vsel %vm25, %v2260, 0
    %2274 = vmatprep.subr.mxu0 0.0
    %2275 = vmatpush1.msra.mxu0 %v2256
    %2276 = vmatprep.subr.mxu0 0.0
    %2277 = vmatpush1.msra.mxu0 %v2258
    %2278 = vmatprep.subr.mxu0 0.0
    %2279 = vmatpush1.msra.mxu0 %v2272
    %2280 = vmatprep.subr.mxu0 0.0
    %2281 = vmatpush1.msra.mxu0 0.0
    %2282 = vmatprep.subr.mxu0 0.0
    %2283 = vmatpush1.msra.mxu0 0.0
    %2284 = vmatprep.subr.mxu0 0.0
    %2285 = vmatpush1.msra.mxu0 0.0
    %2286 = vmatprep.subr.mxu0 0.0
    %2287 = vmatpush1.msra.mxu0 0.0
    %2288 = vmatprep.subr.mxu0 0.0
    %2289 = vmatpush1.msra.mxu0 0.0
    %2290 = vmatprep.subr.mxu0 0.0
    %2291 = vmatpush1.msra.mxu0 0.0
    %2292 = vmatprep.subr.mxu0 0.0
    %2293 = vmatpush1.msra.mxu0 0.0
    %2294 = vmatprep.subr.mxu0 0.0
    %2295 = vmatpush1.msra.mxu0 0.0
    %2296 = vmatprep.subr.mxu0 0.0
    %2297 = vmatpush1.msra.mxu0 0.0
    %2298 = vmatprep.subr.mxu0 0.0
    %2299 = vmatpush1.msra.mxu0 0.0
    %2300 = vmatprep.subr.mxu0 0.0
    %2301 = vmatpush1.msra.mxu0 0.0
    %2302 = vmatprep.subr.mxu0 0.0
    %2303 = vmatpush1.msra.mxu0 0.0
    %2304 = vmatprep.subr.mxu0 0.0
    %2305 = vmatpush1.msra.mxu0 0.0
    %2306 = vmatprep.subr.mxu0 0.0
    %2307 = vmatpush1.msra.mxu0 0.0
    %2308 = vmatprep.subr.mxu0 0.0
    %2309 = vmatpush1.msra.mxu0 0.0
    %2310 = vmatprep.subr.mxu0 0.0
    %2311 = vmatpush1.msra.mxu0 0.0
    %2312 = vmatprep.subr.mxu0 0.0
    %2313 = vmatpush1.msra.mxu0 0.0
    %2314 = vmatprep.subr.mxu0 0.0
    %2315 = vmatpush1.msra.mxu0 0.0
    %2316 = vmatprep.subr.mxu0 0.0
    %2317 = vmatpush1.msra.mxu0 0.0
    %2318 = vmatprep.subr.mxu0 0.0
    %2319 = vmatpush1.msra.mxu0 0.0
    %2320 = vmatprep.subr.mxu0 0.0
    %2321 = vmatpush1.msra.mxu0 0.0
    %2322 = vmatprep.subr.mxu0 0.0
    %2323 = vmatpush1.msra.mxu0 0.0
    %2324 = vmatprep.subr.mxu0 0.0
    %2325 = vmatpush1.msra.mxu0 0.0
    %2326 = vmatprep.subr.mxu0 0.0
    %2327 = vmatpush1.msra.mxu0 0.0
    %2328 = vmatprep.subr.mxu0 0.0
    %2329 = vmatpush1.msra.mxu0 0.0
    %2330 = vmatprep.subr.mxu0 0.0
    %2331 = vmatpush1.msra.mxu0 0.0
    %2332 = vmatprep.subr.mxu0 0.0
    %2333 = vmatpush1.msra.mxu0 0.0
    %2334 = vmatprep.subr.mxu0 0.0
    %2335 = vmatpush1.msra.mxu0 0.0
    %2336 = vmatprep.subr.mxu0 0.0
    %2337 = vmatpush1.msra.mxu0 0.0
    %2338 = vmatprep.mubr.f32.mxu0 0.0
    %2339 = vmatmul.mubr.f32.gmra.mrb[0].mxu0 %v2264
    %v2340 = vpop.f32.mrb[0].mxu0
    %v2341 = vadd.f32 0.0, %v2340
    %v2342 = vpop.f32.mrb[0].mxu0
    %2343 = vmatprep.mubr.f32.mxu0 0.0
    %2344 = vmatmul.mubr.f32.gmra.mrb[0].mxu0 %v2267
    %v2345 = vpop.f32.mrb[0].mxu0
    %v2346 = vadd.f32 0.0, %v2345
    %v2347 = vpop.f32.mrb[0].mxu0
    %2348 = vmatprep.mubr.f32.mxu0 0.0
    %2349 = vmatmul.mubr.f32.gmra.mrb[0].mxu0 %v2270
    %v2350 = vpop.f32.mrb[0].mxu0
    %v2351 = vadd.f32 0.0, %v2350
    %v2352 = vpop.f32.mrb[0].mxu0
    %2353 = vdwg.mxu0
    %v2354 = vadd.f32 %v2115, %v2341
    %v2355 = vadd.f32 %v2116, %v2346
    %v2356 = vadd.f32 %v2117, %v2351
    %v2360 = vrot.slane %v2354, 7
    %v2361 = vrot.slane %v2355, 7
    %v2362 = vsel %vm25, %v2360, %v2361
    %v2363 = vrot.slane %v2356, 7
    %v2364 = vsel %vm25, %v2361, %v2363
    %v2368 = vsel %vm25, %v1403, %v2360
    %v2369 = vadd.f32 %v135, %v1401
    %v2370 = vadd.f32 %v140, %v1402
    %v2371 = vadd.f32 %v145, %v2368
    %v2372 = vadd.f32 %v150, %v2362
    %v2373 = vadd.f32 %v155, %v2364
    %v2374 = vld [vmem:[%s2 + $0x6] sm:$0x1]
    %v2375 = vlaneseq
    %v2376 = vshrl.u32 %v2375, 7
    %v2377 = vsub.s32 0, %v2376
    %v2378 = vrot.slane %v2374, %v2377
    %v2379 = vadd.f32 %v2369, %v2378
    %v2380 = vadd.f32 %v2370, %v2378
    %v2381 = vadd.f32 %v2371, %v2378
    %v2382 = vadd.f32 %v2372, %v2378
    %v2383 = vadd.f32 %v2373, %v2378
    %v2384 = vld [vmem:[%s2 + $0x7] sm:$0x1]
    %v2385 = vld [vmem:[%s2 + $0x8] sm:$0x1]
    %v2386 = vsel %vm160, %v2379, 0.0
    %2387 = vadd.xlane.f32.xlu0 %v2386
    %v2388 = vpop.xlane.xlu0 %2387
    %v2389 = vsel %vm160, %v2380, 0.0
    %2390 = vadd.xlane.f32.xlu0 %v2389
    %v2391 = vpop.xlane.xlu0 %2390
    %v2392 = vsel %vm160, %v2381, 0.0
    %2393 = vadd.xlane.f32.xlu0 %v2392
    %v2394 = vpop.xlane.xlu0 %2393
    %v2395 = vsel %vm160, %v2382, 0.0
    %2396 = vadd.xlane.f32.xlu0 %v2395
    %v2397 = vpop.xlane.xlu0 %2396
    %v2398 = vsel %vm173, %v2383, 0.0
    %2399 = vadd.xlane.f32.xlu0 %v2398
    %v2400 = vpop.xlane.xlu0 %2399
    %v2401 = vmul.f32 %v2388, %v177
    %v2402 = vmul.f32 %v2391, %v177
    %v2403 = vmul.f32 %v2394, %v177
    %v2404 = vmul.f32 %v2397, %v177
    %v2405 = vmul.f32 %v2400, %v177
    %v2406 = vsub.f32 %v2379, %v2401
    %v2407 = vsub.f32 %v2380, %v2402
    %v2408 = vsub.f32 %v2381, %v2403
    %v2409 = vsub.f32 %v2382, %v2404
    %v2410 = vsub.f32 %v2383, %v2405
    %v2411 = vmul.f32 %v2406, %v2406
    %v2412 = vmul.f32 %v2407, %v2407
    %v2413 = vmul.f32 %v2408, %v2408
    %v2414 = vmul.f32 %v2409, %v2409
    %v2415 = vmul.f32 %v2410, %v2410
    %v2416 = vsel %vm160, %v2411, 0.0
    %2417 = vadd.xlane.f32.xlu0 %v2416
    %v2418 = vpop.xlane.xlu0 %2417
    %v2419 = vsel %vm160, %v2412, 0.0
    %2420 = vadd.xlane.f32.xlu0 %v2419
    %v2421 = vpop.xlane.xlu0 %2420
    %v2422 = vsel %vm160, %v2413, 0.0
    %2423 = vadd.xlane.f32.xlu0 %v2422
    %v2424 = vpop.xlane.xlu0 %2423
    %v2425 = vsel %vm160, %v2414, 0.0
    %2426 = vadd.xlane.f32.xlu0 %v2425
    %v2427 = vpop.xlane.xlu0 %2426
    %v2428 = vsel %vm173, %v2415, 0.0
    %2429 = vadd.xlane.f32.xlu0 %v2428
    %v2430 = vpop.xlane.xlu0 %2429
    %v2431 = vmul.f32 %v2418, %v177
    %v2432 = vmul.f32 %v2421, %v177
    %v2433 = vmul.f32 %v2424, %v177
    %v2434 = vmul.f32 %v2427, %v177
    %v2435 = vmul.f32 %v2430, %v177
    %v2436 = vadd.f32 %v2431, 1e-06
    %v2437 = vadd.f32 %v2432, 1e-06
    %v2438 = vadd.f32 %v2433, 1e-06
    %v2439 = vadd.f32 %v2434, 1e-06
    %v2440 = vadd.f32 %v2435, 1e-06
    %v2441 = vrsqrt.pop %v2436
    %v2442 = vrsqrt.pop %v2437
    %v2443 = vrsqrt.pop %v2438
    %v2444 = vrsqrt.pop %v2439
    %v2445 = vrsqrt.pop %v2440
    %v2446 = vmul.f32 %v2406, %v2441
    %v2447 = vmul.f32 %v2407, %v2442
    %v2448 = vmul.f32 %v2408, %v2443
    %v2449 = vmul.f32 %v2409, %v2444
    %v2450 = vmul.f32 %v2410, %v2445
    %v2451 = vlaneseq
    %v2452 = vshrl.u32 %v2451, 7
    %v2453 = vsub.s32 0, %v2452
    %v2454 = vrot.slane %v2384, %v2453
    %v2455 = vmul.f32 %v2446, %v2454
    %v2456 = vmul.f32 %v2447, %v2454
    %v2457 = vmul.f32 %v2448, %v2454
    %v2458 = vmul.f32 %v2449, %v2454
    %v2459 = vmul.f32 %v2450, %v2454
    %v2460 = vlaneseq
    %v2461 = vshrl.u32 %v2460, 7
    %v2462 = vsub.s32 0, %v2461
    %v2463 = vrot.slane %v2385, %v2462
    %v2464 = vadd.f32 %v2455, %v2463
    %v2465 = vadd.f32 %v2456, %v2463
    %v2466 = vadd.f32 %v2457, %v2463
    %v2467 = vadd.f32 %v2458, %v2463
    %v2468 = vadd.f32 %v2459, %v2463
    %v2469 = vld [vmem:[%s1 + $0x88] sm:$0xff]
    %v2470 = vld [vmem:[%s1 + $0x90] sm:$0xff]
    %v2471 = vld [vmem:[%s1 + $0x98] sm:$0xff]
    %v2472 = vld [vmem:[%s1 + $0xa0] sm:$0xff]
    %v2473 = vld [vmem:[%s2 + $0x9] sm:$0x1]
    %v2474 = vlaneseq
    %v2475 = vshrl.u32 %v2474, 7
    %v2476 = vsub.s32 0, %v2475
    %v2477 = vrot.slane %v2473, %v2476
    %v2479 = vsel %vm160, %v2464, 0
    %v2482 = vsel %vm160, %v2465, 0
    %v2485 = vsel %vm160, %v2466, 0
    %v2488 = vsel %vm160, %v2467, 0
    %v2491 = vsel %vm160, %v2468, 0
    %2493 = vmatprep.subr.mxu0 0.0
    %2494 = vmatpush1.msra.mxu0 %v2469
    %2495 = vmatprep.subr.mxu0 0.0
    %2496 = vmatpush1.msra.mxu0 %v2470
    %2497 = vmatprep.subr.mxu0 0.0
    %2498 = vmatpush1.msra.mxu0 %v2471
    %2499 = vmatprep.subr.mxu0 0.0
    %2500 = vmatpush1.msra.mxu0 %v2472
    %2501 = vmatprep.subr.mxu0 0.0
    %2502 = vmatpush1.msra.mxu0 0.0
    %2503 = vmatprep.subr.mxu0 0.0
    %2504 = vmatpush1.msra.mxu0 0.0
    %2505 = vmatprep.subr.mxu0 0.0
    %2506 = vmatpush1.msra.mxu0 0.0
    %2507 = vmatprep.subr.mxu0 0.0
    %2508 = vmatpush1.msra.mxu0 0.0
    %2509 = vmatprep.subr.mxu0 0.0
    %2510 = vmatpush1.msra.mxu0 0.0
    %2511 = vmatprep.subr.mxu0 0.0
    %2512 = vmatpush1.msra.mxu0 0.0
    %2513 = vmatprep.subr.mxu0 0.0
    %2514 = vmatpush1.msra.mxu0 0.0
    %2515 = vmatprep.subr.mxu0 0.0
    %2516 = vmatpush1.msra.mxu0 0.0
    %2517 = vmatprep.subr.mxu0 0.0
    %2518 = vmatpush1.msra.mxu0 0.0
    %2519 = vmatprep.subr.mxu0 0.0
    %2520 = vmatpush1.msra.mxu0 0.0
    %2521 = vmatprep.subr.mxu0 0.0
    %2522 = vmatpush1.msra.mxu0 0.0
    %2523 = vmatprep.subr.mxu0 0.0
    %2524 = vmatpush1.msra.mxu0 0.0
    %2525 = vmatprep.subr.mxu0 0.0
    %2526 = vmatpush1.msra.mxu0 0.0
    %2527 = vmatprep.subr.mxu0 0.0
    %2528 = vmatpush1.msra.mxu0 0.0
    %2529 = vmatprep.subr.mxu0 0.0
    %2530 = vmatpush1.msra.mxu0 0.0
    %2531 = vmatprep.subr.mxu0 0.0
    %2532 = vmatpush1.msra.mxu0 0.0
    %2533 = vmatprep.subr.mxu0 0.0
    %2534 = vmatpush1.msra.mxu0 0.0
    %2535 = vmatprep.subr.mxu0 0.0
    %2536 = vmatpush1.msra.mxu0 0.0
    %2537 = vmatprep.subr.mxu0 0.0
    %2538 = vmatpush1.msra.mxu0 0.0
    %2539 = vmatprep.subr.mxu0 0.0
    %2540 = vmatpush1.msra.mxu0 0.0
    %2541 = vmatprep.subr.mxu0 0.0
    %2542 = vmatpush1.msra.mxu0 0.0
    %2543 = vmatprep.subr.mxu0 0.0
    %2544 = vmatpush1.msra.mxu0 0.0
    %2545 = vmatprep.subr.mxu0 0.0
    %2546 = vmatpush1.msra.mxu0 0.0
    %2547 = vmatprep.subr.mxu0 0.0
    %2548 = vmatpush1.msra.mxu0 0.0
    %2549 = vmatprep.subr.mxu0 0.0
    %2550 = vmatpush1.msra.mxu0 0.0
    %2551 = vmatprep.subr.mxu0 0.0
    %2552 = vmatpush1.msra.mxu0 0.0
    %2553 = vmatprep.subr.mxu0 0.0
    %2554 = vmatpush1.msra.mxu0 0.0
    %2555 = vmatprep.subr.mxu0 0.0
    %2556 = vmatpush1.msra.mxu0 0.0
    %2557 = vmatprep.mubr.f32.mxu0 0.0
    %2558 = vmatmul.mubr.f32.gmra.mrb[0].mxu0 %v2479
    %v2559 = vpop.f32.mrb[0].mxu0
    %v2560 = vadd.f32 %v2477, %v2559
    %v2561 = vpop.f32.mrb[0].mxu0
    %2562 = vmatprep.mubr.f32.mxu0 0.0
    %2563 = vmatmul.mubr.f32.gmra.mrb[0].mxu0 %v2482
    %v2564 = vpop.f32.mrb[0].mxu0
    %v2565 = vadd.f32 %v2477, %v2564
    %v2566 = vpop.f32.mrb[0].mxu0
    %2567 = vmatprep.mubr.f32.mxu0 0.0
    %2568 = vmatmul.mubr.f32.gmra.mrb[0].mxu0 %v2485
    %v2569 = vpop.f32.mrb[0].mxu0
    %v2570 = vadd.f32 %v2477, %v2569
    %v2571 = vpop.f32.mrb[0].mxu0
    %2572 = vmatprep.mubr.f32.mxu0 0.0
    %2573 = vmatmul.mubr.f32.gmra.mrb[0].mxu0 %v2488
    %v2574 = vpop.f32.mrb[0].mxu0
    %v2575 = vadd.f32 %v2477, %v2574
    %v2576 = vpop.f32.mrb[0].mxu0
    %2577 = vmatprep.mubr.f32.mxu0 0.0
    %2578 = vmatmul.mubr.f32.gmra.mrb[0].mxu0 %v2491
    %v2579 = vpop.f32.mrb[0].mxu0
    %v2580 = vadd.f32 %v2477, %v2579
    %v2581 = vpop.f32.mrb[0].mxu0
    %2582 = vdwg.mxu0
    %v2583 = vmul.f32 %v2560, 0.5
    %v2584 = vmul.f32 %v2565, 0.5
    %v2585 = vmul.f32 %v2570, 0.5
    %v2586 = vmul.f32 %v2575, 0.5
    %v2587 = vmul.f32 %v2580, 0.5
    %v2588 = vmul.f32 %v2560, 0.70710677
    %v2589 = vmul.f32 %v2565, 0.70710677
    %v2590 = vmul.f32 %v2570, 0.70710677
    %v2591 = vmul.f32 %v2575, 0.70710677
    %v2592 = vmul.f32 %v2580, 0.70710677
    %v2593 = verf.f32.pop %v2588
    %v2594 = verf.f32.pop %v2589
    %v2595 = verf.f32.pop %v2590
    %v2596 = verf.f32.pop %v2591
    %v2597 = verf.f32.pop %v2592
    %v2598 = vadd.f32 %v2593, 1.0
    %v2599 = vadd.f32 %v2594, 1.0
    %v2600 = vadd.f32 %v2595, 1.0
    %v2601 = vadd.f32 %v2596, 1.0
    %v2602 = vadd.f32 %v2597, 1.0
    %v2603 = vmul.f32 %v2583, %v2598
    %v2604 = vmul.f32 %v2584, %v2599
    %v2605 = vmul.f32 %v2585, %v2600
    %v2606 = vmul.f32 %v2586, %v2601
    %v2607 = vmul.f32 %v2587, %v2602
    %v2608 = vld [vmem:[%s1 + $0xa8] sm:$0xff]
    %v2609 = vld [vmem:[%s1 + $0xb0] sm:$0xff]
    %v2610 = vld [vmem:[%s1 + $0xb8] sm:$0xff]
    %v2611 = vld [vmem:[%s1 + $0xc0] sm:$0xff]
    %v2612 = vld [vmem:[%s1 + $0xc8] sm:$0xff]
    %v2613 = vld [vmem:[%s1 + $0xd0] sm:$0xff]
    %v2614 = vld [vmem:[%s1 + $0xd8] sm:$0xff]
    %v2615 = vld [vmem:[%s1 + $0xe0] sm:$0xff]
    %v2616 = vld [vmem:[%s2 + $0xa] sm:$0x1]
    %v2617 = vlaneseq
    %v2618 = vshrl.u32 %v2617, 7
    %v2619 = vsub.s32 0, %v2618
    %v2620 = vrot.slane %v2616, %v2619
    %vm2621 = vcmask 523264
    %v2623 = vsel %vm2621, %v2603, 0
    %v2626 = vsel %vm2621, %v2604, 0
    %v2629 = vsel %vm2621, %v2605, 0
    %v2632 = vsel %vm2621, %v2606, 0
    %v2635 = vsel %vm2621, %v2607, 0
    %2637 = vmatprep.subr.mxu0 0.0
    %2638 = vmatpush1.msra.mxu0 %v2608
    %2639 = vmatprep.subr.mxu0 0.0
    %2640 = vmatpush1.msra.mxu0 %v2609
    %2641 = vmatprep.subr.mxu0 0.0
    %2642 = vmatpush1.msra.mxu0 %v2610
    %2643 = vmatprep.subr.mxu0 0.0
    %2644 = vmatpush1.msra.mxu0 %v2611
    %2645 = vmatprep.subr.mxu0 0.0
    %2646 = vmatpush1.msra.mxu0 %v2612
    %2647 = vmatprep.subr.mxu0 0.0
    %2648 = vmatpush1.msra.mxu0 %v2613
    %2649 = vmatprep.subr.mxu0 0.0
    %2650 = vmatpush1.msra.mxu0 %v2614
    %2651 = vmatprep.subr.mxu0 0.0
    %2652 = vmatpush1.msra.mxu0 %v2615
    %2653 = vmatprep.subr.mxu0 0.0
    %2654 = vmatpush1.msra.mxu0 0.0
    %2655 = vmatprep.subr.mxu0 0.0
    %2656 = vmatpush1.msra.mxu0 0.0
    %2657 = vmatprep.subr.mxu0 0.0
    %2658 = vmatpush1.msra.mxu0 0.0
    %2659 = vmatprep.subr.mxu0 0.0
    %2660 = vmatpush1.msra.mxu0 0.0
    %2661 = vmatprep.subr.mxu0 0.0
    %2662 = vmatpush1.msra.mxu0 0.0
    %2663 = vmatprep.subr.mxu0 0.0
    %2664 = vmatpush1.msra.mxu0 0.0
    %2665 = vmatprep.subr.mxu0 0.0
    %2666 = vmatpush1.msra.mxu0 0.0
    %2667 = vmatprep.subr.mxu0 0.0
    %2668 = vmatpush1.msra.mxu0 0.0
    %2669 = vmatprep.subr.mxu0 0.0
    %2670 = vmatpush1.msra.mxu0 0.0
    %2671 = vmatprep.subr.mxu0 0.0
    %2672 = vmatpush1.msra.mxu0 0.0
    %2673 = vmatprep.subr.mxu0 0.0
    %2674 = vmatpush1.msra.mxu0 0.0
    %2675 = vmatprep.subr.mxu0 0.0
    %2676 = vmatpush1.msra.mxu0 0.0
    %2677 = vmatprep.subr.mxu0 0.0
    %2678 = vmatpush1.msra.mxu0 0.0
    %2679 = vmatprep.subr.mxu0 0.0
    %2680 = vmatpush1.msra.mxu0 0.0
    %2681 = vmatprep.subr.mxu0 0.0
    %2682 = vmatpush1.msra.mxu0 0.0
    %2683 = vmatprep.subr.mxu0 0.0
    %2684 = vmatpush1.msra.mxu0 0.0
    %2685 = vmatprep.subr.mxu0 0.0
    %2686 = vmatpush1.msra.mxu0 0.0
    %2687 = vmatprep.subr.mxu0 0.0
    %2688 = vmatpush1.msra.mxu0 0.0
    %2689 = vmatprep.subr.mxu0 0.0
    %2690 = vmatpush1.msra.mxu0 0.0
    %2691 = vmatprep.subr.mxu0 0.0
    %2692 = vmatpush1.msra.mxu0 0.0
    %2693 = vmatprep.subr.mxu0 0.0
    %2694 = vmatpush1.msra.mxu0 0.0
    %2695 = vmatprep.subr.mxu0 0.0
    %2696 = vmatpush1.msra.mxu0 0.0
    %2697 = vmatprep.subr.mxu0 0.0
    %2698 = vmatpush1.msra.mxu0 0.0
    %2699 = vmatprep.subr.mxu0 0.0
    %2700 = vmatpush1.msra.mxu0 0.0
    %2701 = vmatprep.mubr.f32.mxu0 0.0
    %2702 = vmatmul.mubr.f32.gmra.mrb[0].mxu0 %v2623
    %v2703 = vpop.f32.mrb[0].mxu0
    %v2704 = vadd.f32 %v2620, %v2703
    %v2705 = vpop.f32.mrb[0].mxu0
    %2706 = vmatprep.mubr.f32.mxu0 0.0
    %2707 = vmatmul.mubr.f32.gmra.mrb[0].mxu0 %v2626
    %v2708 = vpop.f32.mrb[0].mxu0
    %v2709 = vadd.f32 %v2620, %v2708
    %v2710 = vpop.f32.mrb[0].mxu0
    %2711 = vmatprep.mubr.f32.mxu0 0.0
    %2712 = vmatmul.mubr.f32.gmra.mrb[0].mxu0 %v2629
    %v2713 = vpop.f32.mrb[0].mxu0
    %v2714 = vadd.f32 %v2620, %v2713
    %v2715 = vpop.f32.mrb[0].mxu0
    %2716 = vmatprep.mubr.f32.mxu0 0.0
    %2717 = vmatmul.mubr.f32.gmra.mrb[0].mxu0 %v2632
    %v2718 = vpop.f32.mrb[0].mxu0
    %v2719 = vadd.f32 %v2620, %v2718
    %v2720 = vpop.f32.mrb[0].mxu0
    %2721 = vmatprep.mubr.f32.mxu0 0.0
    %2722 = vmatmul.mubr.f32.gmra.mrb[0].mxu0 %v2635
    %v2723 = vpop.f32.mrb[0].mxu0
    %v2724 = vadd.f32 %v2620, %v2723
    %v2725 = vpop.f32.mrb[0].mxu0
    %2726 = vdwg.mxu0
    %v2727 = vadd.f32 %v2379, %v2704
    %v2728 = vadd.f32 %v2380, %v2709
    %v2729 = vadd.f32 %v2381, %v2714
    %v2730 = vadd.f32 %v2382, %v2719
    %v2731 = vadd.f32 %v2383, %v2724
    %v2732 = vld [vmem:[%s2 + $0xb] sm:$0x1]
    %v2733 = vld [vmem:[%s2 + $0xc] sm:$0x1]
    %v2734 = vsel %vm160, %v2727, 0.0
    %2735 = vadd.xlane.f32.xlu0 %v2734
    %v2736 = vpop.xlane.xlu0 %2735
    %v2737 = vsel %vm160, %v2728, 0.0
    %2738 = vadd.xlane.f32.xlu0 %v2737
    %v2739 = vpop.xlane.xlu0 %2738
    %v2740 = vsel %vm160, %v2729, 0.0
    %2741 = vadd.xlane.f32.xlu0 %v2740
    %v2742 = vpop.xlane.xlu0 %2741
    %v2743 = vsel %vm160, %v2730, 0.0
    %2744 = vadd.xlane.f32.xlu0 %v2743
    %v2745 = vpop.xlane.xlu0 %2744
    %v2746 = vsel %vm173, %v2731, 0.0
    %2747 = vadd.xlane.f32.xlu0 %v2746
    %v2748 = vpop.xlane.xlu0 %2747
    %v2749 = vmul.f32 %v2736, %v177
    %v2750 = vmul.f32 %v2739, %v177
    %v2751 = vmul.f32 %v2742, %v177
    %v2752 = vmul.f32 %v2745, %v177
    %v2753 = vmul.f32 %v2748, %v177
    %v2754 = vsub.f32 %v2727, %v2749
    %v2755 = vsub.f32 %v2728, %v2750
    %v2756 = vsub.f32 %v2729, %v2751
    %v2757 = vsub.f32 %v2730, %v2752
    %v2758 = vsub.f32 %v2731, %v2753
    %v2759 = vmul.f32 %v2754, %v2754
    %v2760 = vmul.f32 %v2755, %v2755
    %v2761 = vmul.f32 %v2756, %v2756
    %v2762 = vmul.f32 %v2757, %v2757
    %v2763 = vmul.f32 %v2758, %v2758
    %v2764 = vsel %vm160, %v2759, 0.0
    %2765 = vadd.xlane.f32.xlu0 %v2764
    %v2766 = vpop.xlane.xlu0 %2765
    %v2767 = vsel %vm160, %v2760, 0.0
    %2768 = vadd.xlane.f32.xlu0 %v2767
    %v2769 = vpop.xlane.xlu0 %2768
    %v2770 = vsel %vm160, %v2761, 0.0
    %2771 = vadd.xlane.f32.xlu0 %v2770
    %v2772 = vpop.xlane.xlu0 %2771
    %v2773 = vsel %vm160, %v2762, 0.0
    %2774 = vadd.xlane.f32.xlu0 %v2773
    %v2775 = vpop.xlane.xlu0 %2774
    %v2776 = vsel %vm173, %v2763, 0.0
    %2777 = vadd.xlane.f32.xlu0 %v2776
    %v2778 = vpop.xlane.xlu0 %2777
    %v2779 = vmul.f32 %v2766, %v177
    %v2780 = vmul.f32 %v2769, %v177
    %v2781 = vmul.f32 %v2772, %v177
    %v2782 = vmul.f32 %v2775, %v177
    %v2783 = vmul.f32 %v2778, %v177
    %v2784 = vadd.f32 %v2779, 1e-06
    %v2785 = vadd.f32 %v2780, 1e-06
    %v2786 = vadd.f32 %v2781, 1e-06
    %v2787 = vadd.f32 %v2782, 1e-06
    %v2788 = vadd.f32 %v2783, 1e-06
    %v2789 = vrsqrt.pop %v2784
    %v2790 = vrsqrt.pop %v2785
    %v2791 = vrsqrt.pop %v2786
    %v2792 = vrsqrt.pop %v2787
    %v2793 = vrsqrt.pop %v2788
    %v2794 = vmul.f32 %v2754, %v2789
    %v2795 = vmul.f32 %v2755, %v2790
    %v2796 = vmul.f32 %v2756, %v2791
    %v2797 = vmul.f32 %v2757, %v2792
    %v2798 = vmul.f32 %v2758, %v2793
    %v2799 = vlaneseq
    %v2800 = vshrl.u32 %v2799, 7
    %v2801 = vsub.s32 0, %v2800
    %v2802 = vrot.slane %v2732, %v2801
    %v2803 = vmul.f32 %v2794, %v2802
    %v2804 = vmul.f32 %v2795, %v2802
    %v2805 = vmul.f32 %v2796, %v2802
    %v2806 = vmul.f32 %v2797, %v2802
    %v2807 = vmul.f32 %v2798, %v2802
    %v2808 = vlaneseq
    %v2809 = vshrl.u32 %v2808, 7
    %v2810 = vsub.s32 0, %v2809
    %v2811 = vrot.slane %v2733, %v2810
    %v2812 = vadd.f32 %v2803, %v2811
    %v2813 = vadd.f32 %v2804, %v2811
    %v2814 = vadd.f32 %v2805, %v2811
    %v2815 = vadd.f32 %v2806, %v2811
    %v2816 = vadd.f32 %v2807, %v2811
    %v2817 = vld [vmem:[%s1 + $0xe8] sm:$0xff]
    %v2818 = vld [vmem:[%s1 + $0xf0] sm:$0xff]
    %v2819 = vld [vmem:[%s1 + $0xf8] sm:$0xff]
    %v2820 = vld [vmem:[%s1 + $0x100] sm:$0xff]
    %v2821 = vld [vmem:[%s2 + $0xd] sm:$0x1]
    %v2822 = vlaneseq
    %v2823 = vshrl.u32 %v2822, 7
    %v2824 = vsub.s32 0, %v2823
    %v2825 = vrot.slane %v2821, %v2824
    %v2827 = vsel %vm160, %v2812, 0
    %v2830 = vsel %vm160, %v2813, 0
    %v2833 = vsel %vm160, %v2814, 0
    %v2836 = vsel %vm160, %v2815, 0
    %v2839 = vsel %vm160, %v2816, 0
    %2841 = vmatprep.subr.mxu0 0.0
    %2842 = vmatpush1.msra.mxu0 %v2817
    %2843 = vmatprep.subr.mxu0 0.0
    %2844 = vmatpush1.msra.mxu0 %v2818
    %2845 = vmatprep.subr.mxu0 0.0
    %2846 = vmatpush1.msra.mxu0 %v2819
    %2847 = vmatprep.subr.mxu0 0.0
    %2848 = vmatpush1.msra.mxu0 %v2820
    %2849 = vmatprep.subr.mxu0 0.0
    %2850 = vmatpush1.msra.mxu0 0.0
    %2851 = vmatprep.subr.mxu0 0.0
    %2852 = vmatpush1.msra.mxu0 0.0
    %2853 = vmatprep.subr.mxu0 0.0
    %2854 = vmatpush1.msra.mxu0 0.0
    %2855 = vmatprep.subr.mxu0 0.0
    %2856 = vmatpush1.msra.mxu0 0.0
    %2857 = vmatprep.subr.mxu0 0.0
    %2858 = vmatpush1.msra.mxu0 0.0
    %2859 = vmatprep.subr.mxu0 0.0
    %2860 = vmatpush1.msra.mxu0 0.0
    %2861 = vmatprep.subr.mxu0 0.0
    %2862 = vmatpush1.msra.mxu0 0.0
    %2863 = vmatprep.subr.mxu0 0.0
    %2864 = vmatpush1.msra.mxu0 0.0
    %2865 = vmatprep.subr.mxu0 0.0
    %2866 = vmatpush1.msra.mxu0 0.0
    %2867 = vmatprep.subr.mxu0 0.0
    %2868 = vmatpush1.msra.mxu0 0.0
    %2869 = vmatprep.subr.mxu0 0.0
    %2870 = vmatpush1.msra.mxu0 0.0
    %2871 = vmatprep.subr.mxu0 0.0
    %2872 = vmatpush1.msra.mxu0 0.0
    %2873 = vmatprep.subr.mxu0 0.0
    %2874 = vmatpush1.msra.mxu0 0.0
    %2875 = vmatprep.subr.mxu0 0.0
    %2876 = vmatpush1.msra.mxu0 0.0
    %2877 = vmatprep.subr.mxu0 0.0
    %2878 = vmatpush1.msra.mxu0 0.0
    %2879 = vmatprep.subr.mxu0 0.0
    %2880 = vmatpush1.msra.mxu0 0.0
    %2881 = vmatprep.subr.mxu0 0.0
    %2882 = vmatpush1.msra.mxu0 0.0
    %2883 = vmatprep.subr.mxu0 0.0
    %2884 = vmatpush1.msra.mxu0 0.0
    %2885 = vmatprep.subr.mxu0 0.0
    %2886 = vmatpush1.msra.mxu0 0.0
    %2887 = vmatprep.subr.mxu0 0.0
    %2888 = vmatpush1.msra.mxu0 0.0
    %2889 = vmatprep.subr.mxu0 0.0
    %2890 = vmatpush1.msra.mxu0 0.0
    %2891 = vmatprep.subr.mxu0 0.0
    %2892 = vmatpush1.msra.mxu0 0.0
    %2893 = vmatprep.subr.mxu0 0.0
    %2894 = vmatpush1.msra.mxu0 0.0
    %2895 = vmatprep.subr.mxu0 0.0
    %2896 = vmatpush1.msra.mxu0 0.0
    %2897 = vmatprep.subr.mxu0 0.0
    %2898 = vmatpush1.msra.mxu0 0.0
    %2899 = vmatprep.subr.mxu0 0.0
    %2900 = vmatpush1.msra.mxu0 0.0
    %2901 = vmatprep.subr.mxu0 0.0
    %2902 = vmatpush1.msra.mxu0 0.0
    %2903 = vmatprep.subr.mxu0 0.0
    %2904 = vmatpush1.msra.mxu0 0.0
    %2905 = vmatprep.mubr.f32.mxu0 0.0
    %2906 = vmatmul.mubr.f32.gmra.mrb[0].mxu0 %v2827
    %v2907 = vpop.f32.mrb[0].mxu0
    %v2908 = vadd.f32 %v2825, %v2907
    %v2909 = vpop.f32.mrb[0].mxu0
    %2910 = vmatprep.mubr.f32.mxu0 0.0
    %2911 = vmatmul.mubr.f32.gmra.mrb[0].mxu0 %v2830
    %v2912 = vpop.f32.mrb[0].mxu0
    %v2913 = vadd.f32 %v2825, %v2912
    %v2914 = vpop.f32.mrb[0].mxu0
    %2915 = vmatprep.mubr.f32.mxu0 0.0
    %2916 = vmatmul.mubr.f32.gmra.mrb[0].mxu0 %v2833
    %v2917 = vpop.f32.mrb[0].mxu0
    %v2918 = vadd.f32 %v2825, %v2917
    %v2919 = vpop.f32.mrb[0].mxu0
    %2920 = vmatprep.mubr.f32.mxu0 0.0
    %2921 = vmatmul.mubr.f32.gmra.mrb[0].mxu0 %v2836
    %v2922 = vpop.f32.mrb[0].mxu0
    %v2923 = vadd.f32 %v2825, %v2922
    %v2924 = vpop.f32.mrb[0].mxu0
    %2925 = vmatprep.mubr.f32.mxu0 0.0
    %2926 = vmatmul.mubr.f32.gmra.mrb[0].mxu0 %v2839
    %v2927 = vpop.f32.mrb[0].mxu0
    %v2928 = vadd.f32 %v2825, %v2927
    %v2929 = vpop.f32.mrb[0].mxu0
    %2930 = vdwg.mxu0
    %v2931 = vld [vmem:[%s1 + $0x108] sm:$0xff]
    %v2932 = vld [vmem:[%s1 + $0x110] sm:$0xff]
    %v2933 = vld [vmem:[%s1 + $0x118] sm:$0xff]
    %v2934 = vld [vmem:[%s1 + $0x120] sm:$0xff]
    %v2935 = vld [vmem:[%s2 + $0xe] sm:$0x1]
    %v2936 = vlaneseq
    %v2937 = vshrl.u32 %v2936, 7
    %v2938 = vsub.s32 0, %v2937
    %v2939 = vrot.slane %v2935, %v2938
    %2940 = vmatprep.subr.mxu0 0.0
    %2941 = vmatpush1.msra.mxu0 %v2931
    %2942 = vmatprep.subr.mxu0 0.0
    %2943 = vmatpush1.msra.mxu0 %v2932
    %2944 = vmatprep.subr.mxu0 0.0
    %2945 = vmatpush1.msra.mxu0 %v2933
    %2946 = vmatprep.subr.mxu0 0.0
    %2947 = vmatpush1.msra.mxu0 %v2934
    %2948 = vmatprep.subr.mxu0 0.0
    %2949 = vmatpush1.msra.mxu0 0.0
    %2950 = vmatprep.subr.mxu0 0.0
    %2951 = vmatpush1.msra.mxu0 0.0
    %2952 = vmatprep.subr.mxu0 0.0
    %2953 = vmatpush1.msra.mxu0 0.0
    %2954 = vmatprep.subr.mxu0 0.0
    %2955 = vmatpush1.msra.mxu0 0.0
    %2956 = vmatprep.subr.mxu0 0.0
    %2957 = vmatpush1.msra.mxu0 0.0
    %2958 = vmatprep.subr.mxu0 0.0
    %2959 = vmatpush1.msra.mxu0 0.0
    %2960 = vmatprep.subr.mxu0 0.0
    %2961 = vmatpush1.msra.mxu0 0.0
    %2962 = vmatprep.subr.mxu0 0.0
    %2963 = vmatpush1.msra.mxu0 0.0
    %2964 = vmatprep.subr.mxu0 0.0
    %2965 = vmatpush1.msra.mxu0 0.0
    %2966 = vmatprep.subr.mxu0 0.0
    %2967 = vmatpush1.msra.mxu0 0.0
    %2968 = vmatprep.subr.mxu0 0.0
    %2969 = vmatpush1.msra.mxu0 0.0
    %2970 = vmatprep.subr.mxu0 0.0
    %2971 = vmatpush1.msra.mxu0 0.0
    %2972 = vmatprep.subr.mxu0 0.0
    %2973 = vmatpush1.msra.mxu0 0.0
    %2974 = vmatprep.subr.mxu0 0.0
    %2975 = vmatpush1.msra.mxu0 0.0
    %2976 = vmatprep.subr.mxu0 0.0
    %2977 = vmatpush1.msra.mxu0 0.0
    %2978 = vmatprep.subr.mxu0 0.0
    %2979 = vmatpush1.msra.mxu0 0.0
    %2980 = vmatprep.subr.mxu0 0.0
    %2981 = vmatpush1.msra.mxu0 0.0
    %2982 = vmatprep.subr.mxu0 0.0
    %2983 = vmatpush1.msra.mxu0 0.0
    %2984 = vmatprep.subr.mxu0 0.0
    %2985 = vmatpush1.msra.mxu0 0.0
    %2986 = vmatprep.subr.mxu0 0.0
    %2987 = vmatpush1.msra.mxu0 0.0
    %2988 = vmatprep.subr.mxu0 0.0
    %2989 = vmatpush1.msra.mxu0 0.0
    %2990 = vmatprep.subr.mxu0 0.0
    %2991 = vmatpush1.msra.mxu0 0.0
    %2992 = vmatprep.subr.mxu0 0.0
    %2993 = vmatpush1.msra.mxu0 0.0
    %2994 = vmatprep.subr.mxu0 0.0
    %2995 = vmatpush1.msra.mxu0 0.0
    %2996 = vmatprep.subr.mxu0 0.0
    %2997 = vmatpush1.msra.mxu0 0.0
    %2998 = vmatprep.subr.mxu0 0.0
    %2999 = vmatpush1.msra.mxu0 0.0
    %3000 = vmatprep.subr.mxu0 0.0
    %3001 = vmatpush1.msra.mxu0 0.0
    %3002 = vmatprep.subr.mxu0 0.0
    %3003 = vmatpush1.msra.mxu0 0.0
    %3004 = vmatprep.mubr.f32.mxu0 0.0
    %3005 = vmatmul.mubr.f32.gmra.mrb[0].mxu0 %v2827
    %v3006 = vpop.f32.mrb[0].mxu0
    %v3007 = vadd.f32 %v2939, %v3006
    %v3008 = vpop.f32.mrb[0].mxu0
    %3009 = vmatprep.mubr.f32.mxu0 0.0
    %3010 = vmatmul.mubr.f32.gmra.mrb[0].mxu0 %v2830
    %v3011 = vpop.f32.mrb[0].mxu0
    %v3012 = vadd.f32 %v2939, %v3011
    %v3013 = vpop.f32.mrb[0].mxu0
    %3014 = vmatprep.mubr.f32.mxu0 0.0
    %3015 = vmatmul.mubr.f32.gmra.mrb[0].mxu0 %v2833
    %v3016 = vpop.f32.mrb[0].mxu0
    %v3017 = vadd.f32 %v2939, %v3016
    %v3018 = vpop.f32.mrb[0].mxu0
    %3019 = vmatprep.mubr.f32.mxu0 0.0
    %3020 = vmatmul.mubr.f32.gmra.mrb[0].mxu0 %v2836
    %v3021 = vpop.f32.mrb[0].mxu0
    %v3022 = vadd.f32 %v2939, %v3021
    %v3023 = vpop.f32.mrb[0].mxu0
    %3024 = vmatprep.mubr.f32.mxu0 0.0
    %3025 = vmatmul.mubr.f32.gmra.mrb[0].mxu0 %v2839
    %v3026 = vpop.f32.mrb[0].mxu0
    %v3027 = vadd.f32 %v2939, %v3026
    %v3028 = vpop.f32.mrb[0].mxu0
    %3029 = vdwg.mxu0
    %3033 = vrot.lane.b32.xlu0 %v2908, 96
    %v3034 = vpop.permute.xlu0 %3033
    %3035 = vrot.lane.b32.xlu0 %v2913, 96
    %v3036 = vpop.permute.xlu0 %3035
    %3037 = vrot.lane.b32.xlu0 %v2918, 96
    %v3038 = vpop.permute.xlu0 %3037
    %v3039 = vsel %vm468, %v2908, 0
    %v3041 = vsel %vm468, %v2913, 0
    %v3043 = vsel %vm468, %v2918, 0
    %v3045 = vsel %vm468, %v3034, 0
    %v3047 = vsel %vm468, %v3036, 0
    %v3049 = vsel %vm468, %v3038, 0
    %3051 = vmatprep.subr.mxu0 0.0
    %3052 = vmatpush1.xpose.msra.mxu0 %v3045
    %3053 = vmatprep.subr.mxu0 0.0
    %3054 = vmatpush1.xpose.msra.mxu0 %v3047
    %3055 = vmatprep.subr.mxu0 0.0
    %3056 = vmatpush1.xpose.msra.mxu0 %v3049
    %3057 = vmatprep.subr.mxu0 0.0
    %3058 = vmatpush1.xpose.msra.mxu0 0.0
    %3059 = vmatprep.subr.mxu0 0.0
    %3060 = vmatpush1.xpose.msra.mxu0 0.0
    %3061 = vmatprep.subr.mxu0 0.0
    %3062 = vmatpush1.xpose.msra.mxu0 0.0
    %3063 = vmatprep.subr.mxu0 0.0
    %3064 = vmatpush1.xpose.msra.mxu0 0.0
    %3065 = vmatprep.subr.mxu0 0.0
    %3066 = vmatpush1.xpose.msra.mxu0 0.0
    %3067 = vmatprep.subr.mxu0 0.0
    %3068 = vmatpush1.xpose.msra.mxu0 0.0
    %3069 = vmatprep.subr.mxu0 0.0
    %3070 = vmatpush1.xpose.msra.mxu0 0.0
    %3071 = vmatprep.subr.mxu0 0.0
    %3072 = vmatpush1.xpose.msra.mxu0 0.0
    %3073 = vmatprep.subr.mxu0 0.0
    %3074 = vmatpush1.xpose.msra.mxu0 0.0
    %3075 = vmatprep.subr.mxu0 0.0
    %3076 = vmatpush1.xpose.msra.mxu0 0.0
    %3077 = vmatprep.subr.mxu0 0.0
    %3078 = vmatpush1.xpose.msra.mxu0 0.0
    %3079 = vmatprep.subr.mxu0 0.0
    %3080 = vmatpush1.xpose.msra.mxu0 0.0
    %3081 = vmatprep.subr.mxu0 0.0
    %3082 = vmatpush1.xpose.msra.mxu0 0.0
    %3083 = vmatprep.subr.mxu0 0.0
    %3084 = vmatpush1.xpose.msra.mxu0 0.0
    %3085 = vmatprep.subr.mxu0 0.0
    %3086 = vmatpush1.xpose.msra.mxu0 0.0
    %3087 = vmatprep.subr.mxu0 0.0
    %3088 = vmatpush1.xpose.msra.mxu0 0.0
    %3089 = vmatprep.subr.mxu0 0.0
    %3090 = vmatpush1.xpose.msra.mxu0 0.0
    %3091 = vmatprep.subr.mxu0 0.0
    %3092 = vmatpush1.xpose.msra.mxu0 0.0
    %3093 = vmatprep.subr.mxu0 0.0
    %3094 = vmatpush1.xpose.msra.mxu0 0.0
    %3095 = vmatprep.subr.mxu0 0.0
    %3096 = vmatpush1.xpose.msra.mxu0 0.0
    %3097 = vmatprep.subr.mxu0 0.0
    %3098 = vmatpush1.xpose.msra.mxu0 0.0
    %3099 = vmatprep.subr.mxu0 0.0
    %3100 = vmatpush1.xpose.msra.mxu0 0.0
    %3101 = vmatprep.subr.mxu0 0.0
    %3102 = vmatpush1.xpose.msra.mxu0 0.0
    %3103 = vmatprep.subr.mxu0 0.0
    %3104 = vmatpush1.xpose.msra.mxu0 0.0
    %3105 = vmatprep.subr.mxu0 0.0
    %3106 = vmatpush1.xpose.msra.mxu0 0.0
    %3107 = vmatprep.subr.mxu0 0.0
    %3108 = vmatpush1.xpose.msra.mxu0 0.0
    %3109 = vmatprep.subr.mxu0 0.0
    %3110 = vmatpush1.xpose.msra.mxu0 0.0
    %3111 = vmatprep.subr.mxu0 0.0
    %3112 = vmatpush1.xpose.msra.mxu0 0.0
    %3113 = vmatprep.subr.mxu0 0.0
    %3114 = vmatpush1.xpose.msra.mxu0 0.0
    %3115 = vmatprep.mubr.f32.mxu0 0.0
    %3116 = vmatmul.mubr.f32.gmra.mrb[0].mxu0 %v3039
    %v3117 = vpop.f32.mrb[0].mxu0
    %v3118 = vadd.f32 0.0, %v3117
    %v3119 = vpop.f32.mrb[0].mxu0
    %3120 = vmatprep.mubr.f32.mxu0 0.0
    %3121 = vmatmul.mubr.f32.gmra.mrb[0].mxu0 %v3041
    %v3122 = vpop.f32.mrb[0].mxu0
    %v3123 = vadd.f32 0.0, %v3122
    %v3124 = vpop.f32.mrb[0].mxu0
    %3125 = vmatprep.mubr.f32.mxu0 0.0
    %3126 = vmatmul.mubr.f32.gmra.mrb[0].mxu0 %v3043
    %v3127 = vpop.f32.mrb[0].mxu0
    %v3128 = vadd.f32 0.0, %v3127
    %v3129 = vpop.f32.mrb[0].mxu0
    %3130 = vdwg.mxu0
    %v3131 = vsel %vm561, %v3118, -inf
    %3132 = vmax.xlane.f32.xlu0 %v3131
    %v3133 = vpop.xlane.xlu0 %3132
    %v3134 = vsel %vm561, %v3123, -inf
    %3135 = vmax.xlane.f32.xlu0 %v3134
    %v3136 = vpop.xlane.xlu0 %3135
    %v3137 = vsel %vm568, %v3128, -inf
    %3138 = vmax.xlane.f32.xlu0 %v3137
    %v3139 = vpop.xlane.xlu0 %3138
    %v3140 = vsub.f32 %v3118, %v3133
    %v3141 = vsub.f32 %v3123, %v3136
    %v3142 = vsub.f32 %v3128, %v3139
    %v3143 = vmul.f32 %v3140, 1.442695
    %v3144 = vpow.pop %v3143
    %v3145 = vmul.f32 %v3141, 1.442695
    %v3146 = vpow.pop %v3145
    %v3147 = vmul.f32 %v3142, 1.442695
    %v3148 = vpow.pop %v3147
    %v3149 = vsel %vm561, %v3144, 0.0
    %3150 = vadd.xlane.f32.xlu0 %v3149
    %v3151 = vpop.xlane.xlu0 %3150
    %v3152 = vsel %vm561, %v3146, 0.0
    %3153 = vadd.xlane.f32.xlu0 %v3152
    %v3154 = vpop.xlane.xlu0 %3153
    %v3155 = vsel %vm568, %v3148, 0.0
    %3156 = vadd.xlane.f32.xlu0 %v3155
    %v3157 = vpop.xlane.xlu0 %3156
    %v3158 = vrcp.pop %v3151
    %v3159 = vmul.f32 %v3144, %v3158
    %v3160 = vrcp.pop %v3154
    %v3161 = vmul.f32 %v3146, %v3160
    %v3162 = vrcp.pop %v3157
    %v3163 = vmul.f32 %v3148, %v3162
    %3164 = vrot.lane.b32.xlu0 %v2908, 120
    %v3165 = vpop.permute.xlu0 %3164
    %3166 = vrot.lane.b32.xlu0 %v2913, 120
    %v3167 = vpop.permute.xlu0 %3166
    %3168 = vrot.lane.b32.xlu0 %v2918, 120
    %v3169 = vpop.permute.xlu0 %3168
    %3170 = vrot.lane.b32.xlu0 %v2908, 88
    %v3171 = vpop.permute.xlu0 %3170
    %3172 = vrot.lane.b32.xlu0 %v2913, 88
    %v3173 = vpop.permute.xlu0 %3172
    %3174 = vrot.lane.b32.xlu0 %v2918, 88
    %v3175 = vpop.permute.xlu0 %3174
    %v3176 = vsel %vm468, %v3165, 0
    %v3178 = vsel %vm468, %v3167, 0
    %v3180 = vsel %vm468, %v3169, 0
    %v3182 = vsel %vm468, %v3171, 0
    %v3184 = vsel %vm468, %v3173, 0
    %v3186 = vsel %vm468, %v3175, 0
    %3188 = vmatprep.subr.mxu0 0.0
    %3189 = vmatpush1.xpose.msra.mxu0 %v3182
    %3190 = vmatprep.subr.mxu0 0.0
    %3191 = vmatpush1.xpose.msra.mxu0 %v3184
    %3192 = vmatprep.subr.mxu0 0.0
    %3193 = vmatpush1.xpose.msra.mxu0 %v3186
    %3194 = vmatprep.subr.mxu0 0.0
    %3195 = vmatpush1.xpose.msra.mxu0 0.0
    %3196 = vmatprep.subr.mxu0 0.0
    %3197 = vmatpush1.xpose.msra.mxu0 0.0
    %3198 = vmatprep.subr.mxu0 0.0
    %3199 = vmatpush1.xpose.msra.mxu0 0.0
    %3200 = vmatprep.subr.mxu0 0.0
    %3201 = vmatpush1.xpose.msra.mxu0 0.0
    %3202 = vmatprep.subr.mxu0 0.0
    %3203 = vmatpush1.xpose.msra.mxu0 0.0
    %3204 = vmatprep.subr.mxu0 0.0
    %3205 = vmatpush1.xpose.msra.mxu0 0.0
    %3206 = vmatprep.subr.mxu0 0.0
    %3207 = vmatpush1.xpose.msra.mxu0 0.0
    %3208 = vmatprep.subr.mxu0 0.0
    %3209 = vmatpush1.xpose.msra.mxu0 0.0
    %3210 = vmatprep.subr.mxu0 0.0
    %3211 = vmatpush1.xpose.msra.mxu0 0.0
    %3212 = vmatprep.subr.mxu0 0.0
    %3213 = vmatpush1.xpose.msra.mxu0 0.0
    %3214 = vmatprep.subr.mxu0 0.0
    %3215 = vmatpush1.xpose.msra.mxu0 0.0
    %3216 = vmatprep.subr.mxu0 0.0
    %3217 = vmatpush1.xpose.msra.mxu0 0.0
    %3218 = vmatprep.subr.mxu0 0.0
    %3219 = vmatpush1.xpose.msra.mxu0 0.0
    %3220 = vmatprep.subr.mxu0 0.0
    %3221 = vmatpush1.xpose.msra.mxu0 0.0
    %3222 = vmatprep.subr.mxu0 0.0
    %3223 = vmatpush1.xpose.msra.mxu0 0.0
    %3224 = vmatprep.subr.mxu0 0.0
    %3225 = vmatpush1.xpose.msra.mxu0 0.0
    %3226 = vmatprep.subr.mxu0 0.0
    %3227 = vmatpush1.xpose.msra.mxu0 0.0
    %3228 = vmatprep.subr.mxu0 0.0
    %3229 = vmatpush1.xpose.msra.mxu0 0.0
    %3230 = vmatprep.subr.mxu0 0.0
    %3231 = vmatpush1.xpose.msra.mxu0 0.0
    %3232 = vmatprep.subr.mxu0 0.0
    %3233 = vmatpush1.xpose.msra.mxu0 0.0
    %3234 = vmatprep.subr.mxu0 0.0
    %3235 = vmatpush1.xpose.msra.mxu0 0.0
    %3236 = vmatprep.subr.mxu0 0.0
    %3237 = vmatpush1.xpose.msra.mxu0 0.0
    %3238 = vmatprep.subr.mxu0 0.0
    %3239 = vmatpush1.xpose.msra.mxu0 0.0
    %3240 = vmatprep.subr.mxu0 0.0
    %3241 = vmatpush1.xpose.msra.mxu0 0.0
    %3242 = vmatprep.subr.mxu0 0.0
    %3243 = vmatpush1.xpose.msra.mxu0 0.0
    %3244 = vmatprep.subr.mxu0 0.0
    %3245 = vmatpush1.xpose.msra.mxu0 0.0
    %3246 = vmatprep.subr.mxu0 0.0
    %3247 = vmatpush1.xpose.msra.mxu0 0.0
    %3248 = vmatprep.subr.mxu0 0.0
    %3249 = vmatpush1.xpose.msra.mxu0 0.0
    %3250 = vmatprep.subr.mxu0 0.0
    %3251 = vmatpush1.xpose.msra.mxu0 0.0
    %3252 = vmatprep.mubr.f32.mxu0 0.0
    %3253 = vmatmul.mubr.f32.gmra.mrb[0].mxu0 %v3176
    %v3254 = vpop.f32.mrb[0].mxu0
    %v3255 = vadd.f32 0.0, %v3254
    %v3256 = vpop.f32.mrb[0].mxu0
    %3257 = vmatprep.mubr.f32.mxu0 0.0
    %3258 = vmatmul.mubr.f32.gmra.mrb[0].mxu0 %v3178
    %v3259 = vpop.f32.mrb[0].mxu0
    %v3260 = vadd.f32 0.0, %v3259
    %v3261 = vpop.f32.mrb[0].mxu0
    %3262 = vmatprep.mubr.f32.mxu0 0.0
    %3263 = vmatmul.mubr.f32.gmra.mrb[0].mxu0 %v3180
    %v3264 = vpop.f32.mrb[0].mxu0
    %v3265 = vadd.f32 0.0, %v3264
    %v3266 = vpop.f32.mrb[0].mxu0
    %3267 = vdwg.mxu0
    %v3268 = vsel %vm561, %v3255, -inf
    %3269 = vmax.xlane.f32.xlu0 %v3268
    %v3270 = vpop.xlane.xlu0 %3269
    %v3271 = vsel %vm561, %v3260, -inf
    %3272 = vmax.xlane.f32.xlu0 %v3271
    %v3273 = vpop.xlane.xlu0 %3272
    %v3274 = vsel %vm568, %v3265, -inf
    %3275 = vmax.xlane.f32.xlu0 %v3274
    %v3276 = vpop.xlane.xlu0 %3275
    %v3277 = vsub.f32 %v3255, %v3270
    %v3278 = vsub.f32 %v3260, %v3273
    %v3279 = vsub.f32 %v3265, %v3276
    %v3280 = vmul.f32 %v3277, 1.442695
    %v3281 = vpow.pop %v3280
    %v3282 = vmul.f32 %v3278, 1.442695
    %v3283 = vpow.pop %v3282
    %v3284 = vmul.f32 %v3279, 1.442695
    %v3285 = vpow.pop %v3284
    %v3286 = vsel %vm561, %v3281, 0.0
    %3287 = vadd.xlane.f32.xlu0 %v3286
    %v3288 = vpop.xlane.xlu0 %3287
    %v3289 = vsel %vm561, %v3283, 0.0
    %3290 = vadd.xlane.f32.xlu0 %v3289
    %v3291 = vpop.xlane.xlu0 %3290
    %v3292 = vsel %vm568, %v3285, 0.0
    %3293 = vadd.xlane.f32.xlu0 %v3292
    %v3294 = vpop.xlane.xlu0 %3293
    %v3295 = vrcp.pop %v3288
    %v3296 = vmul.f32 %v3281, %v3295
    %v3297 = vrcp.pop %v3291
    %v3298 = vmul.f32 %v3283, %v3297
    %v3299 = vrcp.pop %v3294
    %v3300 = vmul.f32 %v3285, %v3299
    %3304 = vrot.lane.b32.xlu0 %v3007, 96
    %v3305 = vpop.permute.xlu0 %3304
    %3306 = vrot.lane.b32.xlu0 %v3012, 96
    %v3307 = vpop.permute.xlu0 %3306
    %3308 = vrot.lane.b32.xlu0 %v3017, 96
    %v3309 = vpop.permute.xlu0 %3308
    %v3313 = vsel %vm561, %v3296, 0
    %v3316 = vsel %vm561, %v3298, 0
    %v3319 = vsel %vm561, %v3300, 0
    %v3321 = vsel %vm25, %v3309, 0
    %3323 = vmatprep.subr.mxu0 0.0
    %3324 = vmatpush1.msra.mxu0 %v3305
    %3325 = vmatprep.subr.mxu0 0.0
    %3326 = vmatpush1.msra.mxu0 %v3307
    %3327 = vmatprep.subr.mxu0 0.0
    %3328 = vmatpush1.msra.mxu0 %v3321
    %3329 = vmatprep.subr.mxu0 0.0
    %3330 = vmatpush1.msra.mxu0 0.0
    %3331 = vmatprep.subr.mxu0 0.0
    %3332 = vmatpush1.msra.mxu0 0.0
    %3333 = vmatprep.subr.mxu0 0.0
    %3334 = vmatpush1.msra.mxu0 0.0
    %3335 = vmatprep.subr.mxu0 0.0
    %3336 = vmatpush1.msra.mxu0 0.0
    %3337 = vmatprep.subr.mxu0 0.0
    %3338 = vmatpush1.msra.mxu0 0.0
    %3339 = vmatprep.subr.mxu0 0.0
    %3340 = vmatpush1.msra.mxu0 0.0
    %3341 = vmatprep.subr.mxu0 0.0
    %3342 = vmatpush1.msra.mxu0 0.0
    %3343 = vmatprep.subr.mxu0 0.0
    %3344 = vmatpush1.msra.mxu0 0.0
    %3345 = vmatprep.subr.mxu0 0.0
    %3346 = vmatpush1.msra.mxu0 0.0
    %3347 = vmatprep.subr.mxu0 0.0
    %3348 = vmatpush1.msra.mxu0 0.0
    %3349 = vmatprep.subr.mxu0 0.0
    %3350 = vmatpush1.msra.mxu0 0.0
    %3351 = vmatprep.subr.mxu0 0.0
    %3352 = vmatpush1.msra.mxu0 0.0
    %3353 = vmatprep.subr.mxu0 0.0
    %3354 = vmatpush1.msra.mxu0 0.0
    %3355 = vmatprep.subr.mxu0 0.0
    %3356 = vmatpush1.msra.mxu0 0.0
    %3357 = vmatprep.subr.mxu0 0.0
    %3358 = vmatpush1.msra.mxu0 0.0
    %3359 = vmatprep.subr.mxu0 0.0
    %3360 = vmatpush1.msra.mxu0 0.0
    %3361 = vmatprep.subr.mxu0 0.0
    %3362 = vmatpush1.msra.mxu0 0.0
    %3363 = vmatprep.subr.mxu0 0.0
    %3364 = vmatpush1.msra.mxu0 0.0
    %3365 = vmatprep.subr.mxu0 0.0
    %3366 = vmatpush1.msra.mxu0 0.0
    %3367 = vmatprep.subr.mxu0 0.0
    %3368 = vmatpush1.msra.mxu0 0.0
    %3369 = vmatprep.subr.mxu0 0.0
    %3370 = vmatpush1.msra.mxu0 0.0
    %3371 = vmatprep.subr.mxu0 0.0
    %3372 = vmatpush1.msra.mxu0 0.0
    %3373 = vmatprep.subr.mxu0 0.0
    %3374 = vmatpush1.msra.mxu0 0.0
    %3375 = vmatprep.subr.mxu0 0.0
    %3376 = vmatpush1.msra.mxu0 0.0
    %3377 = vmatprep.subr.mxu0 0.0
    %3378 = vmatpush1.msra.mxu0 0.0
    %3379 = vmatprep.subr.mxu0 0.0
    %3380 = vmatpush1.msra.mxu0 0.0
    %3381 = vmatprep.subr.mxu0 0.0
    %3382 = vmatpush1.msra.mxu0 0.0
    %3383 = vmatprep.subr.mxu0 0.0
    %3384 = vmatpush1.msra.mxu0 0.0
    %3385 = vmatprep.subr.mxu0 0.0
    %3386 = vmatpush1.msra.mxu0 0.0
    %3387 = vmatprep.mubr.f32.mxu0 0.0
    %3388 = vmatmul.mubr.f32.gmra.mrb[0].mxu0 %v3313
    %v3389 = vpop.f32.mrb[0].mxu0
    %v3390 = vadd.f32 0.0, %v3389
    %v3391 = vpop.f32.mrb[0].mxu0
    %3392 = vmatprep.mubr.f32.mxu0 0.0
    %3393 = vmatmul.mubr.f32.gmra.mrb[0].mxu0 %v3316
    %v3394 = vpop.f32.mrb[0].mxu0
    %v3395 = vadd.f32 0.0, %v3394
    %v3396 = vpop.f32.mrb[0].mxu0
    %3397 = vmatprep.mubr.f32.mxu0 0.0
    %3398 = vmatmul.mubr.f32.gmra.mrb[0].mxu0 %v3319
    %v3399 = vpop.f32.mrb[0].mxu0
    %v3400 = vadd.f32 0.0, %v3399
    %v3401 = vpop.f32.mrb[0].mxu0
    %3402 = vdwg.mxu0
    %v3404 = vsel %vm561, %v3159, 0
    %v3407 = vsel %vm561, %v3161, 0
    %v3410 = vsel %vm561, %v3163, 0
    %v3412 = vsel %vm25, %v3017, 0
    %3414 = vmatprep.subr.mxu0 0.0
    %3415 = vmatpush1.msra.mxu0 %v3007
    %3416 = vmatprep.subr.mxu0 0.0
    %3417 = vmatpush1.msra.mxu0 %v3012
    %3418 = vmatprep.subr.mxu0 0.0
    %3419 = vmatpush1.msra.mxu0 %v3412
    %3420 = vmatprep.subr.mxu0 0.0
    %3421 = vmatpush1.msra.mxu0 0.0
    %3422 = vmatprep.subr.mxu0 0.0
    %3423 = vmatpush1.msra.mxu0 0.0
    %3424 = vmatprep.subr.mxu0 0.0
    %3425 = vmatpush1.msra.mxu0 0.0
    %3426 = vmatprep.subr.mxu0 0.0
    %3427 = vmatpush1.msra.mxu0 0.0
    %3428 = vmatprep.subr.mxu0 0.0
    %3429 = vmatpush1.msra.mxu0 0.0
    %3430 = vmatprep.subr.mxu0 0.0
    %3431 = vmatpush1.msra.mxu0 0.0
    %3432 = vmatprep.subr.mxu0 0.0
    %3433 = vmatpush1.msra.mxu0 0.0
    %3434 = vmatprep.subr.mxu0 0.0
    %3435 = vmatpush1.msra.mxu0 0.0
    %3436 = vmatprep.subr.mxu0 0.0
    %3437 = vmatpush1.msra.mxu0 0.0
    %3438 = vmatprep.subr.mxu0 0.0
    %3439 = vmatpush1.msra.mxu0 0.0
    %3440 = vmatprep.subr.mxu0 0.0
    %3441 = vmatpush1.msra.mxu0 0.0
    %3442 = vmatprep.subr.mxu0 0.0
    %3443 = vmatpush1.msra.mxu0 0.0
    %3444 = vmatprep.subr.mxu0 0.0
    %3445 = vmatpush1.msra.mxu0 0.0
    %3446 = vmatprep.subr.mxu0 0.0
    %3447 = vmatpush1.msra.mxu0 0.0
    %3448 = vmatprep.subr.mxu0 0.0
    %3449 = vmatpush1.msra.mxu0 0.0
    %3450 = vmatprep.subr.mxu0 0.0
    %3451 = vmatpush1.msra.mxu0 0.0
    %3452 = vmatprep.subr.mxu0 0.0
    %3453 = vmatpush1.msra.mxu0 0.0
    %3454 = vmatprep.subr.mxu0 0.0
    %3455 = vmatpush1.msra.mxu0 0.0
    %3456 = vmatprep.subr.mxu0 0.0
    %3457 = vmatpush1.msra.mxu0 0.0
    %3458 = vmatprep.subr.mxu0 0.0
    %3459 = vmatpush1.msra.mxu0 0.0
    %3460 = vmatprep.subr.mxu0 0.0
    %3461 = vmatpush1.msra.mxu0 0.0
    %3462 = vmatprep.subr.mxu0 0.0
    %3463 = vmatpush1.msra.mxu0 0.0
    %3464 = vmatprep.subr.mxu0 0.0
    %3465 = vmatpush1.msra.mxu0 0.0
    %3466 = vmatprep.subr.mxu0 0.0
    %3467 = vmatpush1.msra.mxu0 0.0
    %3468 = vmatprep.subr.mxu0 0.0
    %3469 = vmatpush1.msra.mxu0 0.0
    %3470 = vmatprep.subr.mxu0 0.0
    %3471 = vmatpush1.msra.mxu0 0.0
    %3472 = vmatprep.subr.mxu0 0.0
    %3473 = vmatpush1.msra.mxu0 0.0
    %3474 = vmatprep.subr.mxu0 0.0
    %3475 = vmatpush1.msra.mxu0 0.0
    %3476 = vmatprep.subr.mxu0 0.0
    %3477 = vmatpush1.msra.mxu0 0.0
    %3478 = vmatprep.mubr.f32.mxu0 0.0
    %3479 = vmatmul.mubr.f32.gmra.mrb[0].mxu0 %v3404
    %v3480 = vpop.f32.mrb[0].mxu0
    %v3481 = vadd.f32 %v3390, %v3480
    %v3482 = vpop.f32.mrb[0].mxu0
    %3483 = vmatprep.mubr.f32.mxu0 0.0
    %3484 = vmatmul.mubr.f32.gmra.mrb[0].mxu0 %v3407
    %v3485 = vpop.f32.mrb[0].mxu0
    %v3486 = vadd.f32 %v3395, %v3485
    %v3487 = vpop.f32.mrb[0].mxu0
    %3488 = vmatprep.mubr.f32.mxu0 0.0
    %3489 = vmatmul.mubr.f32.gmra.mrb[0].mxu0 %v3410
    %v3490 = vpop.f32.mrb[0].mxu0
    %v3491 = vadd.f32 %v3400, %v3490
    %v3492 = vpop.f32.mrb[0].mxu0
    %3493 = vdwg.mxu0
    %3494 = vrot.lane.b32.xlu0 %v2908, 112
    %v3495 = vpop.permute.xlu0 %3494
    %3496 = vrot.lane.b32.xlu0 %v2913, 112
    %v3497 = vpop.permute.xlu0 %3496
    %3498 = vrot.lane.b32.xlu0 %v2918, 112
    %v3499 = vpop.permute.xlu0 %3498
    %3500 = vrot.lane.b32.xlu0 %v2908, 80
    %v3501 = vpop.permute.xlu0 %3500
    %3502 = vrot.lane.b32.xlu0 %v2913, 80
    %v3503 = vpop.permute.xlu0 %3502
    %3504 = vrot.lane.b32.xlu0 %v2918, 80
    %v3505 = vpop.permute.xlu0 %3504
    %v3506 = vsel %vm468, %v3495, 0
    %v3508 = vsel %vm468, %v3497, 0
    %v3510 = vsel %vm468, %v3499, 0
    %v3512 = vsel %vm468, %v3501, 0
    %v3514 = vsel %vm468, %v3503, 0
    %v3516 = vsel %vm468, %v3505, 0
    %3518 = vmatprep.subr.mxu0 0.0
    %3519 = vmatpush1.xpose.msra.mxu0 %v3512
    %3520 = vmatprep.subr.mxu0 0.0
    %3521 = vmatpush1.xpose.msra.mxu0 %v3514
    %3522 = vmatprep.subr.mxu0 0.0
    %3523 = vmatpush1.xpose.msra.mxu0 %v3516
    %3524 = vmatprep.subr.mxu0 0.0
    %3525 = vmatpush1.xpose.msra.mxu0 0.0
    %3526 = vmatprep.subr.mxu0 0.0
    %3527 = vmatpush1.xpose.msra.mxu0 0.0
    %3528 = vmatprep.subr.mxu0 0.0
    %3529 = vmatpush1.xpose.msra.mxu0 0.0
    %3530 = vmatprep.subr.mxu0 0.0
    %3531 = vmatpush1.xpose.msra.mxu0 0.0
    %3532 = vmatprep.subr.mxu0 0.0
    %3533 = vmatpush1.xpose.msra.mxu0 0.0
    %3534 = vmatprep.subr.mxu0 0.0
    %3535 = vmatpush1.xpose.msra.mxu0 0.0
    %3536 = vmatprep.subr.mxu0 0.0
    %3537 = vmatpush1.xpose.msra.mxu0 0.0
    %3538 = vmatprep.subr.mxu0 0.0
    %3539 = vmatpush1.xpose.msra.mxu0 0.0
    %3540 = vmatprep.subr.mxu0 0.0
    %3541 = vmatpush1.xpose.msra.mxu0 0.0
    %3542 = vmatprep.subr.mxu0 0.0
    %3543 = vmatpush1.xpose.msra.mxu0 0.0
    %3544 = vmatprep.subr.mxu0 0.0
    %3545 = vmatpush1.xpose.msra.mxu0 0.0
    %3546 = vmatprep.subr.mxu0 0.0
    %3547 = vmatpush1.xpose.msra.mxu0 0.0
    %3548 = vmatprep.subr.mxu0 0.0
    %3549 = vmatpush1.xpose.msra.mxu0 0.0
    %3550 = vmatprep.subr.mxu0 0.0
    %3551 = vmatpush1.xpose.msra.mxu0 0.0
    %3552 = vmatprep.subr.mxu0 0.0
    %3553 = vmatpush1.xpose.msra.mxu0 0.0
    %3554 = vmatprep.subr.mxu0 0.0
    %3555 = vmatpush1.xpose.msra.mxu0 0.0
    %3556 = vmatprep.subr.mxu0 0.0
    %3557 = vmatpush1.xpose.msra.mxu0 0.0
    %3558 = vmatprep.subr.mxu0 0.0
    %3559 = vmatpush1.xpose.msra.mxu0 0.0
    %3560 = vmatprep.subr.mxu0 0.0
    %3561 = vmatpush1.xpose.msra.mxu0 0.0
    %3562 = vmatprep.subr.mxu0 0.0
    %3563 = vmatpush1.xpose.msra.mxu0 0.0
    %3564 = vmatprep.subr.mxu0 0.0
    %3565 = vmatpush1.xpose.msra.mxu0 0.0
    %3566 = vmatprep.subr.mxu0 0.0
    %3567 = vmatpush1.xpose.msra.mxu0 0.0
    %3568 = vmatprep.subr.mxu0 0.0
    %3569 = vmatpush1.xpose.msra.mxu0 0.0
    %3570 = vmatprep.subr.mxu0 0.0
    %3571 = vmatpush1.xpose.msra.mxu0 0.0
    %3572 = vmatprep.subr.mxu0 0.0
    %3573 = vmatpush1.xpose.msra.mxu0 0.0
    %3574 = vmatprep.subr.mxu0 0.0
    %3575 = vmatpush1.xpose.msra.mxu0 0.0
    %3576 = vmatprep.subr.mxu0 0.0
    %3577 = vmatpush1.xpose.msra.mxu0 0.0
    %3578 = vmatprep.subr.mxu0 0.0
    %3579 = vmatpush1.xpose.msra.mxu0 0.0
    %3580 = vmatprep.subr.mxu0 0.0
    %3581 = vmatpush1.xpose.msra.mxu0 0.0
    %3582 = vmatprep.mubr.f32.mxu0 0.0
    %3583 = vmatmul.mubr.f32.gmra.mrb[0].mxu0 %v3506
    %v3584 = vpop.f32.mrb[0].mxu0
    %v3585 = vadd.f32 0.0, %v3584
    %v3586 = vpop.f32.mrb[0].mxu0
    %3587 = vmatprep.mubr.f32.mxu0 0.0
    %3588 = vmatmul.mubr.f32.gmra.mrb[0].mxu0 %v3508
    %v3589 = vpop.f32.mrb[0].mxu0
    %v3590 = vadd.f32 0.0, %v3589
    %v3591 = vpop.f32.mrb[0].mxu0
    %3592 = vmatprep.mubr.f32.mxu0 0.0
    %3593 = vmatmul.mubr.f32.gmra.mrb[0].mxu0 %v3510
    %v3594 = vpop.f32.mrb[0].mxu0
    %v3595 = vadd.f32 0.0, %v3594
    %v3596 = vpop.f32.mrb[0].mxu0
    %3597 = vdwg.mxu0
    %v3598 = vsel %vm561, %v3585, -inf
    %3599 = vmax.xlane.f32.xlu0 %v3598
    %v3600 = vpop.xlane.xlu0 %3599
    %v3601 = vsel %vm561, %v3590, -inf
    %3602 = vmax.xlane.f32.xlu0 %v3601
    %v3603 = vpop.xlane.xlu0 %3602
    %v3604 = vsel %vm568, %v3595, -inf
    %3605 = vmax.xlane.f32.xlu0 %v3604
    %v3606 = vpop.xlane.xlu0 %3605
    %v3607 = vsub.f32 %v3585, %v3600
    %v3608 = vsub.f32 %v3590, %v3603
    %v3609 = vsub.f32 %v3595, %v3606
    %v3610 = vmul.f32 %v3607, 1.442695
    %v3611 = vpow.pop %v3610
    %v3612 = vmul.f32 %v3608, 1.442695
    %v3613 = vpow.pop %v3612
    %v3614 = vmul.f32 %v3609, 1.442695
    %v3615 = vpow.pop %v3614
    %v3616 = vsel %vm561, %v3611, 0.0
    %3617 = vadd.xlane.f32.xlu0 %v3616
    %v3618 = vpop.xlane.xlu0 %3617
    %v3619 = vsel %vm561, %v3613, 0.0
    %3620 = vadd.xlane.f32.xlu0 %v3619
    %v3621 = vpop.xlane.xlu0 %3620
    %v3622 = vsel %vm568, %v3615, 0.0
    %3623 = vadd.xlane.f32.xlu0 %v3622
    %v3624 = vpop.xlane.xlu0 %3623
    %v3625 = vrcp.pop %v3618
    %v3626 = vmul.f32 %v3611, %v3625
    %v3627 = vrcp.pop %v3621
    %v3628 = vmul.f32 %v3613, %v3627
    %v3629 = vrcp.pop %v3624
    %v3630 = vmul.f32 %v3615, %v3629
    %3631 = vrot.lane.b32.xlu0 %v3007, 64
    %v3632 = vpop.permute.xlu0 %3631
    %3633 = vrot.lane.b32.xlu0 %v3012, 64
    %v3634 = vpop.permute.xlu0 %3633
    %3635 = vrot.lane.b32.xlu0 %v3017, 64
    %v3636 = vpop.permute.xlu0 %3635
    %v3640 = vsel %vm561, %v3626, 0
    %v3643 = vsel %vm561, %v3628, 0
    %v3646 = vsel %vm561, %v3630, 0
    %v3648 = vsel %vm25, %v3636, 0
    %3650 = vmatprep.subr.mxu0 0.0
    %3651 = vmatpush1.msra.mxu0 %v3632
    %3652 = vmatprep.subr.mxu0 0.0
    %3653 = vmatpush1.msra.mxu0 %v3634
    %3654 = vmatprep.subr.mxu0 0.0
    %3655 = vmatpush1.msra.mxu0 %v3648
    %3656 = vmatprep.subr.mxu0 0.0
    %3657 = vmatpush1.msra.mxu0 0.0
    %3658 = vmatprep.subr.mxu0 0.0
    %3659 = vmatpush1.msra.mxu0 0.0
    %3660 = vmatprep.subr.mxu0 0.0
    %3661 = vmatpush1.msra.mxu0 0.0
    %3662 = vmatprep.subr.mxu0 0.0
    %3663 = vmatpush1.msra.mxu0 0.0
    %3664 = vmatprep.subr.mxu0 0.0
    %3665 = vmatpush1.msra.mxu0 0.0
    %3666 = vmatprep.subr.mxu0 0.0
    %3667 = vmatpush1.msra.mxu0 0.0
    %3668 = vmatprep.subr.mxu0 0.0
    %3669 = vmatpush1.msra.mxu0 0.0
    %3670 = vmatprep.subr.mxu0 0.0
    %3671 = vmatpush1.msra.mxu0 0.0
    %3672 = vmatprep.subr.mxu0 0.0
    %3673 = vmatpush1.msra.mxu0 0.0
    %3674 = vmatprep.subr.mxu0 0.0
    %3675 = vmatpush1.msra.mxu0 0.0
    %3676 = vmatprep.subr.mxu0 0.0
    %3677 = vmatpush1.msra.mxu0 0.0
    %3678 = vmatprep.subr.mxu0 0.0
    %3679 = vmatpush1.msra.mxu0 0.0
    %3680 = vmatprep.subr.mxu0 0.0
    %3681 = vmatpush1.msra.mxu0 0.0
    %3682 = vmatprep.subr.mxu0 0.0
    %3683 = vmatpush1.msra.mxu0 0.0
    %3684 = vmatprep.subr.mxu0 0.0
    %3685 = vmatpush1.msra.mxu0 0.0
    %3686 = vmatprep.subr.mxu0 0.0
    %3687 = vmatpush1.msra.mxu0 0.0
    %3688 = vmatprep.subr.mxu0 0.0
    %3689 = vmatpush1.msra.mxu0 0.0
    %3690 = vmatprep.subr.mxu0 0.0
    %3691 = vmatpush1.msra.mxu0 0.0
    %3692 = vmatprep.subr.mxu0 0.0
    %3693 = vmatpush1.msra.mxu0 0.0
    %3694 = vmatprep.subr.mxu0 0.0
    %3695 = vmatpush1.msra.mxu0 0.0
    %3696 = vmatprep.subr.mxu0 0.0
    %3697 = vmatpush1.msra.mxu0 0.0
    %3698 = vmatprep.subr.mxu0 0.0
    %3699 = vmatpush1.msra.mxu0 0.0
    %3700 = vmatprep.subr.mxu0 0.0
    %3701 = vmatpush1.msra.mxu0 0.0
    %3702 = vmatprep.subr.mxu0 0.0
    %3703 = vmatpush1.msra.mxu0 0.0
    %3704 = vmatprep.subr.mxu0 0.0
    %3705 = vmatpush1.msra.mxu0 0.0
    %3706 = vmatprep.subr.mxu0 0.0
    %3707 = vmatpush1.msra.mxu0 0.0
    %3708 = vmatprep.subr.mxu0 0.0
    %3709 = vmatpush1.msra.mxu0 0.0
    %3710 = vmatprep.subr.mxu0 0.0
    %3711 = vmatpush1.msra.mxu0 0.0
    %3712 = vmatprep.subr.mxu0 0.0
    %3713 = vmatpush1.msra.mxu0 0.0
    %3714 = vmatprep.mubr.f32.mxu0 0.0
    %3715 = vmatmul.mubr.f32.gmra.mrb[0].mxu0 %v3640
    %v3716 = vpop.f32.mrb[0].mxu0
    %v3717 = vadd.f32 0.0, %v3716
    %v3718 = vpop.f32.mrb[0].mxu0
    %3719 = vmatprep.mubr.f32.mxu0 0.0
    %3720 = vmatmul.mubr.f32.gmra.mrb[0].mxu0 %v3643
    %v3721 = vpop.f32.mrb[0].mxu0
    %v3722 = vadd.f32 0.0, %v3721
    %v3723 = vpop.f32.mrb[0].mxu0
    %3724 = vmatprep.mubr.f32.mxu0 0.0
    %3725 = vmatmul.mubr.f32.gmra.mrb[0].mxu0 %v3646
    %v3726 = vpop.f32.mrb[0].mxu0
    %v3727 = vadd.f32 0.0, %v3726
    %v3728 = vpop.f32.mrb[0].mxu0
    %3729 = vdwg.mxu0
    %v3730 = vadd.f32 %v3481, %v3717
    %v3731 = vadd.f32 %v3486, %v3722
    %v3732 = vadd.f32 %v3491, %v3727
    %3733 = vrot.lane.b32.xlu0 %v2908, 104
    %v3734 = vpop.permute.xlu0 %3733
    %3735 = vrot.lane.b32.xlu0 %v2913, 104
    %v3736 = vpop.permute.xlu0 %3735
    %3737 = vrot.lane.b32.xlu0 %v2918, 104
    %v3738 = vpop.permute.xlu0 %3737
    %3739 = vrot.lane.b32.xlu0 %v2908, 72
    %v3740 = vpop.permute.xlu0 %3739
    %3741 = vrot.lane.b32.xlu0 %v2913, 72
    %v3742 = vpop.permute.xlu0 %3741
    %3743 = vrot.lane.b32.xlu0 %v2918, 72
    %v3744 = vpop.permute.xlu0 %3743
    %v3745 = vsel %vm468, %v3734, 0
    %v3747 = vsel %vm468, %v3736, 0
    %v3749 = vsel %vm468, %v3738, 0
    %v3751 = vsel %vm468, %v3740, 0
    %v3753 = vsel %vm468, %v3742, 0
    %v3755 = vsel %vm468, %v3744, 0
    %3757 = vmatprep.subr.mxu0 0.0
    %3758 = vmatpush1.xpose.msra.mxu0 %v3751
    %3759 = vmatprep.subr.mxu0 0.0
    %3760 = vmatpush1.xpose.msra.mxu0 %v3753
    %3761 = vmatprep.subr.mxu0 0.0
    %3762 = vmatpush1.xpose.msra.mxu0 %v3755
    %3763 = vmatprep.subr.mxu0 0.0
    %3764 = vmatpush1.xpose.msra.mxu0 0.0
    %3765 = vmatprep.subr.mxu0 0.0
    %3766 = vmatpush1.xpose.msra.mxu0 0.0
    %3767 = vmatprep.subr.mxu0 0.0
    %3768 = vmatpush1.xpose.msra.mxu0 0.0
    %3769 = vmatprep.subr.mxu0 0.0
    %3770 = vmatpush1.xpose.msra.mxu0 0.0
    %3771 = vmatprep.subr.mxu0 0.0
    %3772 = vmatpush1.xpose.msra.mxu0 0.0
    %3773 = vmatprep.subr.mxu0 0.0
    %3774 = vmatpush1.xpose.msra.mxu0 0.0
    %3775 = vmatprep.subr.mxu0 0.0
    %3776 = vmatpush1.xpose.msra.mxu0 0.0
    %3777 = vmatprep.subr.mxu0 0.0
    %3778 = vmatpush1.xpose.msra.mxu0 0.0
    %3779 = vmatprep.subr.mxu0 0.0
    %3780 = vmatpush1.xpose.msra.mxu0 0.0
    %3781 = vmatprep.subr.mxu0 0.0
    %3782 = vmatpush1.xpose.msra.mxu0 0.0
    %3783 = vmatprep.subr.mxu0 0.0
    %3784 = vmatpush1.xpose.msra.mxu0 0.0
    %3785 = vmatprep.subr.mxu0 0.0
    %3786 = vmatpush1.xpose.msra.mxu0 0.0
    %3787 = vmatprep.subr.mxu0 0.0
    %3788 = vmatpush1.xpose.msra.mxu0 0.0
    %3789 = vmatprep.subr.mxu0 0.0
    %3790 = vmatpush1.xpose.msra.mxu0 0.0
    %3791 = vmatprep.subr.mxu0 0.0
    %3792 = vmatpush1.xpose.msra.mxu0 0.0
    %3793 = vmatprep.subr.mxu0 0.0
    %3794 = vmatpush1.xpose.msra.mxu0 0.0
    %3795 = vmatprep.subr.mxu0 0.0
    %3796 = vmatpush1.xpose.msra.mxu0 0.0
    %3797 = vmatprep.subr.mxu0 0.0
    %3798 = vmatpush1.xpose.msra.mxu0 0.0
    %3799 = vmatprep.subr.mxu0 0.0
    %3800 = vmatpush1.xpose.msra.mxu0 0.0
    %3801 = vmatprep.subr.mxu0 0.0
    %3802 = vmatpush1.xpose.msra.mxu0 0.0
    %3803 = vmatprep.subr.mxu0 0.0
    %3804 = vmatpush1.xpose.msra.mxu0 0.0
    %3805 = vmatprep.subr.mxu0 0.0
    %3806 = vmatpush1.xpose.msra.mxu0 0.0
    %3807 = vmatprep.subr.mxu0 0.0
    %3808 = vmatpush1.xpose.msra.mxu0 0.0
    %3809 = vmatprep.subr.mxu0 0.0
    %3810 = vmatpush1.xpose.msra.mxu0 0.0
    %3811 = vmatprep.subr.mxu0 0.0
    %3812 = vmatpush1.xpose.msra.mxu0 0.0
    %3813 = vmatprep.subr.mxu0 0.0
    %3814 = vmatpush1.xpose.msra.mxu0 0.0
    %3815 = vmatprep.subr.mxu0 0.0
    %3816 = vmatpush1.xpose.msra.mxu0 0.0
    %3817 = vmatprep.subr.mxu0 0.0
    %3818 = vmatpush1.xpose.msra.mxu0 0.0
    %3819 = vmatprep.subr.mxu0 0.0
    %3820 = vmatpush1.xpose.msra.mxu0 0.0
    %3821 = vmatprep.mubr.f32.mxu0 0.0
    %3822 = vmatmul.mubr.f32.gmra.mrb[0].mxu0 %v3745
    %v3823 = vpop.f32.mrb[0].mxu0
    %v3824 = vadd.f32 0.0, %v3823
    %v3825 = vpop.f32.mrb[0].mxu0
    %3826 = vmatprep.mubr.f32.mxu0 0.0
    %3827 = vmatmul.mubr.f32.gmra.mrb[0].mxu0 %v3747
    %v3828 = vpop.f32.mrb[0].mxu0
    %v3829 = vadd.f32 0.0, %v3828
    %v3830 = vpop.f32.mrb[0].mxu0
    %3831 = vmatprep.mubr.f32.mxu0 0.0
    %3832 = vmatmul.mubr.f32.gmra.mrb[0].mxu0 %v3749
    %v3833 = vpop.f32.mrb[0].mxu0
    %v3834 = vadd.f32 0.0, %v3833
    %v3835 = vpop.f32.mrb[0].mxu0
    %3836 = vdwg.mxu0
    %v3837 = vsel %vm561, %v3824, -inf
    %3838 = vmax.xlane.f32.xlu0 %v3837
    %v3839 = vpop.xlane.xlu0 %3838
    %v3840 = vsel %vm561, %v3829, -inf
    %3841 = vmax.xlane.f32.xlu0 %v3840
    %v3842 = vpop.xlane.xlu0 %3841
    %v3843 = vsel %vm568, %v3834, -inf
    %3844 = vmax.xlane.f32.xlu0 %v3843
    %v3845 = vpop.xlane.xlu0 %3844
    %v3846 = vsub.f32 %v3824, %v3839
    %v3847 = vsub.f32 %v3829, %v3842
    %v3848 = vsub.f32 %v3834, %v3845
    %v3849 = vmul.f32 %v3846, 1.442695
    %v3850 = vpow.pop %v3849
    %v3851 = vmul.f32 %v3847, 1.442695
    %v3852 = vpow.pop %v3851
    %v3853 = vmul.f32 %v3848, 1.442695
    %v3854 = vpow.pop %v3853
    %v3855 = vsel %vm561, %v3850, 0.0
    %3856 = vadd.xlane.f32.xlu0 %v3855
    %v3857 = vpop.xlane.xlu0 %3856
    %v3858 = vsel %vm561, %v3852, 0.0
    %3859 = vadd.xlane.f32.xlu0 %v3858
    %v3860 = vpop.xlane.xlu0 %3859
    %v3861 = vsel %vm568, %v3854, 0.0
    %3862 = vadd.xlane.f32.xlu0 %v3861
    %v3863 = vpop.xlane.xlu0 %3862
    %v3864 = vrcp.pop %v3857
    %v3865 = vmul.f32 %v3850, %v3864
    %v3866 = vrcp.pop %v3860
    %v3867 = vmul.f32 %v3852, %v3866
    %v3868 = vrcp.pop %v3863
    %v3869 = vmul.f32 %v3854, %v3868
    %3870 = vrot.lane.b32.xlu0 %v3007, 32
    %v3871 = vpop.permute.xlu0 %3870
    %3872 = vrot.lane.b32.xlu0 %v3012, 32
    %v3873 = vpop.permute.xlu0 %3872
    %3874 = vrot.lane.b32.xlu0 %v3017, 32
    %v3875 = vpop.permute.xlu0 %3874
    %v3879 = vsel %vm561, %v3865, 0
    %v3882 = vsel %vm561, %v3867, 0
    %v3885 = vsel %vm561, %v3869, 0
    %v3887 = vsel %vm25, %v3875, 0
    %3889 = vmatprep.subr.mxu0 0.0
    %3890 = vmatpush1.msra.mxu0 %v3871
    %3891 = vmatprep.subr.mxu0 0.0
    %3892 = vmatpush1.msra.mxu0 %v3873
    %3893 = vmatprep.subr.mxu0 0.0
    %3894 = vmatpush1.msra.mxu0 %v3887
    %3895 = vmatprep.subr.mxu0 0.0
    %3896 = vmatpush1.msra.mxu0 0.0
    %3897 = vmatprep.subr.mxu0 0.0
    %3898 = vmatpush1.msra.mxu0 0.0
    %3899 = vmatprep.subr.mxu0 0.0
    %3900 = vmatpush1.msra.mxu0 0.0
    %3901 = vmatprep.subr.mxu0 0.0
    %3902 = vmatpush1.msra.mxu0 0.0
    %3903 = vmatprep.subr.mxu0 0.0
    %3904 = vmatpush1.msra.mxu0 0.0
    %3905 = vmatprep.subr.mxu0 0.0
    %3906 = vmatpush1.msra.mxu0 0.0
    %3907 = vmatprep.subr.mxu0 0.0
    %3908 = vmatpush1.msra.mxu0 0.0
    %3909 = vmatprep.subr.mxu0 0.0
    %3910 = vmatpush1.msra.mxu0 0.0
    %3911 = vmatprep.subr.mxu0 0.0
    %3912 = vmatpush1.msra.mxu0 0.0
    %3913 = vmatprep.subr.mxu0 0.0
    %3914 = vmatpush1.msra.mxu0 0.0
    %3915 = vmatprep.subr.mxu0 0.0
    %3916 = vmatpush1.msra.mxu0 0.0
    %3917 = vmatprep.subr.mxu0 0.0
    %3918 = vmatpush1.msra.mxu0 0.0
    %3919 = vmatprep.subr.mxu0 0.0
    %3920 = vmatpush1.msra.mxu0 0.0
    %3921 = vmatprep.subr.mxu0 0.0
    %3922 = vmatpush1.msra.mxu0 0.0
    %3923 = vmatprep.subr.mxu0 0.0
    %3924 = vmatpush1.msra.mxu0 0.0
    %3925 = vmatprep.subr.mxu0 0.0
    %3926 = vmatpush1.msra.mxu0 0.0
    %3927 = vmatprep.subr.mxu0 0.0
    %3928 = vmatpush1.msra.mxu0 0.0
    %3929 = vmatprep.subr.mxu0 0.0
    %3930 = vmatpush1.msra.mxu0 0.0
    %3931 = vmatprep.subr.mxu0 0.0
    %3932 = vmatpush1.msra.mxu0 0.0
    %3933 = vmatprep.subr.mxu0 0.0
    %3934 = vmatpush1.msra.mxu0 0.0
    %3935 = vmatprep.subr.mxu0 0.0
    %3936 = vmatpush1.msra.mxu0 0.0
    %3937 = vmatprep.subr.mxu0 0.0
    %3938 = vmatpush1.msra.mxu0 0.0
    %3939 = vmatprep.subr.mxu0 0.0
    %3940 = vmatpush1.msra.mxu0 0.0
    %3941 = vmatprep.subr.mxu0 0.0
    %3942 = vmatpush1.msra.mxu0 0.0
    %3943 = vmatprep.subr.mxu0 0.0
    %3944 = vmatpush1.msra.mxu0 0.0
    %3945 = vmatprep.subr.mxu0 0.0
    %3946 = vmatpush1.msra.mxu0 0.0
    %3947 = vmatprep.subr.mxu0 0.0
    %3948 = vmatpush1.msra.mxu0 0.0
    %3949 = vmatprep.subr.mxu0 0.0
    %3950 = vmatpush1.msra.mxu0 0.0
    %3951 = vmatprep.subr.mxu0 0.0
    %3952 = vmatpush1.msra.mxu0 0.0
    %3953 = vmatprep.mubr.f32.mxu0 0.0
    %3954 = vmatmul.mubr.f32.gmra.mrb[0].mxu0 %v3879
    %v3955 = vpop.f32.mrb[0].mxu0
    %v3956 = vadd.f32 0.0, %v3955
    %v3957 = vpop.f32.mrb[0].mxu0
    %3958 = vmatprep.mubr.f32.mxu0 0.0
    %3959 = vmatmul.mubr.f32.gmra.mrb[0].mxu0 %v3882
    %v3960 = vpop.f32.mrb[0].mxu0
    %v3961 = vadd.f32 0.0, %v3960
    %v3962 = vpop.f32.mrb[0].mxu0
    %3963 = vmatprep.mubr.f32.mxu0 0.0
    %3964 = vmatmul.mubr.f32.gmra.mrb[0].mxu0 %v3885
    %v3965 = vpop.f32.mrb[0].mxu0
    %v3966 = vadd.f32 0.0, %v3965
    %v3967 = vpop.f32.mrb[0].mxu0
    %3968 = vdwg.mxu0
    %v3969 = vadd.f32 %v3730, %v3956
    %v3970 = vadd.f32 %v3731, %v3961
    %v3971 = vadd.f32 %v3732, %v3966
    %v3974 = vrot.slane %v2918, 1
    %v3975 = vrot.slane %v2923, 1
    %v3976 = vsel %vm1406, %v3974, %v3975
    %v3977 = vrot.slane %v2928, 1
    %v3978 = vsel %vm1406, %v3975, %v3977
    %3979 = vrot.lane.b32.xlu0 %v3976, 96
    %v3980 = vpop.permute.xlu0 %3979
    %3981 = vrot.lane.b32.xlu0 %v3978, 96
    %v3982 = vpop.permute.xlu0 %3981
    %3983 = vrot.lane.b32.xlu0 %v3977, 96
    %v3984 = vpop.permute.xlu0 %3983
    %v3985 = vsel %vm468, %v3976, 0
    %v3987 = vsel %vm468, %v3978, 0
    %v3989 = vsel %vm468, %v3977, 0
    %v3991 = vsel %vm468, %v3980, 0
    %v3993 = vsel %vm468, %v3982, 0
    %v3995 = vsel %vm468, %v3984, 0
    %3997 = vmatprep.subr.mxu0 0.0
    %3998 = vmatpush1.xpose.msra.mxu0 %v3991
    %3999 = vmatprep.subr.mxu0 0.0
    %4000 = vmatpush1.xpose.msra.mxu0 %v3993
    %4001 = vmatprep.subr.mxu0 0.0
    %4002 = vmatpush1.xpose.msra.mxu0 %v3995
    %4003 = vmatprep.subr.mxu0 0.0
    %4004 = vmatpush1.xpose.msra.mxu0 0.0
    %4005 = vmatprep.subr.mxu0 0.0
    %4006 = vmatpush1.xpose.msra.mxu0 0.0
    %4007 = vmatprep.subr.mxu0 0.0
    %4008 = vmatpush1.xpose.msra.mxu0 0.0
    %4009 = vmatprep.subr.mxu0 0.0
    %4010 = vmatpush1.xpose.msra.mxu0 0.0
    %4011 = vmatprep.subr.mxu0 0.0
    %4012 = vmatpush1.xpose.msra.mxu0 0.0
    %4013 = vmatprep.subr.mxu0 0.0
    %4014 = vmatpush1.xpose.msra.mxu0 0.0
    %4015 = vmatprep.subr.mxu0 0.0
    %4016 = vmatpush1.xpose.msra.mxu0 0.0
    %4017 = vmatprep.subr.mxu0 0.0
    %4018 = vmatpush1.xpose.msra.mxu0 0.0
    %4019 = vmatprep.subr.mxu0 0.0
    %4020 = vmatpush1.xpose.msra.mxu0 0.0
    %4021 = vmatprep.subr.mxu0 0.0
    %4022 = vmatpush1.xpose.msra.mxu0 0.0
    %4023 = vmatprep.subr.mxu0 0.0
    %4024 = vmatpush1.xpose.msra.mxu0 0.0
    %4025 = vmatprep.subr.mxu0 0.0
    %4026 = vmatpush1.xpose.msra.mxu0 0.0
    %4027 = vmatprep.subr.mxu0 0.0
    %4028 = vmatpush1.xpose.msra.mxu0 0.0
    %4029 = vmatprep.subr.mxu0 0.0
    %4030 = vmatpush1.xpose.msra.mxu0 0.0
    %4031 = vmatprep.subr.mxu0 0.0
    %4032 = vmatpush1.xpose.msra.mxu0 0.0
    %4033 = vmatprep.subr.mxu0 0.0
    %4034 = vmatpush1.xpose.msra.mxu0 0.0
    %4035 = vmatprep.subr.mxu0 0.0
    %4036 = vmatpush1.xpose.msra.mxu0 0.0
    %4037 = vmatprep.subr.mxu0 0.0
    %4038 = vmatpush1.xpose.msra.mxu0 0.0
    %4039 = vmatprep.subr.mxu0 0.0
    %4040 = vmatpush1.xpose.msra.mxu0 0.0
    %4041 = vmatprep.subr.mxu0 0.0
    %4042 = vmatpush1.xpose.msra.mxu0 0.0
    %4043 = vmatprep.subr.mxu0 0.0
    %4044 = vmatpush1.xpose.msra.mxu0 0.0
    %4045 = vmatprep.subr.mxu0 0.0
    %4046 = vmatpush1.xpose.msra.mxu0 0.0
    %4047 = vmatprep.subr.mxu0 0.0
    %4048 = vmatpush1.xpose.msra.mxu0 0.0
    %4049 = vmatprep.subr.mxu0 0.0
    %4050 = vmatpush1.xpose.msra.mxu0 0.0
    %4051 = vmatprep.subr.mxu0 0.0
    %4052 = vmatpush1.xpose.msra.mxu0 0.0
    %4053 = vmatprep.subr.mxu0 0.0
    %4054 = vmatpush1.xpose.msra.mxu0 0.0
    %4055 = vmatprep.subr.mxu0 0.0
    %4056 = vmatpush1.xpose.msra.mxu0 0.0
    %4057 = vmatprep.subr.mxu0 0.0
    %4058 = vmatpush1.xpose.msra.mxu0 0.0
    %4059 = vmatprep.subr.mxu0 0.0
    %4060 = vmatpush1.xpose.msra.mxu0 0.0
    %4061 = vmatprep.mubr.f32.mxu0 0.0
    %4062 = vmatmul.mubr.f32.gmra.mrb[0].mxu0 %v3985
    %v4063 = vpop.f32.mrb[0].mxu0
    %v4064 = vadd.f32 0.0, %v4063
    %v4065 = vpop.f32.mrb[0].mxu0
    %4066 = vmatprep.mubr.f32.mxu0 0.0
    %4067 = vmatmul.mubr.f32.gmra.mrb[0].mxu0 %v3987
    %v4068 = vpop.f32.mrb[0].mxu0
    %v4069 = vadd.f32 0.0, %v4068
    %v4070 = vpop.f32.mrb[0].mxu0
    %4071 = vmatprep.mubr.f32.mxu0 0.0
    %4072 = vmatmul.mubr.f32.gmra.mrb[0].mxu0 %v3989
    %v4073 = vpop.f32.mrb[0].mxu0
    %v4074 = vadd.f32 0.0, %v4073
    %v4075 = vpop.f32.mrb[0].mxu0
    %4076 = vdwg.mxu0
    %v4077 = vsel %vm561, %v4064, -inf
    %4078 = vmax.xlane.f32.xlu0 %v4077
    %v4079 = vpop.xlane.xlu0 %4078
    %v4080 = vsel %vm561, %v4069, -inf
    %4081 = vmax.xlane.f32.xlu0 %v4080
    %v4082 = vpop.xlane.xlu0 %4081
    %v4083 = vsel %vm568, %v4074, -inf
    %4084 = vmax.xlane.f32.xlu0 %v4083
    %v4085 = vpop.xlane.xlu0 %4084
    %v4086 = vsub.f32 %v4064, %v4079
    %v4087 = vsub.f32 %v4069, %v4082
    %v4088 = vsub.f32 %v4074, %v4085
    %v4089 = vmul.f32 %v4086, 1.442695
    %v4090 = vpow.pop %v4089
    %v4091 = vmul.f32 %v4087, 1.442695
    %v4092 = vpow.pop %v4091
    %v4093 = vmul.f32 %v4088, 1.442695
    %v4094 = vpow.pop %v4093
    %v4095 = vsel %vm561, %v4090, 0.0
    %4096 = vadd.xlane.f32.xlu0 %v4095
    %v4097 = vpop.xlane.xlu0 %4096
    %v4098 = vsel %vm561, %v4092, 0.0
    %4099 = vadd.xlane.f32.xlu0 %v4098
    %v4100 = vpop.xlane.xlu0 %4099
    %v4101 = vsel %vm568, %v4094, 0.0
    %4102 = vadd.xlane.f32.xlu0 %v4101
    %v4103 = vpop.xlane.xlu0 %4102
    %v4104 = vrcp.pop %v4097
    %v4105 = vmul.f32 %v4090, %v4104
    %v4106 = vrcp.pop %v4100
    %v4107 = vmul.f32 %v4092, %v4106
    %v4108 = vrcp.pop %v4103
    %v4109 = vmul.f32 %v4094, %v4108
    %4110 = vrot.lane.b32.xlu0 %v3976, 120
    %v4111 = vpop.permute.xlu0 %4110
    %4112 = vrot.lane.b32.xlu0 %v3978, 120
    %v4113 = vpop.permute.xlu0 %4112
    %4114 = vrot.lane.b32.xlu0 %v3977, 120
    %v4115 = vpop.permute.xlu0 %4114
    %4116 = vrot.lane.b32.xlu0 %v3976, 88
    %v4117 = vpop.permute.xlu0 %4116
    %4118 = vrot.lane.b32.xlu0 %v3978, 88
    %v4119 = vpop.permute.xlu0 %4118
    %4120 = vrot.lane.b32.xlu0 %v3977, 88
    %v4121 = vpop.permute.xlu0 %4120
    %v4122 = vsel %vm468, %v4111, 0
    %v4124 = vsel %vm468, %v4113, 0
    %v4126 = vsel %vm468, %v4115, 0
    %v4128 = vsel %vm468, %v4117, 0
    %v4130 = vsel %vm468, %v4119, 0
    %v4132 = vsel %vm468, %v4121, 0
    %4134 = vmatprep.subr.mxu0 0.0
    %4135 = vmatpush1.xpose.msra.mxu0 %v4128
    %4136 = vmatprep.subr.mxu0 0.0
    %4137 = vmatpush1.xpose.msra.mxu0 %v4130
    %4138 = vmatprep.subr.mxu0 0.0
    %4139 = vmatpush1.xpose.msra.mxu0 %v4132
    %4140 = vmatprep.subr.mxu0 0.0
    %4141 = vmatpush1.xpose.msra.mxu0 0.0
    %4142 = vmatprep.subr.mxu0 0.0
    %4143 = vmatpush1.xpose.msra.mxu0 0.0
    %4144 = vmatprep.subr.mxu0 0.0
    %4145 = vmatpush1.xpose.msra.mxu0 0.0
    %4146 = vmatprep.subr.mxu0 0.0
    %4147 = vmatpush1.xpose.msra.mxu0 0.0
    %4148 = vmatprep.subr.mxu0 0.0
    %4149 = vmatpush1.xpose.msra.mxu0 0.0
    %4150 = vmatprep.subr.mxu0 0.0
    %4151 = vmatpush1.xpose.msra.mxu0 0.0
    %4152 = vmatprep.subr.mxu0 0.0
    %4153 = vmatpush1.xpose.msra.mxu0 0.0
    %4154 = vmatprep.subr.mxu0 0.0
    %4155 = vmatpush1.xpose.msra.mxu0 0.0
    %4156 = vmatprep.subr.mxu0 0.0
    %4157 = vmatpush1.xpose.msra.mxu0 0.0
    %4158 = vmatprep.subr.mxu0 0.0
    %4159 = vmatpush1.xpose.msra.mxu0 0.0
    %4160 = vmatprep.subr.mxu0 0.0
    %4161 = vmatpush1.xpose.msra.mxu0 0.0
    %4162 = vmatprep.subr.mxu0 0.0
    %4163 = vmatpush1.xpose.msra.mxu0 0.0
    %4164 = vmatprep.subr.mxu0 0.0
    %4165 = vmatpush1.xpose.msra.mxu0 0.0
    %4166 = vmatprep.subr.mxu0 0.0
    %4167 = vmatpush1.xpose.msra.mxu0 0.0
    %4168 = vmatprep.subr.mxu0 0.0
    %4169 = vmatpush1.xpose.msra.mxu0 0.0
    %4170 = vmatprep.subr.mxu0 0.0
    %4171 = vmatpush1.xpose.msra.mxu0 0.0
    %4172 = vmatprep.subr.mxu0 0.0
    %4173 = vmatpush1.xpose.msra.mxu0 0.0
    %4174 = vmatprep.subr.mxu0 0.0
    %4175 = vmatpush1.xpose.msra.mxu0 0.0
    %4176 = vmatprep.subr.mxu0 0.0
    %4177 = vmatpush1.xpose.msra.mxu0 0.0
    %4178 = vmatprep.subr.mxu0 0.0
    %4179 = vmatpush1.xpose.msra.mxu0 0.0
    %4180 = vmatprep.subr.mxu0 0.0
    %4181 = vmatpush1.xpose.msra.mxu0 0.0
    %4182 = vmatprep.subr.mxu0 0.0
    %4183 = vmatpush1.xpose.msra.mxu0 0.0
    %4184 = vmatprep.subr.mxu0 0.0
    %4185 = vmatpush1.xpose.msra.mxu0 0.0
    %4186 = vmatprep.subr.mxu0 0.0
    %4187 = vmatpush1.xpose.msra.mxu0 0.0
    %4188 = vmatprep.subr.mxu0 0.0
    %4189 = vmatpush1.xpose.msra.mxu0 0.0
    %4190 = vmatprep.subr.mxu0 0.0
    %4191 = vmatpush1.xpose.msra.mxu0 0.0
    %4192 = vmatprep.subr.mxu0 0.0
    %4193 = vmatpush1.xpose.msra.mxu0 0.0
    %4194 = vmatprep.subr.mxu0 0.0
    %4195 = vmatpush1.xpose.msra.mxu0 0.0
    %4196 = vmatprep.subr.mxu0 0.0
    %4197 = vmatpush1.xpose.msra.mxu0 0.0
    %4198 = vmatprep.mubr.f32.mxu0 0.0
    %4199 = vmatmul.mubr.f32.gmra.mrb[0].mxu0 %v4122
    %v4200 = vpop.f32.mrb[0].mxu0
    %v4201 = vadd.f32 0.0, %v4200
    %v4202 = vpop.f32.mrb[0].mxu0
    %4203 = vmatprep.mubr.f32.mxu0 0.0
    %4204 = vmatmul.mubr.f32.gmra.mrb[0].mxu0 %v4124
    %v4205 = vpop.f32.mrb[0].mxu0
    %v4206 = vadd.f32 0.0, %v4205
    %v4207 = vpop.f32.mrb[0].mxu0
    %4208 = vmatprep.mubr.f32.mxu0 0.0
    %4209 = vmatmul.mubr.f32.gmra.mrb[0].mxu0 %v4126
    %v4210 = vpop.f32.mrb[0].mxu0
    %v4211 = vadd.f32 0.0, %v4210
    %v4212 = vpop.f32.mrb[0].mxu0
    %4213 = vdwg.mxu0
    %v4214 = vsel %vm561, %v4201, -inf
    %4215 = vmax.xlane.f32.xlu0 %v4214
    %v4216 = vpop.xlane.xlu0 %4215
    %v4217 = vsel %vm561, %v4206, -inf
    %4218 = vmax.xlane.f32.xlu0 %v4217
    %v4219 = vpop.xlane.xlu0 %4218
    %v4220 = vsel %vm568, %v4211, -inf
    %4221 = vmax.xlane.f32.xlu0 %v4220
    %v4222 = vpop.xlane.xlu0 %4221
    %v4223 = vsub.f32 %v4201, %v4216
    %v4224 = vsub.f32 %v4206, %v4219
    %v4225 = vsub.f32 %v4211, %v4222
    %v4226 = vmul.f32 %v4223, 1.442695
    %v4227 = vpow.pop %v4226
    %v4228 = vmul.f32 %v4224, 1.442695
    %v4229 = vpow.pop %v4228
    %v4230 = vmul.f32 %v4225, 1.442695
    %v4231 = vpow.pop %v4230
    %v4232 = vsel %vm561, %v4227, 0.0
    %4233 = vadd.xlane.f32.xlu0 %v4232
    %v4234 = vpop.xlane.xlu0 %4233
    %v4235 = vsel %vm561, %v4229, 0.0
    %4236 = vadd.xlane.f32.xlu0 %v4235
    %v4237 = vpop.xlane.xlu0 %4236
    %v4238 = vsel %vm568, %v4231, 0.0
    %4239 = vadd.xlane.f32.xlu0 %v4238
    %v4240 = vpop.xlane.xlu0 %4239
    %v4241 = vrcp.pop %v4234
    %v4242 = vmul.f32 %v4227, %v4241
    %v4243 = vrcp.pop %v4237
    %v4244 = vmul.f32 %v4229, %v4243
    %v4245 = vrcp.pop %v4240
    %v4246 = vmul.f32 %v4231, %v4245
    %v4249 = vrot.slane %v3017, 1
    %v4250 = vrot.slane %v3022, 1
    %v4251 = vsel %vm1406, %v4249, %v4250
    %v4252 = vrot.slane %v3027, 1
    %v4253 = vsel %vm1406, %v4250, %v4252
    %4254 = vrot.lane.b32.xlu0 %v4251, 96
    %v4255 = vpop.permute.xlu0 %4254
    %4256 = vrot.lane.b32.xlu0 %v4253, 96
    %v4257 = vpop.permute.xlu0 %4256
    %4258 = vrot.lane.b32.xlu0 %v4252, 96
    %v4259 = vpop.permute.xlu0 %4258
    %v4263 = vsel %vm561, %v4242, 0
    %v4266 = vsel %vm561, %v4244, 0
    %v4269 = vsel %vm561, %v4246, 0
    %v4271 = vsel %vm25, %v4259, 0
    %4273 = vmatprep.subr.mxu0 0.0
    %4274 = vmatpush1.msra.mxu0 %v4255
    %4275 = vmatprep.subr.mxu0 0.0
    %4276 = vmatpush1.msra.mxu0 %v4257
    %4277 = vmatprep.subr.mxu0 0.0
    %4278 = vmatpush1.msra.mxu0 %v4271
    %4279 = vmatprep.subr.mxu0 0.0
    %4280 = vmatpush1.msra.mxu0 0.0
    %4281 = vmatprep.subr.mxu0 0.0
    %4282 = vmatpush1.msra.mxu0 0.0
    %4283 = vmatprep.subr.mxu0 0.0
    %4284 = vmatpush1.msra.mxu0 0.0
    %4285 = vmatprep.subr.mxu0 0.0
    %4286 = vmatpush1.msra.mxu0 0.0
    %4287 = vmatprep.subr.mxu0 0.0
    %4288 = vmatpush1.msra.mxu0 0.0
    %4289 = vmatprep.subr.mxu0 0.0
    %4290 = vmatpush1.msra.mxu0 0.0
    %4291 = vmatprep.subr.mxu0 0.0
    %4292 = vmatpush1.msra.mxu0 0.0
    %4293 = vmatprep.subr.mxu0 0.0
    %4294 = vmatpush1.msra.mxu0 0.0
    %4295 = vmatprep.subr.mxu0 0.0
    %4296 = vmatpush1.msra.mxu0 0.0
    %4297 = vmatprep.subr.mxu0 0.0
    %4298 = vmatpush1.msra.mxu0 0.0
    %4299 = vmatprep.subr.mxu0 0.0
    %4300 = vmatpush1.msra.mxu0 0.0
    %4301 = vmatprep.subr.mxu0 0.0
    %4302 = vmatpush1.msra.mxu0 0.0
    %4303 = vmatprep.subr.mxu0 0.0
    %4304 = vmatpush1.msra.mxu0 0.0
    %4305 = vmatprep.subr.mxu0 0.0
    %4306 = vmatpush1.msra.mxu0 0.0
    %4307 = vmatprep.subr.mxu0 0.0
    %4308 = vmatpush1.msra.mxu0 0.0
    %4309 = vmatprep.subr.mxu0 0.0
    %4310 = vmatpush1.msra.mxu0 0.0
    %4311 = vmatprep.subr.mxu0 0.0
    %4312 = vmatpush1.msra.mxu0 0.0
    %4313 = vmatprep.subr.mxu0 0.0
    %4314 = vmatpush1.msra.mxu0 0.0
    %4315 = vmatprep.subr.mxu0 0.0
    %4316 = vmatpush1.msra.mxu0 0.0
    %4317 = vmatprep.subr.mxu0 0.0
    %4318 = vmatpush1.msra.mxu0 0.0
    %4319 = vmatprep.subr.mxu0 0.0
    %4320 = vmatpush1.msra.mxu0 0.0
    %4321 = vmatprep.subr.mxu0 0.0
    %4322 = vmatpush1.msra.mxu0 0.0
    %4323 = vmatprep.subr.mxu0 0.0
    %4324 = vmatpush1.msra.mxu0 0.0
    %4325 = vmatprep.subr.mxu0 0.0
    %4326 = vmatpush1.msra.mxu0 0.0
    %4327 = vmatprep.subr.mxu0 0.0
    %4328 = vmatpush1.msra.mxu0 0.0
    %4329 = vmatprep.subr.mxu0 0.0
    %4330 = vmatpush1.msra.mxu0 0.0
    %4331 = vmatprep.subr.mxu0 0.0
    %4332 = vmatpush1.msra.mxu0 0.0
    %4333 = vmatprep.subr.mxu0 0.0
    %4334 = vmatpush1.msra.mxu0 0.0
    %4335 = vmatprep.subr.mxu0 0.0
    %4336 = vmatpush1.msra.mxu0 0.0
    %4337 = vmatprep.mubr.f32.mxu0 0.0
    %4338 = vmatmul.mubr.f32.gmra.mrb[0].mxu0 %v4263
    %v4339 = vpop.f32.mrb[0].mxu0
    %v4340 = vadd.f32 0.0, %v4339
    %v4341 = vpop.f32.mrb[0].mxu0
    %4342 = vmatprep.mubr.f32.mxu0 0.0
    %4343 = vmatmul.mubr.f32.gmra.mrb[0].mxu0 %v4266
    %v4344 = vpop.f32.mrb[0].mxu0
    %v4345 = vadd.f32 0.0, %v4344
    %v4346 = vpop.f32.mrb[0].mxu0
    %4347 = vmatprep.mubr.f32.mxu0 0.0
    %4348 = vmatmul.mubr.f32.gmra.mrb[0].mxu0 %v4269
    %v4349 = vpop.f32.mrb[0].mxu0
    %v4350 = vadd.f32 0.0, %v4349
    %v4351 = vpop.f32.mrb[0].mxu0
    %4352 = vdwg.mxu0
    %v4356 = vsel %vm561, %v4105, 0
    %v4359 = vsel %vm561, %v4107, 0
    %v4362 = vsel %vm561, %v4109, 0
    %v4364 = vsel %vm25, %v4252, 0
    %4366 = vmatprep.subr.mxu0 0.0
    %4367 = vmatpush1.msra.mxu0 %v4251
    %4368 = vmatprep.subr.mxu0 0.0
    %4369 = vmatpush1.msra.mxu0 %v4253
    %4370 = vmatprep.subr.mxu0 0.0
    %4371 = vmatpush1.msra.mxu0 %v4364
    %4372 = vmatprep.subr.mxu0 0.0
    %4373 = vmatpush1.msra.mxu0 0.0
    %4374 = vmatprep.subr.mxu0 0.0
    %4375 = vmatpush1.msra.mxu0 0.0
    %4376 = vmatprep.subr.mxu0 0.0
    %4377 = vmatpush1.msra.mxu0 0.0
    %4378 = vmatprep.subr.mxu0 0.0
    %4379 = vmatpush1.msra.mxu0 0.0
    %4380 = vmatprep.subr.mxu0 0.0
    %4381 = vmatpush1.msra.mxu0 0.0
    %4382 = vmatprep.subr.mxu0 0.0
    %4383 = vmatpush1.msra.mxu0 0.0
    %4384 = vmatprep.subr.mxu0 0.0
    %4385 = vmatpush1.msra.mxu0 0.0
    %4386 = vmatprep.subr.mxu0 0.0
    %4387 = vmatpush1.msra.mxu0 0.0
    %4388 = vmatprep.subr.mxu0 0.0
    %4389 = vmatpush1.msra.mxu0 0.0
    %4390 = vmatprep.subr.mxu0 0.0
    %4391 = vmatpush1.msra.mxu0 0.0
    %4392 = vmatprep.subr.mxu0 0.0
    %4393 = vmatpush1.msra.mxu0 0.0
    %4394 = vmatprep.subr.mxu0 0.0
    %4395 = vmatpush1.msra.mxu0 0.0
    %4396 = vmatprep.subr.mxu0 0.0
    %4397 = vmatpush1.msra.mxu0 0.0
    %4398 = vmatprep.subr.mxu0 0.0
    %4399 = vmatpush1.msra.mxu0 0.0
    %4400 = vmatprep.subr.mxu0 0.0
    %4401 = vmatpush1.msra.mxu0 0.0
    %4402 = vmatprep.subr.mxu0 0.0
    %4403 = vmatpush1.msra.mxu0 0.0
    %4404 = vmatprep.subr.mxu0 0.0
    %4405 = vmatpush1.msra.mxu0 0.0
    %4406 = vmatprep.subr.mxu0 0.0
    %4407 = vmatpush1.msra.mxu0 0.0
    %4408 = vmatprep.subr.mxu0 0.0
    %4409 = vmatpush1.msra.mxu0 0.0
    %4410 = vmatprep.subr.mxu0 0.0
    %4411 = vmatpush1.msra.mxu0 0.0
    %4412 = vmatprep.subr.mxu0 0.0
    %4413 = vmatpush1.msra.mxu0 0.0
    %4414 = vmatprep.subr.mxu0 0.0
    %4415 = vmatpush1.msra.mxu0 0.0
    %4416 = vmatprep.subr.mxu0 0.0
    %4417 = vmatpush1.msra.mxu0 0.0
    %4418 = vmatprep.subr.mxu0 0.0
    %4419 = vmatpush1.msra.mxu0 0.0
    %4420 = vmatprep.subr.mxu0 0.0
    %4421 = vmatpush1.msra.mxu0 0.0
    %4422 = vmatprep.subr.mxu0 0.0
    %4423 = vmatpush1.msra.mxu0 0.0
    %4424 = vmatprep.subr.mxu0 0.0
    %4425 = vmatpush1.msra.mxu0 0.0
    %4426 = vmatprep.subr.mxu0 0.0
    %4427 = vmatpush1.msra.mxu0 0.0
    %4428 = vmatprep.subr.mxu0 0.0
    %4429 = vmatpush1.msra.mxu0 0.0
    %4430 = vmatprep.mubr.f32.mxu0 0.0
    %4431 = vmatmul.mubr.f32.gmra.mrb[0].mxu0 %v4356
    %v4432 = vpop.f32.mrb[0].mxu0
    %v4433 = vadd.f32 %v4340, %v4432
    %v4434 = vpop.f32.mrb[0].mxu0
    %4435 = vmatprep.mubr.f32.mxu0 0.0
    %4436 = vmatmul.mubr.f32.gmra.mrb[0].mxu0 %v4359
    %v4437 = vpop.f32.mrb[0].mxu0
    %v4438 = vadd.f32 %v4345, %v4437
    %v4439 = vpop.f32.mrb[0].mxu0
    %4440 = vmatprep.mubr.f32.mxu0 0.0
    %4441 = vmatmul.mubr.f32.gmra.mrb[0].mxu0 %v4362
    %v4442 = vpop.f32.mrb[0].mxu0
    %v4443 = vadd.f32 %v4350, %v4442
    %v4444 = vpop.f32.mrb[0].mxu0
    %4445 = vdwg.mxu0
    %4446 = vrot.lane.b32.xlu0 %v3976, 112
    %v4447 = vpop.permute.xlu0 %4446
    %4448 = vrot.lane.b32.xlu0 %v3978, 112
    %v4449 = vpop.permute.xlu0 %4448
    %4450 = vrot.lane.b32.xlu0 %v3977, 112
    %v4451 = vpop.permute.xlu0 %4450
    %4452 = vrot.lane.b32.xlu0 %v3976, 80
    %v4453 = vpop.permute.xlu0 %4452
    %4454 = vrot.lane.b32.xlu0 %v3978, 80
    %v4455 = vpop.permute.xlu0 %4454
    %4456 = vrot.lane.b32.xlu0 %v3977, 80
    %v4457 = vpop.permute.xlu0 %4456
    %v4458 = vsel %vm468, %v4447, 0
    %v4460 = vsel %vm468, %v4449, 0
    %v4462 = vsel %vm468, %v4451, 0
    %v4464 = vsel %vm468, %v4453, 0
    %v4466 = vsel %vm468, %v4455, 0
    %v4468 = vsel %vm468, %v4457, 0
    %4470 = vmatprep.subr.mxu0 0.0
    %4471 = vmatpush1.xpose.msra.mxu0 %v4464
    %4472 = vmatprep.subr.mxu0 0.0
    %4473 = vmatpush1.xpose.msra.mxu0 %v4466
    %4474 = vmatprep.subr.mxu0 0.0
    %4475 = vmatpush1.xpose.msra.mxu0 %v4468
    %4476 = vmatprep.subr.mxu0 0.0
    %4477 = vmatpush1.xpose.msra.mxu0 0.0
    %4478 = vmatprep.subr.mxu0 0.0
    %4479 = vmatpush1.xpose.msra.mxu0 0.0
    %4480 = vmatprep.subr.mxu0 0.0
    %4481 = vmatpush1.xpose.msra.mxu0 0.0
    %4482 = vmatprep.subr.mxu0 0.0
    %4483 = vmatpush1.xpose.msra.mxu0 0.0
    %4484 = vmatprep.subr.mxu0 0.0
    %4485 = vmatpush1.xpose.msra.mxu0 0.0
    %4486 = vmatprep.subr.mxu0 0.0
    %4487 = vmatpush1.xpose.msra.mxu0 0.0
    %4488 = vmatprep.subr.mxu0 0.0
    %4489 = vmatpush1.xpose.msra.mxu0 0.0
    %4490 = vmatprep.subr.mxu0 0.0
    %4491 = vmatpush1.xpose.msra.mxu0 0.0
    %4492 = vmatprep.subr.mxu0 0.0
    %4493 = vmatpush1.xpose.msra.mxu0 0.0
    %4494 = vmatprep.subr.mxu0 0.0
    %4495 = vmatpush1.xpose.msra.mxu0 0.0
    %4496 = vmatprep.subr.mxu0 0.0
    %4497 = vmatpush1.xpose.msra.mxu0 0.0
    %4498 = vmatprep.subr.mxu0 0.0
    %4499 = vmatpush1.xpose.msra.mxu0 0.0
    %4500 = vmatprep.subr.mxu0 0.0
    %4501 = vmatpush1.xpose.msra.mxu0 0.0
    %4502 = vmatprep.subr.mxu0 0.0
    %4503 = vmatpush1.xpose.msra.mxu0 0.0
    %4504 = vmatprep.subr.mxu0 0.0
    %4505 = vmatpush1.xpose.msra.mxu0 0.0
    %4506 = vmatprep.subr.mxu0 0.0
    %4507 = vmatpush1.xpose.msra.mxu0 0.0
    %4508 = vmatprep.subr.mxu0 0.0
    %4509 = vmatpush1.xpose.msra.mxu0 0.0
    %4510 = vmatprep.subr.mxu0 0.0
    %4511 = vmatpush1.xpose.msra.mxu0 0.0
    %4512 = vmatprep.subr.mxu0 0.0
    %4513 = vmatpush1.xpose.msra.mxu0 0.0
    %4514 = vmatprep.subr.mxu0 0.0
    %4515 = vmatpush1.xpose.msra.mxu0 0.0
    %4516 = vmatprep.subr.mxu0 0.0
    %4517 = vmatpush1.xpose.msra.mxu0 0.0
    %4518 = vmatprep.subr.mxu0 0.0
    %4519 = vmatpush1.xpose.msra.mxu0 0.0
    %4520 = vmatprep.subr.mxu0 0.0
    %4521 = vmatpush1.xpose.msra.mxu0 0.0
    %4522 = vmatprep.subr.mxu0 0.0
    %4523 = vmatpush1.xpose.msra.mxu0 0.0
    %4524 = vmatprep.subr.mxu0 0.0
    %4525 = vmatpush1.xpose.msra.mxu0 0.0
    %4526 = vmatprep.subr.mxu0 0.0
    %4527 = vmatpush1.xpose.msra.mxu0 0.0
    %4528 = vmatprep.subr.mxu0 0.0
    %4529 = vmatpush1.xpose.msra.mxu0 0.0
    %4530 = vmatprep.subr.mxu0 0.0
    %4531 = vmatpush1.xpose.msra.mxu0 0.0
    %4532 = vmatprep.subr.mxu0 0.0
    %4533 = vmatpush1.xpose.msra.mxu0 0.0
    %4534 = vmatprep.mubr.f32.mxu0 0.0
    %4535 = vmatmul.mubr.f32.gmra.mrb[0].mxu0 %v4458
    %v4536 = vpop.f32.mrb[0].mxu0
    %v4537 = vadd.f32 0.0, %v4536
    %v4538 = vpop.f32.mrb[0].mxu0
    %4539 = vmatprep.mubr.f32.mxu0 0.0
    %4540 = vmatmul.mubr.f32.gmra.mrb[0].mxu0 %v4460
    %v4541 = vpop.f32.mrb[0].mxu0
    %v4542 = vadd.f32 0.0, %v4541
    %v4543 = vpop.f32.mrb[0].mxu0
    %4544 = vmatprep.mubr.f32.mxu0 0.0
    %4545 = vmatmul.mubr.f32.gmra.mrb[0].mxu0 %v4462
    %v4546 = vpop.f32.mrb[0].mxu0
    %v4547 = vadd.f32 0.0, %v4546
    %v4548 = vpop.f32.mrb[0].mxu0
    %4549 = vdwg.mxu0
    %v4550 = vsel %vm561, %v4537, -inf
    %4551 = vmax.xlane.f32.xlu0 %v4550
    %v4552 = vpop.xlane.xlu0 %4551
    %v4553 = vsel %vm561, %v4542, -inf
    %4554 = vmax.xlane.f32.xlu0 %v4553
    %v4555 = vpop.xlane.xlu0 %4554
    %v4556 = vsel %vm568, %v4547, -inf
    %4557 = vmax.xlane.f32.xlu0 %v4556
    %v4558 = vpop.xlane.xlu0 %4557
    %v4559 = vsub.f32 %v4537, %v4552
    %v4560 = vsub.f32 %v4542, %v4555
    %v4561 = vsub.f32 %v4547, %v4558
    %v4562 = vmul.f32 %v4559, 1.442695
    %v4563 = vpow.pop %v4562
    %v4564 = vmul.f32 %v4560, 1.442695
    %v4565 = vpow.pop %v4564
    %v4566 = vmul.f32 %v4561, 1.442695
    %v4567 = vpow.pop %v4566
    %v4568 = vsel %vm561, %v4563, 0.0
    %4569 = vadd.xlane.f32.xlu0 %v4568
    %v4570 = vpop.xlane.xlu0 %4569
    %v4571 = vsel %vm561, %v4565, 0.0
    %4572 = vadd.xlane.f32.xlu0 %v4571
    %v4573 = vpop.xlane.xlu0 %4572
    %v4574 = vsel %vm568, %v4567, 0.0
    %4575 = vadd.xlane.f32.xlu0 %v4574
    %v4576 = vpop.xlane.xlu0 %4575
    %v4577 = vrcp.pop %v4570
    %v4578 = vmul.f32 %v4563, %v4577
    %v4579 = vrcp.pop %v4573
    %v4580 = vmul.f32 %v4565, %v4579
    %v4581 = vrcp.pop %v4576
    %v4582 = vmul.f32 %v4567, %v4581
    %4583 = vrot.lane.b32.xlu0 %v4251, 64
    %v4584 = vpop.permute.xlu0 %4583
    %4585 = vrot.lane.b32.xlu0 %v4253, 64
    %v4586 = vpop.permute.xlu0 %4585
    %4587 = vrot.lane.b32.xlu0 %v4252, 64
    %v4588 = vpop.permute.xlu0 %4587
    %v4592 = vsel %vm561, %v4578, 0
    %v4595 = vsel %vm561, %v4580, 0
    %v4598 = vsel %vm561, %v4582, 0
    %v4600 = vsel %vm25, %v4588, 0
    %4602 = vmatprep.subr.mxu0 0.0
    %4603 = vmatpush1.msra.mxu0 %v4584
    %4604 = vmatprep.subr.mxu0 0.0
    %4605 = vmatpush1.msra.mxu0 %v4586
    %4606 = vmatprep.subr.mxu0 0.0
    %4607 = vmatpush1.msra.mxu0 %v4600
    %4608 = vmatprep.subr.mxu0 0.0
    %4609 = vmatpush1.msra.mxu0 0.0
    %4610 = vmatprep.subr.mxu0 0.0
    %4611 = vmatpush1.msra.mxu0 0.0
    %4612 = vmatprep.subr.mxu0 0.0
    %4613 = vmatpush1.msra.mxu0 0.0
    %4614 = vmatprep.subr.mxu0 0.0
    %4615 = vmatpush1.msra.mxu0 0.0
    %4616 = vmatprep.subr.mxu0 0.0
    %4617 = vmatpush1.msra.mxu0 0.0
    %4618 = vmatprep.subr.mxu0 0.0
    %4619 = vmatpush1.msra.mxu0 0.0
    %4620 = vmatprep.subr.mxu0 0.0
    %4621 = vmatpush1.msra.mxu0 0.0
    %4622 = vmatprep.subr.mxu0 0.0
    %4623 = vmatpush1.msra.mxu0 0.0
    %4624 = vmatprep.subr.mxu0 0.0
    %4625 = vmatpush1.msra.mxu0 0.0
    %4626 = vmatprep.subr.mxu0 0.0
    %4627 = vmatpush1.msra.mxu0 0.0
    %4628 = vmatprep.subr.mxu0 0.0
    %4629 = vmatpush1.msra.mxu0 0.0
    %4630 = vmatprep.subr.mxu0 0.0
    %4631 = vmatpush1.msra.mxu0 0.0
    %4632 = vmatprep.subr.mxu0 0.0
    %4633 = vmatpush1.msra.mxu0 0.0
    %4634 = vmatprep.subr.mxu0 0.0
    %4635 = vmatpush1.msra.mxu0 0.0
    %4636 = vmatprep.subr.mxu0 0.0
    %4637 = vmatpush1.msra.mxu0 0.0
    %4638 = vmatprep.subr.mxu0 0.0
    %4639 = vmatpush1.msra.mxu0 0.0
    %4640 = vmatprep.subr.mxu0 0.0
    %4641 = vmatpush1.msra.mxu0 0.0
    %4642 = vmatprep.subr.mxu0 0.0
    %4643 = vmatpush1.msra.mxu0 0.0
    %4644 = vmatprep.subr.mxu0 0.0
    %4645 = vmatpush1.msra.mxu0 0.0
    %4646 = vmatprep.subr.mxu0 0.0
    %4647 = vmatpush1.msra.mxu0 0.0
    %4648 = vmatprep.subr.mxu0 0.0
    %4649 = vmatpush1.msra.mxu0 0.0
    %4650 = vmatprep.subr.mxu0 0.0
    %4651 = vmatpush1.msra.mxu0 0.0
    %4652 = vmatprep.subr.mxu0 0.0
    %4653 = vmatpush1.msra.mxu0 0.0
    %4654 = vmatprep.subr.mxu0 0.0
    %4655 = vmatpush1.msra.mxu0 0.0
    %4656 = vmatprep.subr.mxu0 0.0
    %4657 = vmatpush1.msra.mxu0 0.0
    %4658 = vmatprep.subr.mxu0 0.0
    %4659 = vmatpush1.msra.mxu0 0.0
    %4660 = vmatprep.subr.mxu0 0.0
    %4661 = vmatpush1.msra.mxu0 0.0
    %4662 = vmatprep.subr.mxu0 0.0
    %4663 = vmatpush1.msra.mxu0 0.0
    %4664 = vmatprep.subr.mxu0 0.0
    %4665 = vmatpush1.msra.mxu0 0.0
    %4666 = vmatprep.mubr.f32.mxu0 0.0
    %4667 = vmatmul.mubr.f32.gmra.mrb[0].mxu0 %v4592
    %v4668 = vpop.f32.mrb[0].mxu0
    %v4669 = vadd.f32 0.0, %v4668
    %v4670 = vpop.f32.mrb[0].mxu0
    %4671 = vmatprep.mubr.f32.mxu0 0.0
    %4672 = vmatmul.mubr.f32.gmra.mrb[0].mxu0 %v4595
    %v4673 = vpop.f32.mrb[0].mxu0
    %v4674 = vadd.f32 0.0, %v4673
    %v4675 = vpop.f32.mrb[0].mxu0
    %4676 = vmatprep.mubr.f32.mxu0 0.0
    %4677 = vmatmul.mubr.f32.gmra.mrb[0].mxu0 %v4598
    %v4678 = vpop.f32.mrb[0].mxu0
    %v4679 = vadd.f32 0.0, %v4678
    %v4680 = vpop.f32.mrb[0].mxu0
    %4681 = vdwg.mxu0
    %v4682 = vadd.f32 %v4433, %v4669
    %v4683 = vadd.f32 %v4438, %v4674
    %v4684 = vadd.f32 %v4443, %v4679
    %4685 = vrot.lane.b32.xlu0 %v3976, 104
    %v4686 = vpop.permute.xlu0 %4685
    %4687 = vrot.lane.b32.xlu0 %v3978, 104
    %v4688 = vpop.permute.xlu0 %4687
    %4689 = vrot.lane.b32.xlu0 %v3977, 104
    %v4690 = vpop.permute.xlu0 %4689
    %4691 = vrot.lane.b32.xlu0 %v3976, 72
    %v4692 = vpop.permute.xlu0 %4691
    %4693 = vrot.lane.b32.xlu0 %v3978, 72
    %v4694 = vpop.permute.xlu0 %4693
    %4695 = vrot.lane.b32.xlu0 %v3977, 72
    %v4696 = vpop.permute.xlu0 %4695
    %v4697 = vsel %vm468, %v4686, 0
    %v4699 = vsel %vm468, %v4688, 0
    %v4701 = vsel %vm468, %v4690, 0
    %v4703 = vsel %vm468, %v4692, 0
    %v4705 = vsel %vm468, %v4694, 0
    %v4707 = vsel %vm468, %v4696, 0
    %4709 = vmatprep.subr.mxu0 0.0
    %4710 = vmatpush1.xpose.msra.mxu0 %v4703
    %4711 = vmatprep.subr.mxu0 0.0
    %4712 = vmatpush1.xpose.msra.mxu0 %v4705
    %4713 = vmatprep.subr.mxu0 0.0
    %4714 = vmatpush1.xpose.msra.mxu0 %v4707
    %4715 = vmatprep.subr.mxu0 0.0
    %4716 = vmatpush1.xpose.msra.mxu0 0.0
    %4717 = vmatprep.subr.mxu0 0.0
    %4718 = vmatpush1.xpose.msra.mxu0 0.0
    %4719 = vmatprep.subr.mxu0 0.0
    %4720 = vmatpush1.xpose.msra.mxu0 0.0
    %4721 = vmatprep.subr.mxu0 0.0
    %4722 = vmatpush1.xpose.msra.mxu0 0.0
    %4723 = vmatprep.subr.mxu0 0.0
    %4724 = vmatpush1.xpose.msra.mxu0 0.0
    %4725 = vmatprep.subr.mxu0 0.0
    %4726 = vmatpush1.xpose.msra.mxu0 0.0
    %4727 = vmatprep.subr.mxu0 0.0
    %4728 = vmatpush1.xpose.msra.mxu0 0.0
    %4729 = vmatprep.subr.mxu0 0.0
    %4730 = vmatpush1.xpose.msra.mxu0 0.0
    %4731 = vmatprep.subr.mxu0 0.0
    %4732 = vmatpush1.xpose.msra.mxu0 0.0
    %4733 = vmatprep.subr.mxu0 0.0
    %4734 = vmatpush1.xpose.msra.mxu0 0.0
    %4735 = vmatprep.subr.mxu0 0.0
    %4736 = vmatpush1.xpose.msra.mxu0 0.0
    %4737 = vmatprep.subr.mxu0 0.0
    %4738 = vmatpush1.xpose.msra.mxu0 0.0
    %4739 = vmatprep.subr.mxu0 0.0
    %4740 = vmatpush1.xpose.msra.mxu0 0.0
    %4741 = vmatprep.subr.mxu0 0.0
    %4742 = vmatpush1.xpose.msra.mxu0 0.0
    %4743 = vmatprep.subr.mxu0 0.0
    %4744 = vmatpush1.xpose.msra.mxu0 0.0
    %4745 = vmatprep.subr.mxu0 0.0
    %4746 = vmatpush1.xpose.msra.mxu0 0.0
    %4747 = vmatprep.subr.mxu0 0.0
    %4748 = vmatpush1.xpose.msra.mxu0 0.0
    %4749 = vmatprep.subr.mxu0 0.0
    %4750 = vmatpush1.xpose.msra.mxu0 0.0
    %4751 = vmatprep.subr.mxu0 0.0
    %4752 = vmatpush1.xpose.msra.mxu0 0.0
    %4753 = vmatprep.subr.mxu0 0.0
    %4754 = vmatpush1.xpose.msra.mxu0 0.0
    %4755 = vmatprep.subr.mxu0 0.0
    %4756 = vmatpush1.xpose.msra.mxu0 0.0
    %4757 = vmatprep.subr.mxu0 0.0
    %4758 = vmatpush1.xpose.msra.mxu0 0.0
    %4759 = vmatprep.subr.mxu0 0.0
    %4760 = vmatpush1.xpose.msra.mxu0 0.0
    %4761 = vmatprep.subr.mxu0 0.0
    %4762 = vmatpush1.xpose.msra.mxu0 0.0
    %4763 = vmatprep.subr.mxu0 0.0
    %4764 = vmatpush1.xpose.msra.mxu0 0.0
    %4765 = vmatprep.subr.mxu0 0.0
    %4766 = vmatpush1.xpose.msra.mxu0 0.0
    %4767 = vmatprep.subr.mxu0 0.0
    %4768 = vmatpush1.xpose.msra.mxu0 0.0
    %4769 = vmatprep.subr.mxu0 0.0
    %4770 = vmatpush1.xpose.msra.mxu0 0.0
    %4771 = vmatprep.subr.mxu0 0.0
    %4772 = vmatpush1.xpose.msra.mxu0 0.0
    %4773 = vmatprep.mubr.f32.mxu0 0.0
    %4774 = vmatmul.mubr.f32.gmra.mrb[0].mxu0 %v4697
    %v4775 = vpop.f32.mrb[0].mxu0
    %v4776 = vadd.f32 0.0, %v4775
    %v4777 = vpop.f32.mrb[0].mxu0
    %4778 = vmatprep.mubr.f32.mxu0 0.0
    %4779 = vmatmul.mubr.f32.gmra.mrb[0].mxu0 %v4699
    %v4780 = vpop.f32.mrb[0].mxu0
    %v4781 = vadd.f32 0.0, %v4780
    %v4782 = vpop.f32.mrb[0].mxu0
    %4783 = vmatprep.mubr.f32.mxu0 0.0
    %4784 = vmatmul.mubr.f32.gmra.mrb[0].mxu0 %v4701
    %v4785 = vpop.f32.mrb[0].mxu0
    %v4786 = vadd.f32 0.0, %v4785
    %v4787 = vpop.f32.mrb[0].mxu0
    %4788 = vdwg.mxu0
    %v4789 = vsel %vm561, %v4776, -inf
    %4790 = vmax.xlane.f32.xlu0 %v4789
    %v4791 = vpop.xlane.xlu0 %4790
    %v4792 = vsel %vm561, %v4781, -inf
    %4793 = vmax.xlane.f32.xlu0 %v4792
    %v4794 = vpop.xlane.xlu0 %4793
    %v4795 = vsel %vm568, %v4786, -inf
    %4796 = vmax.xlane.f32.xlu0 %v4795
    %v4797 = vpop.xlane.xlu0 %4796
    %v4798 = vsub.f32 %v4776, %v4791
    %v4799 = vsub.f32 %v4781, %v4794
    %v4800 = vsub.f32 %v4786, %v4797
    %v4801 = vmul.f32 %v4798, 1.442695
    %v4802 = vpow.pop %v4801
    %v4803 = vmul.f32 %v4799, 1.442695
    %v4804 = vpow.pop %v4803
    %v4805 = vmul.f32 %v4800, 1.442695
    %v4806 = vpow.pop %v4805
    %v4807 = vsel %vm561, %v4802, 0.0
    %4808 = vadd.xlane.f32.xlu0 %v4807
    %v4809 = vpop.xlane.xlu0 %4808
    %v4810 = vsel %vm561, %v4804, 0.0
    %4811 = vadd.xlane.f32.xlu0 %v4810
    %v4812 = vpop.xlane.xlu0 %4811
    %v4813 = vsel %vm568, %v4806, 0.0
    %4814 = vadd.xlane.f32.xlu0 %v4813
    %v4815 = vpop.xlane.xlu0 %4814
    %v4816 = vrcp.pop %v4809
    %v4817 = vmul.f32 %v4802, %v4816
    %v4818 = vrcp.pop %v4812
    %v4819 = vmul.f32 %v4804, %v4818
    %v4820 = vrcp.pop %v4815
    %v4821 = vmul.f32 %v4806, %v4820
    %4822 = vrot.lane.b32.xlu0 %v4251, 32
    %v4823 = vpop.permute.xlu0 %4822
    %4824 = vrot.lane.b32.xlu0 %v4253, 32
    %v4825 = vpop.permute.xlu0 %4824
    %4826 = vrot.lane.b32.xlu0 %v4252, 32
    %v4827 = vpop.permute.xlu0 %4826
    %v4831 = vsel %vm561, %v4817, 0
    %v4834 = vsel %vm561, %v4819, 0
    %v4837 = vsel %vm561, %v4821, 0
    %v4839 = vsel %vm25, %v4827, 0
    %4841 = vmatprep.subr.mxu0 0.0
    %4842 = vmatpush1.msra.mxu0 %v4823
    %4843 = vmatprep.subr.mxu0 0.0
    %4844 = vmatpush1.msra.mxu0 %v4825
    %4845 = vmatprep.subr.mxu0 0.0
    %4846 = vmatpush1.msra.mxu0 %v4839
    %4847 = vmatprep.subr.mxu0 0.0
    %4848 = vmatpush1.msra.mxu0 0.0
    %4849 = vmatprep.subr.mxu0 0.0
    %4850 = vmatpush1.msra.mxu0 0.0
    %4851 = vmatprep.subr.mxu0 0.0
    %4852 = vmatpush1.msra.mxu0 0.0
    %4853 = vmatprep.subr.mxu0 0.0
    %4854 = vmatpush1.msra.mxu0 0.0
    %4855 = vmatprep.subr.mxu0 0.0
    %4856 = vmatpush1.msra.mxu0 0.0
    %4857 = vmatprep.subr.mxu0 0.0
    %4858 = vmatpush1.msra.mxu0 0.0
    %4859 = vmatprep.subr.mxu0 0.0
    %4860 = vmatpush1.msra.mxu0 0.0
    %4861 = vmatprep.subr.mxu0 0.0
    %4862 = vmatpush1.msra.mxu0 0.0
    %4863 = vmatprep.subr.mxu0 0.0
    %4864 = vmatpush1.msra.mxu0 0.0
    %4865 = vmatprep.subr.mxu0 0.0
    %4866 = vmatpush1.msra.mxu0 0.0
    %4867 = vmatprep.subr.mxu0 0.0
    %4868 = vmatpush1.msra.mxu0 0.0
    %4869 = vmatprep.subr.mxu0 0.0
    %4870 = vmatpush1.msra.mxu0 0.0
    %4871 = vmatprep.subr.mxu0 0.0
    %4872 = vmatpush1.msra.mxu0 0.0
    %4873 = vmatprep.subr.mxu0 0.0
    %4874 = vmatpush1.msra.mxu0 0.0
    %4875 = vmatprep.subr.mxu0 0.0
    %4876 = vmatpush1.msra.mxu0 0.0
    %4877 = vmatprep.subr.mxu0 0.0
    %4878 = vmatpush1.msra.mxu0 0.0
    %4879 = vmatprep.subr.mxu0 0.0
    %4880 = vmatpush1.msra.mxu0 0.0
    %4881 = vmatprep.subr.mxu0 0.0
    %4882 = vmatpush1.msra.mxu0 0.0
    %4883 = vmatprep.subr.mxu0 0.0
    %4884 = vmatpush1.msra.mxu0 0.0
    %4885 = vmatprep.subr.mxu0 0.0
    %4886 = vmatpush1.msra.mxu0 0.0
    %4887 = vmatprep.subr.mxu0 0.0
    %4888 = vmatpush1.msra.mxu0 0.0
    %4889 = vmatprep.subr.mxu0 0.0
    %4890 = vmatpush1.msra.mxu0 0.0
    %4891 = vmatprep.subr.mxu0 0.0
    %4892 = vmatpush1.msra.mxu0 0.0
    %4893 = vmatprep.subr.mxu0 0.0
    %4894 = vmatpush1.msra.mxu0 0.0
    %4895 = vmatprep.subr.mxu0 0.0
    %4896 = vmatpush1.msra.mxu0 0.0
    %4897 = vmatprep.subr.mxu0 0.0
    %4898 = vmatpush1.msra.mxu0 0.0
    %4899 = vmatprep.subr.mxu0 0.0
    %4900 = vmatpush1.msra.mxu0 0.0
    %4901 = vmatprep.subr.mxu0 0.0
    %4902 = vmatpush1.msra.mxu0 0.0
    %4903 = vmatprep.subr.mxu0 0.0
    %4904 = vmatpush1.msra.mxu0 0.0
    %4905 = vmatprep.mubr.f32.mxu0 0.0
    %4906 = vmatmul.mubr.f32.gmra.mrb[0].mxu0 %v4831
    %v4907 = vpop.f32.mrb[0].mxu0
    %v4908 = vadd.f32 0.0, %v4907
    %v4909 = vpop.f32.mrb[0].mxu0
    %4910 = vmatprep.mubr.f32.mxu0 0.0
    %4911 = vmatmul.mubr.f32.gmra.mrb[0].mxu0 %v4834
    %v4912 = vpop.f32.mrb[0].mxu0
    %v4913 = vadd.f32 0.0, %v4912
    %v4914 = vpop.f32.mrb[0].mxu0
    %4915 = vmatprep.mubr.f32.mxu0 0.0
    %4916 = vmatmul.mubr.f32.gmra.mrb[0].mxu0 %v4837
    %v4917 = vpop.f32.mrb[0].mxu0
    %v4918 = vadd.f32 0.0, %v4917
    %v4919 = vpop.f32.mrb[0].mxu0
    %4920 = vdwg.mxu0
    %v4921 = vadd.f32 %v4682, %v4908
    %v4922 = vadd.f32 %v4683, %v4913
    %v4923 = vadd.f32 %v4684, %v4918
    %v4927 = vrot.slane %v4921, 7
    %v4928 = vrot.slane %v4922, 7
    %v4929 = vsel %vm25, %v4927, %v4928
    %v4930 = vrot.slane %v4923, 7
    %v4931 = vsel %vm25, %v4928, %v4930
    %v4935 = vsel %vm25, %v3971, %v4927
    %v4936 = vadd.f32 %v2727, %v3969
    %v4937 = vadd.f32 %v2728, %v3970
    %v4938 = vadd.f32 %v2729, %v4935
    %v4939 = vadd.f32 %v2730, %v4929
    %v4940 = vadd.f32 %v2731, %v4931
    %v4941 = vld [vmem:[%s2 + $0xf] sm:$0x1]
    %v4942 = vlaneseq
    %v4943 = vshrl.u32 %v4942, 7
    %v4944 = vsub.s32 0, %v4943
    %v4945 = vrot.slane %v4941, %v4944
    %v4946 = vadd.f32 %v4936, %v4945
    %v4947 = vadd.f32 %v4937, %v4945
    %v4948 = vadd.f32 %v4938, %v4945
    %v4949 = vadd.f32 %v4939, %v4945
    %v4950 = vadd.f32 %v4940, %v4945
    %v4951 = vld [vmem:[%s2 + $0x10] sm:$0x1]
    %v4952 = vld [vmem:[%s2 + $0x11] sm:$0x1]
    %v4953 = vsel %vm160, %v4946, 0.0
    %4954 = vadd.xlane.f32.xlu0 %v4953
    %v4955 = vpop.xlane.xlu0 %4954
    %v4956 = vsel %vm160, %v4947, 0.0
    %4957 = vadd.xlane.f32.xlu0 %v4956
    %v4958 = vpop.xlane.xlu0 %4957
    %v4959 = vsel %vm160, %v4948, 0.0
    %4960 = vadd.xlane.f32.xlu0 %v4959
    %v4961 = vpop.xlane.xlu0 %4960
    %v4962 = vsel %vm160, %v4949, 0.0
    %4963 = vadd.xlane.f32.xlu0 %v4962
    %v4964 = vpop.xlane.xlu0 %4963
    %v4965 = vsel %vm173, %v4950, 0.0
    %4966 = vadd.xlane.f32.xlu0 %v4965
    %v4967 = vpop.xlane.xlu0 %4966
    %v4968 = vmul.f32 %v4955, %v177
    %v4969 = vmul.f32 %v4958, %v177
    %v4970 = vmul.f32 %v4961, %v177
    %v4971 = vmul.f32 %v4964, %v177
    %v4972 = vmul.f32 %v4967, %v177
    %v4973 = vsub.f32 %v4946, %v4968
    %v4974 = vsub.f32 %v4947, %v4969
    %v4975 = vsub.f32 %v4948, %v4970
    %v4976 = vsub.f32 %v4949, %v4971
    %v4977 = vsub.f32 %v4950, %v4972
    %v4978 = vmul.f32 %v4973, %v4973
    %v4979 = vmul.f32 %v4974, %v4974
    %v4980 = vmul.f32 %v4975, %v4975
    %v4981 = vmul.f32 %v4976, %v4976
    %v4982 = vmul.f32 %v4977, %v4977
    %v4983 = vsel %vm160, %v4978, 0.0
    %4984 = vadd.xlane.f32.xlu0 %v4983
    %v4985 = vpop.xlane.xlu0 %4984
    %v4986 = vsel %vm160, %v4979, 0.0
    %4987 = vadd.xlane.f32.xlu0 %v4986
    %v4988 = vpop.xlane.xlu0 %4987
    %v4989 = vsel %vm160, %v4980, 0.0
    %4990 = vadd.xlane.f32.xlu0 %v4989
    %v4991 = vpop.xlane.xlu0 %4990
    %v4992 = vsel %vm160, %v4981, 0.0
    %4993 = vadd.xlane.f32.xlu0 %v4992
    %v4994 = vpop.xlane.xlu0 %4993
    %v4995 = vsel %vm173, %v4982, 0.0
    %4996 = vadd.xlane.f32.xlu0 %v4995
    %v4997 = vpop.xlane.xlu0 %4996
    %v4998 = vmul.f32 %v4985, %v177
    %v4999 = vmul.f32 %v4988, %v177
    %v5000 = vmul.f32 %v4991, %v177
    %v5001 = vmul.f32 %v4994, %v177
    %v5002 = vmul.f32 %v4997, %v177
    %v5003 = vadd.f32 %v4998, 1e-06
    %v5004 = vadd.f32 %v4999, 1e-06
    %v5005 = vadd.f32 %v5000, 1e-06
    %v5006 = vadd.f32 %v5001, 1e-06
    %v5007 = vadd.f32 %v5002, 1e-06
    %v5008 = vrsqrt.pop %v5003
    %v5009 = vrsqrt.pop %v5004
    %v5010 = vrsqrt.pop %v5005
    %v5011 = vrsqrt.pop %v5006
    %v5012 = vrsqrt.pop %v5007
    %v5013 = vmul.f32 %v4973, %v5008
    %v5014 = vmul.f32 %v4974, %v5009
    %v5015 = vmul.f32 %v4975, %v5010
    %v5016 = vmul.f32 %v4976, %v5011
    %v5017 = vmul.f32 %v4977, %v5012
    %v5018 = vlaneseq
    %v5019 = vshrl.u32 %v5018, 7
    %v5020 = vsub.s32 0, %v5019
    %v5021 = vrot.slane %v4951, %v5020
    %v5022 = vmul.f32 %v5013, %v5021
    %v5023 = vmul.f32 %v5014, %v5021
    %v5024 = vmul.f32 %v5015, %v5021
    %v5025 = vmul.f32 %v5016, %v5021
    %v5026 = vmul.f32 %v5017, %v5021
    %v5027 = vlaneseq
    %v5028 = vshrl.u32 %v5027, 7
    %v5029 = vsub.s32 0, %v5028
    %v5030 = vrot.slane %v4952, %v5029
    %v5031 = vadd.f32 %v5022, %v5030
    %v5032 = vadd.f32 %v5023, %v5030
    %v5033 = vadd.f32 %v5024, %v5030
    %v5034 = vadd.f32 %v5025, %v5030
    %v5035 = vadd.f32 %v5026, %v5030
    %v5036 = vld [vmem:[%s1 + $0x128] sm:$0xff]
    %v5037 = vld [vmem:[%s1 + $0x130] sm:$0xff]
    %v5038 = vld [vmem:[%s1 + $0x138] sm:$0xff]
    %v5039 = vld [vmem:[%s1 + $0x140] sm:$0xff]
    %v5040 = vld [vmem:[%s2 + $0x12] sm:$0x1]
    %v5041 = vlaneseq
    %v5042 = vshrl.u32 %v5041, 7
    %v5043 = vsub.s32 0, %v5042
    %v5044 = vrot.slane %v5040, %v5043
    %v5046 = vsel %vm160, %v5031, 0
    %v5049 = vsel %vm160, %v5032, 0
    %v5052 = vsel %vm160, %v5033, 0
    %v5055 = vsel %vm160, %v5034, 0
    %v5058 = vsel %vm160, %v5035, 0
    %5060 = vmatprep.subr.mxu0 0.0
    %5061 = vmatpush1.msra.mxu0 %v5036
    %5062 = vmatprep.subr.mxu0 0.0
    %5063 = vmatpush1.msra.mxu0 %v5037
    %5064 = vmatprep.subr.mxu0 0.0
    %5065 = vmatpush1.msra.mxu0 %v5038
    %5066 = vmatprep.subr.mxu0 0.0
    %5067 = vmatpush1.msra.mxu0 %v5039
    %5068 = vmatprep.subr.mxu0 0.0
    %5069 = vmatpush1.msra.mxu0 0.0
    %5070 = vmatprep.subr.mxu0 0.0
    %5071 = vmatpush1.msra.mxu0 0.0
    %5072 = vmatprep.subr.mxu0 0.0
    %5073 = vmatpush1.msra.mxu0 0.0
    %5074 = vmatprep.subr.mxu0 0.0
    %5075 = vmatpush1.msra.mxu0 0.0
    %5076 = vmatprep.subr.mxu0 0.0
    %5077 = vmatpush1.msra.mxu0 0.0
    %5078 = vmatprep.subr.mxu0 0.0
    %5079 = vmatpush1.msra.mxu0 0.0
    %5080 = vmatprep.subr.mxu0 0.0
    %5081 = vmatpush1.msra.mxu0 0.0
    %5082 = vmatprep.subr.mxu0 0.0
    %5083 = vmatpush1.msra.mxu0 0.0
    %5084 = vmatprep.subr.mxu0 0.0
    %5085 = vmatpush1.msra.mxu0 0.0
    %5086 = vmatprep.subr.mxu0 0.0
    %5087 = vmatpush1.msra.mxu0 0.0
    %5088 = vmatprep.subr.mxu0 0.0
    %5089 = vmatpush1.msra.mxu0 0.0
    %5090 = vmatprep.subr.mxu0 0.0
    %5091 = vmatpush1.msra.mxu0 0.0
    %5092 = vmatprep.subr.mxu0 0.0
    %5093 = vmatpush1.msra.mxu0 0.0
    %5094 = vmatprep.subr.mxu0 0.0
    %5095 = vmatpush1.msra.mxu0 0.0
    %5096 = vmatprep.subr.mxu0 0.0
    %5097 = vmatpush1.msra.mxu0 0.0
    %5098 = vmatprep.subr.mxu0 0.0
    %5099 = vmatpush1.msra.mxu0 0.0
    %5100 = vmatprep.subr.mxu0 0.0
    %5101 = vmatpush1.msra.mxu0 0.0
    %5102 = vmatprep.subr.mxu0 0.0
    %5103 = vmatpush1.msra.mxu0 0.0
    %5104 = vmatprep.subr.mxu0 0.0
    %5105 = vmatpush1.msra.mxu0 0.0
    %5106 = vmatprep.subr.mxu0 0.0
    %5107 = vmatpush1.msra.mxu0 0.0
    %5108 = vmatprep.subr.mxu0 0.0
    %5109 = vmatpush1.msra.mxu0 0.0
    %5110 = vmatprep.subr.mxu0 0.0
    %5111 = vmatpush1.msra.mxu0 0.0
    %5112 = vmatprep.subr.mxu0 0.0
    %5113 = vmatpush1.msra.mxu0 0.0
    %5114 = vmatprep.subr.mxu0 0.0
    %5115 = vmatpush1.msra.mxu0 0.0
    %5116 = vmatprep.subr.mxu0 0.0
    %5117 = vmatpush1.msra.mxu0 0.0
    %5118 = vmatprep.subr.mxu0 0.0
    %5119 = vmatpush1.msra.mxu0 0.0
    %5120 = vmatprep.subr.mxu0 0.0
    %5121 = vmatpush1.msra.mxu0 0.0
    %5122 = vmatprep.subr.mxu0 0.0
    %5123 = vmatpush1.msra.mxu0 0.0
    %5124 = vmatprep.mubr.f32.mxu0 0.0
    %5125 = vmatmul.mubr.f32.gmra.mrb[0].mxu0 %v5046
    %v5126 = vpop.f32.mrb[0].mxu0
    %v5127 = vadd.f32 %v5044, %v5126
    %v5128 = vpop.f32.mrb[0].mxu0
    %5129 = vmatprep.mubr.f32.mxu0 0.0
    %5130 = vmatmul.mubr.f32.gmra.mrb[0].mxu0 %v5049
    %v5131 = vpop.f32.mrb[0].mxu0
    %v5132 = vadd.f32 %v5044, %v5131
    %v5133 = vpop.f32.mrb[0].mxu0
    %5134 = vmatprep.mubr.f32.mxu0 0.0
    %5135 = vmatmul.mubr.f32.gmra.mrb[0].mxu0 %v5052
    %v5136 = vpop.f32.mrb[0].mxu0
    %v5137 = vadd.f32 %v5044, %v5136
    %v5138 = vpop.f32.mrb[0].mxu0
    %5139 = vmatprep.mubr.f32.mxu0 0.0
    %5140 = vmatmul.mubr.f32.gmra.mrb[0].mxu0 %v5055
    %v5141 = vpop.f32.mrb[0].mxu0
    %v5142 = vadd.f32 %v5044, %v5141
    %v5143 = vpop.f32.mrb[0].mxu0
    %5144 = vmatprep.mubr.f32.mxu0 0.0
    %5145 = vmatmul.mubr.f32.gmra.mrb[0].mxu0 %v5058
    %v5146 = vpop.f32.mrb[0].mxu0
    %v5147 = vadd.f32 %v5044, %v5146
    %v5148 = vpop.f32.mrb[0].mxu0
    %5149 = vdwg.mxu0
    %v5150 = vmul.f32 %v5127, 0.5
    %v5151 = vmul.f32 %v5132, 0.5
    %v5152 = vmul.f32 %v5137, 0.5
    %v5153 = vmul.f32 %v5142, 0.5
    %v5154 = vmul.f32 %v5147, 0.5
    %v5155 = vmul.f32 %v5127, 0.70710677
    %v5156 = vmul.f32 %v5132, 0.70710677
    %v5157 = vmul.f32 %v5137, 0.70710677
    %v5158 = vmul.f32 %v5142, 0.70710677
    %v5159 = vmul.f32 %v5147, 0.70710677
    %v5160 = verf.f32.pop %v5155
    %v5161 = verf.f32.pop %v5156
    %v5162 = verf.f32.pop %v5157
    %v5163 = verf.f32.pop %v5158
    %v5164 = verf.f32.pop %v5159
    %v5165 = vadd.f32 %v5160, 1.0
    %v5166 = vadd.f32 %v5161, 1.0
    %v5167 = vadd.f32 %v5162, 1.0
    %v5168 = vadd.f32 %v5163, 1.0
    %v5169 = vadd.f32 %v5164, 1.0
    %v5170 = vmul.f32 %v5150, %v5165
    %v5171 = vmul.f32 %v5151, %v5166
    %v5172 = vmul.f32 %v5152, %v5167
    %v5173 = vmul.f32 %v5153, %v5168
    %v5174 = vmul.f32 %v5154, %v5169
    %v5175 = vld [vmem:[%s1 + $0x148] sm:$0xff]
    %v5176 = vld [vmem:[%s1 + $0x150] sm:$0xff]
    %v5177 = vld [vmem:[%s1 + $0x158] sm:$0xff]
    %v5178 = vld [vmem:[%s1 + $0x160] sm:$0xff]
    %v5179 = vld [vmem:[%s1 + $0x168] sm:$0xff]
    %v5180 = vld [vmem:[%s1 + $0x170] sm:$0xff]
    %v5181 = vld [vmem:[%s1 + $0x178] sm:$0xff]
    %v5182 = vld [vmem:[%s1 + $0x180] sm:$0xff]
    %v5183 = vld [vmem:[%s2 + $0x13] sm:$0x1]
    %v5184 = vlaneseq
    %v5185 = vshrl.u32 %v5184, 7
    %v5186 = vsub.s32 0, %v5185
    %v5187 = vrot.slane %v5183, %v5186
    %v5189 = vsel %vm2621, %v5170, 0
    %v5192 = vsel %vm2621, %v5171, 0
    %v5195 = vsel %vm2621, %v5172, 0
    %v5198 = vsel %vm2621, %v5173, 0
    %v5201 = vsel %vm2621, %v5174, 0
    %5203 = vmatprep.subr.mxu0 0.0
    %5204 = vmatpush1.msra.mxu0 %v5175
    %5205 = vmatprep.subr.mxu0 0.0
    %5206 = vmatpush1.msra.mxu0 %v5176
    %5207 = vmatprep.subr.mxu0 0.0
    %5208 = vmatpush1.msra.mxu0 %v5177
    %5209 = vmatprep.subr.mxu0 0.0
    %5210 = vmatpush1.msra.mxu0 %v5178
    %5211 = vmatprep.subr.mxu0 0.0
    %5212 = vmatpush1.msra.mxu0 %v5179
    %5213 = vmatprep.subr.mxu0 0.0
    %5214 = vmatpush1.msra.mxu0 %v5180
    %5215 = vmatprep.subr.mxu0 0.0
    %5216 = vmatpush1.msra.mxu0 %v5181
    %5217 = vmatprep.subr.mxu0 0.0
    %5218 = vmatpush1.msra.mxu0 %v5182
    %5219 = vmatprep.subr.mxu0 0.0
    %5220 = vmatpush1.msra.mxu0 0.0
    %5221 = vmatprep.subr.mxu0 0.0
    %5222 = vmatpush1.msra.mxu0 0.0
    %5223 = vmatprep.subr.mxu0 0.0
    %5224 = vmatpush1.msra.mxu0 0.0
    %5225 = vmatprep.subr.mxu0 0.0
    %5226 = vmatpush1.msra.mxu0 0.0
    %5227 = vmatprep.subr.mxu0 0.0
    %5228 = vmatpush1.msra.mxu0 0.0
    %5229 = vmatprep.subr.mxu0 0.0
    %5230 = vmatpush1.msra.mxu0 0.0
    %5231 = vmatprep.subr.mxu0 0.0
    %5232 = vmatpush1.msra.mxu0 0.0
    %5233 = vmatprep.subr.mxu0 0.0
    %5234 = vmatpush1.msra.mxu0 0.0
    %5235 = vmatprep.subr.mxu0 0.0
    %5236 = vmatpush1.msra.mxu0 0.0
    %5237 = vmatprep.subr.mxu0 0.0
    %5238 = vmatpush1.msra.mxu0 0.0
    %5239 = vmatprep.subr.mxu0 0.0
    %5240 = vmatpush1.msra.mxu0 0.0
    %5241 = vmatprep.subr.mxu0 0.0
    %5242 = vmatpush1.msra.mxu0 0.0
    %5243 = vmatprep.subr.mxu0 0.0
    %5244 = vmatpush1.msra.mxu0 0.0
    %5245 = vmatprep.subr.mxu0 0.0
    %5246 = vmatpush1.msra.mxu0 0.0
    %5247 = vmatprep.subr.mxu0 0.0
    %5248 = vmatpush1.msra.mxu0 0.0
    %5249 = vmatprep.subr.mxu0 0.0
    %5250 = vmatpush1.msra.mxu0 0.0
    %5251 = vmatprep.subr.mxu0 0.0
    %5252 = vmatpush1.msra.mxu0 0.0
    %5253 = vmatprep.subr.mxu0 0.0
    %5254 = vmatpush1.msra.mxu0 0.0
    %5255 = vmatprep.subr.mxu0 0.0
    %5256 = vmatpush1.msra.mxu0 0.0
    %5257 = vmatprep.subr.mxu0 0.0
    %5258 = vmatpush1.msra.mxu0 0.0
    %5259 = vmatprep.subr.mxu0 0.0
    %5260 = vmatpush1.msra.mxu0 0.0
    %5261 = vmatprep.subr.mxu0 0.0
    %5262 = vmatpush1.msra.mxu0 0.0
    %5263 = vmatprep.subr.mxu0 0.0
    %5264 = vmatpush1.msra.mxu0 0.0
    %5265 = vmatprep.subr.mxu0 0.0
    %5266 = vmatpush1.msra.mxu0 0.0
    %5267 = vmatprep.mubr.f32.mxu0 0.0
    %5268 = vmatmul.mubr.f32.gmra.mrb[0].mxu0 %v5189
    %v5269 = vpop.f32.mrb[0].mxu0
    %v5270 = vadd.f32 %v5187, %v5269
    %v5271 = vpop.f32.mrb[0].mxu0
    %5272 = vmatprep.mubr.f32.mxu0 0.0
    %5273 = vmatmul.mubr.f32.gmra.mrb[0].mxu0 %v5192
    %v5274 = vpop.f32.mrb[0].mxu0
    %v5275 = vpop.f32.mrb[0].mxu0
    %5276 = vmatprep.mubr.f32.mxu0 0.0
    %5277 = vmatmul.mubr.f32.gmra.mrb[0].mxu0 %v5195
    %v5278 = vpop.f32.mrb[0].mxu0
    %v5279 = vadd.f32 %v5187, %v5278
    %v5280 = vpop.f32.mrb[0].mxu0
    %5281 = vmatprep.mubr.f32.mxu0 0.0
    %5282 = vmatmul.mubr.f32.gmra.mrb[0].mxu0 %v5198
    %v5283 = vpop.f32.mrb[0].mxu0
    %v5284 = vpop.f32.mrb[0].mxu0
    %5285 = vmatprep.mubr.f32.mxu0 0.0
    %5286 = vmatmul.mubr.f32.gmra.mrb[0].mxu0 %v5201
    %v5287 = vpop.f32.mrb[0].mxu0
    %v5288 = vpop.f32.mrb[0].mxu0
    %5289 = vdwg.mxu0
    %v5290 = vadd.f32 %v4946, %v5270
    %v5291 = vadd.f32 %v4948, %v5279
    %v5292 = vld [vmem:[%s2] sm:$0x1]
    %v5293 = vld [vmem:[%s2 + $0x1] sm:$0x1]
    %v5294 = vsel %vm160, %v5290, 0.0
    %5295 = vadd.xlane.f32.xlu0 %v5294
    %v5296 = vpop.xlane.xlu0 %5295
    %v5297 = vsel %vm160, %v5291, 0.0
    %5298 = vadd.xlane.f32.xlu0 %v5297
    %v5299 = vpop.xlane.xlu0 %5298
    %v5300 = vmul.f32 %v5296, %v177
    %v5301 = vmul.f32 %v5299, %v177
    %v5302 = vsub.f32 %v5290, %v5300
    %v5303 = vsub.f32 %v5291, %v5301
    %v5304 = vmul.f32 %v5302, %v5302
    %v5305 = vmul.f32 %v5303, %v5303
    %v5306 = vsel %vm160, %v5304, 0.0
    %5307 = vadd.xlane.f32.xlu0 %v5306
    %v5308 = vpop.xlane.xlu0 %5307
    %v5309 = vsel %vm160, %v5305, 0.0
    %5310 = vadd.xlane.f32.xlu0 %v5309
    %v5311 = vpop.xlane.xlu0 %5310
    %v5312 = vmul.f32 %v5308, %v177
    %v5313 = vmul.f32 %v5311, %v177
    %v5314 = vadd.f32 %v5312, 1e-06
    %v5315 = vadd.f32 %v5313, 1e-06
    %v5316 = vrsqrt.pop %v5314
    %v5317 = vrsqrt.pop %v5315
    %v5318 = vmul.f32 %v5302, %v5316
    %v5319 = vmul.f32 %v5303, %v5317
    %v5320 = vlaneseq
    %v5321 = vshrl.u32 %v5320, 7
    %v5322 = vsub.s32 0, %v5321
    %v5323 = vrot.slane %v5292, %v5322
    %v5324 = vmul.f32 %v5318, %v5323
    %v5325 = vmul.f32 %v5319, %v5323
    %v5326 = vlaneseq
    %v5327 = vshrl.u32 %v5326, 7
    %v5328 = vsub.s32 0, %v5327
    %v5329 = vrot.slane %v5293, %v5328
    %v5330 = vadd.f32 %v5324, %v5329
    %v5331 = vadd.f32 %v5325, %v5329
    %v5332 = vsel %vm25, %v5330, %v5331
    %v5333 = vld [vmem:[%s1 + $0x188] sm:$0xff]
    %v5334 = vld [vmem:[%s1 + $0x190] sm:$0xff]
    %v5335 = vld [vmem:[%s1 + $0x198] sm:$0xff]
    %v5336 = vld [vmem:[%s1 + $0x1a0] sm:$0xff]
    %v5338 = vsel %vm160, %v5332, 0
    %5340 = vmatprep.subr.mxu0 0.0
    %5341 = vmatpush1.msra.mxu0 %v5333
    %5342 = vmatprep.subr.mxu0 0.0
    %5343 = vmatpush1.msra.mxu0 %v5334
    %5344 = vmatprep.subr.mxu0 0.0
    %5345 = vmatpush1.msra.mxu0 %v5335
    %5346 = vmatprep.subr.mxu0 0.0
    %5347 = vmatpush1.msra.mxu0 %v5336
    %5348 = vmatprep.subr.mxu0 0.0
    %5349 = vmatpush1.msra.mxu0 0.0
    %5350 = vmatprep.subr.mxu0 0.0
    %5351 = vmatpush1.msra.mxu0 0.0
    %5352 = vmatprep.subr.mxu0 0.0
    %5353 = vmatpush1.msra.mxu0 0.0
    %5354 = vmatprep.subr.mxu0 0.0
    %5355 = vmatpush1.msra.mxu0 0.0
    %5356 = vmatprep.subr.mxu0 0.0
    %5357 = vmatpush1.msra.mxu0 0.0
    %5358 = vmatprep.subr.mxu0 0.0
    %5359 = vmatpush1.msra.mxu0 0.0
    %5360 = vmatprep.subr.mxu0 0.0
    %5361 = vmatpush1.msra.mxu0 0.0
    %5362 = vmatprep.subr.mxu0 0.0
    %5363 = vmatpush1.msra.mxu0 0.0
    %5364 = vmatprep.subr.mxu0 0.0
    %5365 = vmatpush1.msra.mxu0 0.0
    %5366 = vmatprep.subr.mxu0 0.0
    %5367 = vmatpush1.msra.mxu0 0.0
    %5368 = vmatprep.subr.mxu0 0.0
    %5369 = vmatpush1.msra.mxu0 0.0
    %5370 = vmatprep.subr.mxu0 0.0
    %5371 = vmatpush1.msra.mxu0 0.0
    %5372 = vmatprep.subr.mxu0 0.0
    %5373 = vmatpush1.msra.mxu0 0.0
    %5374 = vmatprep.subr.mxu0 0.0
    %5375 = vmatpush1.msra.mxu0 0.0
    %5376 = vmatprep.subr.mxu0 0.0
    %5377 = vmatpush1.msra.mxu0 0.0
    %5378 = vmatprep.subr.mxu0 0.0
    %5379 = vmatpush1.msra.mxu0 0.0
    %5380 = vmatprep.subr.mxu0 0.0
    %5381 = vmatpush1.msra.mxu0 0.0
    %5382 = vmatprep.subr.mxu0 0.0
    %5383 = vmatpush1.msra.mxu0 0.0
    %5384 = vmatprep.subr.mxu0 0.0
    %5385 = vmatpush1.msra.mxu0 0.0
    %5386 = vmatprep.subr.mxu0 0.0
    %5387 = vmatpush1.msra.mxu0 0.0
    %5388 = vmatprep.subr.mxu0 0.0
    %5389 = vmatpush1.msra.mxu0 0.0
    %5390 = vmatprep.subr.mxu0 0.0
    %5391 = vmatpush1.msra.mxu0 0.0
    %5392 = vmatprep.subr.mxu0 0.0
    %5393 = vmatpush1.msra.mxu0 0.0
    %5394 = vmatprep.subr.mxu0 0.0
    %5395 = vmatpush1.msra.mxu0 0.0
    %5396 = vmatprep.subr.mxu0 0.0
    %5397 = vmatpush1.msra.mxu0 0.0
    %5398 = vmatprep.subr.mxu0 0.0
    %5399 = vmatpush1.msra.mxu0 0.0
    %5400 = vmatprep.subr.mxu0 0.0
    %5401 = vmatpush1.msra.mxu0 0.0
    %5402 = vmatprep.subr.mxu0 0.0
    %5403 = vmatpush1.msra.mxu0 0.0
    %5404 = vmatprep.mubr.f32.mxu0 0.0
    %5405 = vmatmul.mubr.f32.gmra.mrb[0].mxu0 %v5338
    %v5406 = vpop.f32.mrb[0].mxu0
    %v5407 = vadd.f32 0.0, %v5406
    %v5408 = vpop.f32.mrb[0].mxu0
    %5409 = vdwg.mxu0
    %v5410 = vmax.f32 %v5407, 0.0
    %v5411 = vld [vmem:[%s2 + $0x14] sm:$0x1]
    %v5412 = vlaneseq
    %v5413 = vshrl.u32 %v5412, 7
    %v5414 = vsub.s32 0, %v5413
    %v5415 = vrot.slane %v5411, %v5414
    %v5416 = vmul.f32 %v5410, %v5415
    %v5417 = vld [vmem:[%s2 + $0x15] sm:$0x1]
    %v5418 = vlaneseq
    %v5419 = vshrl.u32 %v5418, 7
    %v5420 = vsub.s32 0, %v5419
    %v5421 = vrot.slane %v5417, %v5420
    %v5422 = vadd.f32 %v5416, %v5421
    %v5423 = vld [vmem:[%s1 + $0x1a8] sm:$0xff]
    %v5424 = vld [vmem:[%s1 + $0x1b0] sm:$0xff]
    %vm5425 = vcmask 130048
    %v5427 = vsel %vm5425, %v5422, 0
    %5429 = vmatprep.subr.mxu0 0.0
    %5430 = vmatpush1.msra.mxu0 %v5423
    %5431 = vmatprep.subr.mxu0 0.0
    %5432 = vmatpush1.msra.mxu0 %v5424
    %5433 = vmatprep.subr.mxu0 0.0
    %5434 = vmatpush1.msra.mxu0 0.0
    %5435 = vmatprep.subr.mxu0 0.0
    %5436 = vmatpush1.msra.mxu0 0.0
    %5437 = vmatprep.subr.mxu0 0.0
    %5438 = vmatpush1.msra.mxu0 0.0
    %5439 = vmatprep.subr.mxu0 0.0
    %5440 = vmatpush1.msra.mxu0 0.0
    %5441 = vmatprep.subr.mxu0 0.0
    %5442 = vmatpush1.msra.mxu0 0.0
    %5443 = vmatprep.subr.mxu0 0.0
    %5444 = vmatpush1.msra.mxu0 0.0
    %5445 = vmatprep.subr.mxu0 0.0
    %5446 = vmatpush1.msra.mxu0 0.0
    %5447 = vmatprep.subr.mxu0 0.0
    %5448 = vmatpush1.msra.mxu0 0.0
    %5449 = vmatprep.subr.mxu0 0.0
    %5450 = vmatpush1.msra.mxu0 0.0
    %5451 = vmatprep.subr.mxu0 0.0
    %5452 = vmatpush1.msra.mxu0 0.0
    %5453 = vmatprep.subr.mxu0 0.0
    %5454 = vmatpush1.msra.mxu0 0.0
    %5455 = vmatprep.subr.mxu0 0.0
    %5456 = vmatpush1.msra.mxu0 0.0
    %5457 = vmatprep.subr.mxu0 0.0
    %5458 = vmatpush1.msra.mxu0 0.0
    %5459 = vmatprep.subr.mxu0 0.0
    %5460 = vmatpush1.msra.mxu0 0.0
    %5461 = vmatprep.subr.mxu0 0.0
    %5462 = vmatpush1.msra.mxu0 0.0
    %5463 = vmatprep.subr.mxu0 0.0
    %5464 = vmatpush1.msra.mxu0 0.0
    %5465 = vmatprep.subr.mxu0 0.0
    %5466 = vmatpush1.msra.mxu0 0.0
    %5467 = vmatprep.subr.mxu0 0.0
    %5468 = vmatpush1.msra.mxu0 0.0
    %5469 = vmatprep.subr.mxu0 0.0
    %5470 = vmatpush1.msra.mxu0 0.0
    %5471 = vmatprep.subr.mxu0 0.0
    %5472 = vmatpush1.msra.mxu0 0.0
    %5473 = vmatprep.subr.mxu0 0.0
    %5474 = vmatpush1.msra.mxu0 0.0
    %5475 = vmatprep.subr.mxu0 0.0
    %5476 = vmatpush1.msra.mxu0 0.0
    %5477 = vmatprep.subr.mxu0 0.0
    %5478 = vmatpush1.msra.mxu0 0.0
    %5479 = vmatprep.subr.mxu0 0.0
    %5480 = vmatpush1.msra.mxu0 0.0
    %5481 = vmatprep.subr.mxu0 0.0
    %5482 = vmatpush1.msra.mxu0 0.0
    %5483 = vmatprep.subr.mxu0 0.0
    %5484 = vmatpush1.msra.mxu0 0.0
    %5485 = vmatprep.subr.mxu0 0.0
    %5486 = vmatpush1.msra.mxu0 0.0
    %5487 = vmatprep.subr.mxu0 0.0
    %5488 = vmatpush1.msra.mxu0 0.0
    %5489 = vmatprep.subr.mxu0 0.0
    %5490 = vmatpush1.msra.mxu0 0.0
    %5491 = vmatprep.subr.mxu0 0.0
    %5492 = vmatpush1.msra.mxu0 0.0
    %5493 = vmatprep.mubr.f32.mxu0 0.0
    %5494 = vmatmul.mubr.f32.gmra.mrb[0].mxu0 %v5427
    %v5495 = vpop.f32.mrb[0].mxu0
    %v5496 = vadd.f32 0.0, %v5495
    %v5497 = vpop.f32.mrb[0].mxu0
    %5498 = vdwg.mxu0
    %v5499 = vld [vmem:[%s2 + $0x16] sm:$0x1]
    %v5500 = vlaneseq
    %v5501 = vshrl.u32 %v5500, 7
    %v5502 = vsub.s32 0, %v5501
    %v5503 = vrot.slane %v5499, %v5502
    %v5504 = vmul.f32 %v5496, %v5503
    %v5505 = vld [vmem:[%s2 + $0x17] sm:$0x1]
    %v5506 = vlaneseq
    %v5507 = vshrl.u32 %v5506, 7
    %v5508 = vsub.s32 0, %v5507
    %v5509 = vrot.slane %v5505, %v5508
    %v5510 = vadd.f32 %v5504, %v5509
    %v5513 = vunpack.c.l.s4 1966171168
    %v5514 = vunpack.c.0.s8 %v5513
    %v5515 = vlaneseq
    %v5516 = vshrl.u32 %v5515, 7
    %v5517 = vsub.s32 %v5514, %v5516
    %v5518 = vrot.slane %v5510, %v5517
    %v5519 = vcombine.high %v5518, %v5518
    %v5521 = vunpack.c.l.s4 1966171168
    %v5522 = vunpack.c.0.s8 %v5521
    %v5523 = vlaneseq
    %v5524 = vshrl.u32 %v5523, 7
    %v5525 = vsub.s32 %v5522, %v5524
    %v5526 = vrot.slane %v5518, %v5525
    %v5528 = vunpack.c.l.s4 1966171168
    %v5529 = vunpack.c.0.s8 %v5528
    %v5530 = vlaneseq
    %v5531 = vshrl.u32 %v5530, 7
    %v5532 = vsub.s32 %v5529, %v5531
    %v5533 = vrot.slane %v5519, %v5532
    %5536 = vst [vmem:[#allocation2] sm:$0x1] %v5526
    %5537 = vst [vmem:[#allocation2 + $0x1] sm:$0x1] %v5533
    // Predicated region
    $region14: #{vit_forward.1} parent=1 // pred_check
      _
    $region15: #{vit_forward.1} parent=1 // pred_check_branch
      %5539 = sbr.rel (0) target = $region17
    $region16: #{vit_forward.1} parent=1 // pred_region
      %s5541 = ssub.s32 32, 32
      %5542 = vsyncadd [#allocation3], %s5541
      %s5543 = sshll.u32 [#allocation2], 4
      %s5544 = int_to_ptr.vmem [resolvable:$true] %s5543
      %5549 = dma.vmem_to_hbm [thread:$0]  %s5544, 32, %s3, [#allocation3], 16, 16, 1
    $region17: #{vit_forward.1} parent=1 // pred_fallthru
      _
    // Predicated region
    $region18: #{vit_forward.1} parent=1 // pred_check
      _
    $region19: #{vit_forward.1} parent=1 // pred_check_branch
      %5551 = sbr.rel (0) target = $region21
    $region20: #{vit_forward.1} parent=1 // pred_region
      %5552 = dma.done [#allocation3], 32
    $region21: #{vit_forward.1} parent=1 // pred_fallthru
      _
    %5553 = vsyncpa [#allocation3], 1

</llo_original>
